<compile_context>
chip_gen: v5e
topology: v5e:2x2
jax: 0.10.0
libtpu: 0.0.40
codegen_flags: <defaults>
</compile_context>

<pallas_src>
import functools

import jax
import jax.numpy as jnp
from jax.experimental import pallas as pl
from jax.experimental.pallas import tpu as pltpu

LANE = 128
ROW_ALIGN = 256


def _round_up(v, m):
    return (v + m - 1) // m * m


def _pad2d(m, rows, cols):
    return jnp.pad(m, ((0, rows - m.shape[0]), (0, cols - m.shape[1])))


def _tpu_vmem_bytes():
    try:
        return int(pltpu.get_tpu_info().vmem_capacity_bytes)
    except Exception:
        return 64 << 20  # conservative default (v7x-sized)


def _budgets():
    """Generation-aware VMEM sizing (v5e/v6e: 128 MiB VMEM, v7x: 64 MiB)."""
    cap = _tpu_vmem_bytes()
    if cap >= (96 << 20):  # v5e / v6e
        return dict(vmem_limit=100 << 20, slab=16 << 20, fused_max_n=4096)
    return dict(vmem_limit=56 << 20, slab=8 << 20, fused_max_n=2048)


def _row_tile(n_pad, n_cols, slab_budget_bytes, dtype_bytes=2):
    """Largest row tile dividing n_pad whose (tile, n_cols) bf16 A slab fits the
    budget, while keeping >= 2 grid steps whenever n_pad >= 512 (megacore)."""
    max_tile = n_pad if n_pad < 2 * ROW_ALIGN else n_pad // 2
    for cand in (1024, 512, 256, 128, 64, 32, 16, 8):
        if (cand <= max_tile and n_pad % cand == 0
                and cand * n_cols * dtype_bytes <= slab_budget_bytes):
            return cand
    return n_pad  # full-array tile is always layout-legal


def _log_softmax_masked(logits, num_classes):
    """Row-wise log_softmax in f32 with padded class columns masked out."""
    col = jax.lax.broadcasted_iota(jnp.int32, logits.shape, dimension=1)
    logits = jnp.where(col < num_classes, logits, jnp.finfo(logits.dtype).min)
    m = jnp.max(logits, axis=1, keepdims=True)
    z = logits - m
    lse = jnp.log(jnp.sum(jnp.exp(z), axis=1, keepdims=True))
    return z - lse


# --------------------------------------------------------------------------
# Fused path: A resident in VMEM, streamed from HBM exactly once.
# --------------------------------------------------------------------------
def _fused_kernel(a_ref, xw_ref, b1_ref, w2_ref, b2_ref, out_ref, hw_ref, *,
                  tile_n, num_classes):
    i = pl.program_id(0)

    # Step 0: layer-1 for ALL rows into the persistent VMEM scratch.
    # (Scratch dependency across steps -> grid axis must stay "arbitrary".)
    @pl.when(i == 0)
    def _():
        acc = jnp.dot(a_ref[...], xw_ref[...],
                      preferred_element_type=jnp.float32)
        h = jnp.maximum(acc + b1_ref[...], 0.0)
        # Dropout (inference mode): identity.
        hw = jnp.dot(h.astype(jnp.bfloat16), w2_ref[...],
                     preferred_element_type=jnp.float32)
        hw_ref[...] = hw.astype(jnp.bfloat16)

    # Every step: layer-2 aggregation + log_softmax for its row tile.
    row0 = pl.multiple_of(i * tile_n, tile_n)
    a_rows = a_ref[pl.ds(row0, tile_n), :]
    logits = jnp.dot(a_rows, hw_ref[...],
                     preferred_element_type=jnp.float32) + b2_ref[...]
    out_ref[...] = _log_softmax_masked(logits, num_classes)


# --------------------------------------------------------------------------
# Two-pass row-tiled fallback (A streamed twice; megacore-parallel).
# --------------------------------------------------------------------------
def _layer1_kernel(a_ref, xw_ref, b1_ref, w2_ref, hw_ref):
    acc = jnp.dot(a_ref[...], xw_ref[...], preferred_element_type=jnp.float32)
    h = jnp.maximum(acc + b1_ref[...], 0.0)
    hw_ref[...] = jnp.dot(h.astype(jnp.bfloat16), w2_ref[...],
                          preferred_element_type=jnp.float32).astype(jnp.bfloat16)


def _layer2_kernel(a_ref, hw_ref, b2_ref, out_ref, *, num_classes):
    logits = jnp.dot(a_ref[...], hw_ref[...],
                     preferred_element_type=jnp.float32) + b2_ref[...]
    out_ref[...] = _log_softmax_masked(logits, num_classes)


def gcn_forward(a_hat, x, w1, b1, w2, b2):
    n, f_in = x.shape
    hidden = w1.shape[1]
    num_classes = w2.shape[1]

    h_pad = _round_up(hidden, LANE)       # lane-dense hidden dim
    c_pad = _round_up(num_classes, LANE)  # lane-dense class dim
    n_pad = _round_up(n, ROW_ALIGN)       # row dim padded for clean tiling

    budget = _budgets()

    # bf16 operands at the pallas_call boundary; f32 accumulation inside.
    a_p = _pad2d(a_hat, n_pad, n_pad).astype(jnp.bfloat16)
    x_bf = x.astype(jnp.bfloat16)
    w1_bf = _pad2d(w1, f_in, h_pad).astype(jnp.bfloat16)
    b1_p = _pad2d(b1.reshape(1, -1), 1, h_pad).astype(jnp.float32)
    w2_bf = _pad2d(w2, h_pad, c_pad).astype(jnp.bfloat16)
    b2_p = _pad2d(b2.reshape(1, -1), 1, c_pad).astype(jnp.float32)

    # Hoisted: XW = X @ W1 computed exactly once (not per grid step).
    xw = jnp.dot(x_bf, w1_bf, preferred_element_type=jnp.float32)
    xw_p = jnp.pad(xw.astype(jnp.bfloat16), ((0, n_pad - n), (0, 0)))

    full = lambda shp: pl.BlockSpec(shp, lambda i: (0,) * len(shp))
    compiler_params_seq = pltpu.CompilerParams(
        dimension_semantics=("arbitrary",),
        vmem_limit_bytes=budget["vmem_limit"],
    )
    compiler_params_par = pltpu.CompilerParams(
        dimension_semantics=("parallel",),
        vmem_limit_bytes=budget["vmem_limit"],
    )

    # ---------------- fused path: dense A fits VMEM ----------------
    if n_pad <= budget["fused_max_n"]:
        tile_n = min(256, n_pad)
        num_tiles = n_pad // tile_n
        cost = pl.CostEstimate(
            flops=2 * n_pad * n_pad * (h_pad + c_pad) + 2 * n_pad * h_pad * c_pad,
            transcendentals=n_pad * c_pad,
            bytes_accessed=(n_pad * n_pad * 2 + n_pad * (h_pad + c_pad) * 2
                            + h_pad * c_pad * 2 + n_pad * c_pad * 4),
        )
        out_pad = pl.pallas_call(
            functools.partial(_fused_kernel, tile_n=tile_n,
                              num_classes=num_classes),
            out_shape=jax.ShapeDtypeStruct((n_pad, c_pad), jnp.float32),
            grid=(num_tiles,),
            in_specs=[
                full((n_pad, n_pad)),   # A resident; DMA'd from HBM once
                full((n_pad, h_pad)),   # XW
                full((1, h_pad)),       # b1
                full((h_pad, c_pad)),   # W2
                full((1, c_pad)),       # b2
            ],
            out_specs=pl.BlockSpec((tile_n, c_pad), lambda i: (i, 0)),
            scratch_shapes=[pltpu.VMEM((n_pad, c_pad), jnp.bfloat16)],
            compiler_params=compiler_params_seq,
            cost_estimate=cost,
        )(a_p, xw_p, b1_p, w2_bf, b2_p)
        return out_pad[:n, :num_classes]

    # ---------------- two-pass fallback: A streamed per pass ----------------
    tile_n = _row_tile(n_pad, n_pad, budget["slab"])
    grid = (n_pad // tile_n,)
    a_spec = pl.BlockSpec((tile_n, n_pad), lambda i: (i, 0))
    out_spec = pl.BlockSpec((tile_n, c_pad), lambda i: (i, 0))

    hw = pl.pallas_call(
        _layer1_kernel,
        out_shape=jax.ShapeDtypeStruct((n_pad, c_pad), jnp.bfloat16),
        grid=grid,
        in_specs=[a_spec, full((n_pad, h_pad)), full((1, h_pad)),
                  full((h_pad, c_pad))],
        out_specs=out_spec,
        compiler_params=compiler_params_par,
        cost_estimate=pl.CostEstimate(
            flops=2 * n_pad * n_pad * h_pad + 2 * n_pad * h_pad * c_pad,
            transcendentals=0,
            bytes_accessed=(n_pad * n_pad * 2 + n_pad * h_pad * 2
                            + h_pad * c_pad * 2 + n_pad * c_pad * 2)),
    )(a_p, xw_p, b1_p, w2_bf)

    out_pad = pl.pallas_call(
        functools.partial(_layer2_kernel, num_classes=num_classes),
        out_shape=jax.ShapeDtypeStruct((n_pad, c_pad), jnp.float32),
        grid=grid,
        in_specs=[a_spec, full((n_pad, c_pad)), full((1, c_pad))],
        out_specs=out_spec,
        compiler_params=compiler_params_par,
        cost_estimate=pl.CostEstimate(
            flops=2 * n_pad * n_pad * c_pad,
            transcendentals=n_pad * c_pad,
            bytes_accessed=(n_pad * n_pad * 2 + n_pad * c_pad * 2
                            + c_pad * 4 + n_pad * c_pad * 4)),
    )(a_p, hw, b2_p)

    return out_pad[:n, :num_classes]


def build_normalized_adjacency(edge_index, num_nodes):
    """Dense symmetric GCN normalization: D^-1/2 (A + I) D^-1/2.

    edge_index: int32 [2, E]; aggregation at the target node: A[dst, src] = 1.
    The diagonal is *set* (not added) to 1 so pre-existing self loops do not
    double-count, matching PyG's add_remaining_self_loops behavior.
    """
    src, dst = edge_index[0], edge_index[1]
    a = jnp.zeros((num_nodes, num_nodes), jnp.float32)
    a = a.at[dst, src].set(1.0)
    idx = jnp.arange(num_nodes)
    a = a.at[idx, idx].set(1.0)
    deg = jnp.sum(a, axis=1)
    d_inv_sqrt = jnp.where(deg > 0, 1.0 / jnp.sqrt(deg), 0.0)
    return d_inv_sqrt[:, None] * a * d_inv_sqrt[None, :]


def glorot(key, shape):
    fan_in, fan_out = shape
    limit = jnp.sqrt(6.0 / (fan_in + fan_out))
    return jax.random.uniform(key, shape, jnp.float32, -limit, limit)


if __name__ == "__main__":
    num_nodes = 512
    in_features = 16
    hidden_features = 32
    num_classes = 4

    key = jax.random.PRNGKey(0)
    k_x, k_w1, k_w2 = jax.random.split(key, 3)

    # Node features.
    x = jax.random.normal(k_x, (num_nodes, in_features), jnp.float32)

    # Deterministic bidirectional ring graph.
    srcs = jnp.arange(num_nodes, dtype=jnp.int32)
    dsts = (srcs + 1) % num_nodes
    edge_index = jnp.stack(
        [jnp.concatenate([srcs, dsts]), jnp.concatenate([dsts, srcs])], axis=0
    )

    # Deterministic parameter init (GCNConv: glorot weight, zero bias).
    w1 = glorot(k_w1, (in_features, hidden_features))
    b1 = jnp.zeros((1, hidden_features), jnp.float32)
    w2 = glorot(k_w2, (hidden_features, num_classes))
    b2 = jnp.zeros((1, num_classes), jnp.float32)

    a_hat = build_normalized_adjacency(edge_index, num_nodes)

    out = gcn_forward(a_hat, x, w1, b1, w2, b2)
    out = jax.block_until_ready(out)

    # Pure-JAX reference mirroring the kernel's bf16 operand casts (f32 math).
    bf, f32 = jnp.bfloat16, jnp.float32
    a32 = a_hat.astype(bf).astype(f32)
    x32 = x.astype(bf).astype(f32)
    w1_32 = w1.astype(bf).astype(f32)
    w2_32 = w2.astype(bf).astype(f32)
    xw_ref = (x32 @ w1_32).astype(bf).astype(f32)
    h_ref = jnp.maximum(a32 @ xw_ref + b1, 0.0)
    hw_ref = (h_ref.astype(bf).astype(f32) @ w2_32).astype(bf).astype(f32)
    logits_ref = a32 @ hw_ref + b2
    ref = jax.nn.log_softmax(logits_ref, axis=1)

    assert out.shape == (num_nodes, num_classes)
    assert jnp.allclose(out, ref, atol=2e-2, rtol=2e-2), "mismatch vs reference"

    print("KERNEL_OK")
</pallas_src>

<mosaic_0001>
module attributes {stable_mosaic.version = 11 : i64} {
  func.func @_fused_kernel(%arg0: i32, %arg1: memref<512x512xbf16, #tpu.memory_space<vmem>>, %arg2: memref<512x128xbf16, #tpu.memory_space<vmem>>, %arg3: memref<1x128xf32, #tpu.memory_space<vmem>>, %arg4: memref<128x128xbf16, #tpu.memory_space<vmem>>, %arg5: memref<1x128xf32, #tpu.memory_space<vmem>>, %arg6: memref<256x128xf32, #tpu.memory_space<vmem>>, %arg7: memref<512x128xbf16, #tpu.memory_space<vmem>>) attributes {dimension_semantics = [#tpu.dimension_semantics<arbitrary>], iteration_bounds = array<i64: 2>, scalar_prefetch = 0 : i64, scratch_operands = 1 : i64, tpu.core_type = #tpu.core_type<tc>, window_params = [{pipeline_mode = #tpu.pipeline_mode<synchronous>, transform_indices = @transform_0, window_bounds = array<i64: 512, 512>}, {pipeline_mode = #tpu.pipeline_mode<synchronous>, transform_indices = @transform_1, window_bounds = array<i64: 512, 128>}, {pipeline_mode = #tpu.pipeline_mode<synchronous>, transform_indices = @transform_2, window_bounds = array<i64: 1, 128>}, {pipeline_mode = #tpu.pipeline_mode<synchronous>, transform_indices = @transform_3, window_bounds = array<i64: 128, 128>}, {pipeline_mode = #tpu.pipeline_mode<synchronous>, transform_indices = @transform_4, window_bounds = array<i64: 1, 128>}, {transform_indices = @transform_5, window_bounds = array<i64: 256, 128>}]} {
    %c0_i32 = arith.constant 0 : i32
    %0 = arith.cmpi eq, %arg0, %c0_i32 : i32
    %1 = arith.extui %0 : i1 to i32
    %c0_i32_0 = arith.constant 0 : i32
    %2 = arith.cmpi ne, %1, %c0_i32_0 : i32
    scf.if %2 {
      %c0_10 = arith.constant 0 : index
      %c0_11 = arith.constant 0 : index
      %28 = vector.load %arg1[%c0_10, %c0_11] : memref<512x512xbf16, #tpu.memory_space<vmem>>, vector<512x512xbf16>
      %c0_12 = arith.constant 0 : index
      %c0_13 = arith.constant 0 : index
      %29 = vector.load %arg2[%c0_12, %c0_13] : memref<512x128xbf16, #tpu.memory_space<vmem>>, vector<512x128xbf16>
      %cst_14 = arith.constant dense<0.000000e+00> : vector<512x128xf32>
      %30 = tpu.matmul %28, %29, %cst_14 {dimension_numbers = #tpu.dot_dimension_numbers<[1], [0], [0], [1], [0, 0, 1, 1], [], []>} : vector<512x512xbf16>, vector<512x128xbf16>, vector<512x128xf32> -> vector<512x128xf32>
      %c0_15 = arith.constant 0 : index
      %c0_16 = arith.constant 0 : index
      %31 = vector.load %arg3[%c0_15, %c0_16] : memref<1x128xf32, #tpu.memory_space<vmem>>, vector<1x128xf32>
      %32 = vector.broadcast %31 : vector<1x128xf32> to vector<512x128xf32>
      %33 = arith.addf %30, %32 : vector<512x128xf32>
      %cst_17 = arith.constant 0.000000e+00 : f32
      %34 = vector.broadcast %cst_17 : f32 to vector<512x128xf32>
      %35 = arith.maximumf %33, %34 : vector<512x128xf32>
      %36 = arith.truncf %35 : vector<512x128xf32> to vector<512x128xbf16>
      %c0_18 = arith.constant 0 : index
      %c0_19 = arith.constant 0 : index
      %37 = vector.load %arg4[%c0_18, %c0_19] : memref<128x128xbf16, #tpu.memory_space<vmem>>, vector<128x128xbf16>
      %cst_20 = arith.constant dense<0.000000e+00> : vector<512x128xf32>
      %38 = tpu.matmul %36, %37, %cst_20 {dimension_numbers = #tpu.dot_dimension_numbers<[1], [0], [0], [1], [0, 0, 1, 1], [], []>} : vector<512x128xbf16>, vector<128x128xbf16>, vector<512x128xf32> -> vector<512x128xf32>
      %39 = arith.truncf %38 : vector<512x128xf32> to vector<512x128xbf16>
      %c0_21 = arith.constant 0 : index
      %c0_22 = arith.constant 0 : index
      %40 = vector.load %arg7[%c0_21, %c0_22] : memref<512x128xbf16, #tpu.memory_space<vmem>>, vector<512x128xbf16>
      tpu.vector_store %arg7[%c0_21, %c0_22], %39 {strides = array<i32>} : memref<512x128xbf16, #tpu.memory_space<vmem>>, vector<512x128xbf16>,
    } else {
    }
    %c256_i32 = arith.constant 256 : i32
    %3 = arith.muli %arg0, %c256_i32 : i32
    %4 = tpu.assume_multiple %3, 256 : i32
    %5 = arith.index_cast %4 : i32 to index
    %c0 = arith.constant 0 : index
    %6 = vector.load %arg1[%5, %c0] : memref<512x512xbf16, #tpu.memory_space<vmem>>, vector<256x512xbf16>
    %c0_1 = arith.constant 0 : index
    %c0_2 = arith.constant 0 : index
    %7 = vector.load %arg7[%c0_1, %c0_2] : memref<512x128xbf16, #tpu.memory_space<vmem>>, vector<512x128xbf16>
    %cst = arith.constant dense<0.000000e+00> : vector<256x128xf32>
    %8 = tpu.matmul %6, %7, %cst {dimension_numbers = #tpu.dot_dimension_numbers<[1], [0], [0], [1], [0, 0, 1, 1], [], []>} : vector<256x512xbf16>, vector<512x128xbf16>, vector<256x128xf32> -> vector<256x128xf32>
    %c0_3 = arith.constant 0 : index
    %c0_4 = arith.constant 0 : index
    %9 = vector.load %arg5[%c0_3, %c0_4] : memref<1x128xf32, #tpu.memory_space<vmem>>, vector<1x128xf32>
    %10 = vector.broadcast %9 : vector<1x128xf32> to vector<256x128xf32>
    %11 = arith.addf %8, %10 : vector<256x128xf32>
    %12 = tpu.iota {dimensions = array<i32: 1>} : vector<256x128xi32>
    %c4_i32 = arith.constant 4 : i32
    %13 = vector.broadcast %c4_i32 : i32 to vector<256x128xi32>
    %14 = arith.cmpi slt, %12, %13 : vector<256x128xi32>
    %cst_5 = arith.constant -3.40282347E+38 : f32
    %15 = vector.broadcast %cst_5 : f32 to vector<256x128xf32>
    %16 = arith.select %14, %11, %15 : vector<256x128xi1>, vector<256x128xf32>
    %cst_6 = arith.constant dense<0xFF800000> : vector<256xf32>
    %17 = vector.multi_reduction <maximumf>, %16, %cst_6 [1] : vector<256x128xf32> to vector<256xf32>
    %18 = vector.shape_cast %17 : vector<256xf32> to vector<256x1xf32>
    %19 = vector.broadcast %18 : vector<256x1xf32> to vector<256x128xf32>
    %20 = arith.subf %16, %19 : vector<256x128xf32>
    %21 = math.exp %20 : vector<256x128xf32>
    %cst_7 = arith.constant dense<0.000000e+00> : vector<256xf32>
    %22 = vector.multi_reduction <add>, %21, %cst_7 [1] : vector<256x128xf32> to vector<256xf32>
    %23 = vector.shape_cast %22 : vector<256xf32> to vector<256x1xf32>
    %24 = math.log %23 : vector<256x1xf32>
    %25 = vector.broadcast %24 : vector<256x1xf32> to vector<256x128xf32>
    %26 = arith.subf %20, %25 : vector<256x128xf32>
    %c0_8 = arith.constant 0 : index
    %c0_9 = arith.constant 0 : index
    %27 = vector.load %arg6[%c0_8, %c0_9] : memref<256x128xf32, #tpu.memory_space<vmem>>, vector<256x128xf32>
    tpu.vector_store %arg6[%c0_8, %c0_9], %26 {strides = array<i32>} : memref<256x128xf32, #tpu.memory_space<vmem>>, vector<256x128xf32>,
    return
  }
  func.func @transform_0(%arg0: i32) -> (i32, i32) {
    %c0_i32 = arith.constant 0 : i32
    %c0_i32_0 = arith.constant 0 : i32
    %c0_i32_1 = arith.constant 0 : i32
    return %c0_i32, %c0_i32_0 : i32, i32
  }
  func.func @transform_1(%arg0: i32) -> (i32, i32) {
    %c0_i32 = arith.constant 0 : i32
    %c0_i32_0 = arith.constant 0 : i32
    %c0_i32_1 = arith.constant 0 : i32
    return %c0_i32, %c0_i32_0 : i32, i32
  }
  func.func @transform_2(%arg0: i32) -> (i32, i32) {
    %c0_i32 = arith.constant 0 : i32
    %c0_i32_0 = arith.constant 0 : i32
    %c0_i32_1 = arith.constant 0 : i32
    return %c0_i32, %c0_i32_0 : i32, i32
  }
  func.func @transform_3(%arg0: i32) -> (i32, i32) {
    %c0_i32 = arith.constant 0 : i32
    %c0_i32_0 = arith.constant 0 : i32
    %c0_i32_1 = arith.constant 0 : i32
    return %c0_i32, %c0_i32_0 : i32, i32
  }
  func.func @transform_4(%arg0: i32) -> (i32, i32) {
    %c0_i32 = arith.constant 0 : i32
    %c0_i32_0 = arith.constant 0 : i32
    %c0_i32_1 = arith.constant 0 : i32
    return %c0_i32, %c0_i32_0 : i32, i32
  }
  func.func @transform_5(%arg0: i32) -> (i32, i32) {
    %c0_i32 = arith.constant 0 : i32
    %c0_i32_0 = arith.constant 0 : i32
    return %arg0, %c0_i32 : i32, i32
  }
}

</mosaic_0001>

<llo_original>
// kernel: tpu_custom_call.1
$region0: #{tpu_custom_call.1}
  #allocation0 [shape = 'u32[]', space=smem, size = 0x4, offset = 0x4, fixed_abs, tag = 'smem constant byte address 0x4 - core index']
  #allocation1 [shape = 'u32[72,128]{1,0:T(1,128)}', space=vmem, size = 0x9000, scoped, tag = 'internal scratch']
  #allocation2 [shape = 'bf16[512,128]{1,0:T(8,128)(2,1)}', space=vmem, size = 0x20000, scoped, tag = 'scratch operand']
  %s0 = inlined_call_operand.hbm [shape: bf16[512,512], index: 0, kind: input, shape index: {}]
  %s1 = inlined_call_operand.hbm [shape: bf16[512,128], index: 1, kind: input, shape index: {}]
  %s2 = inlined_call_operand.vmem [shape: f32[1,128], index: 2, kind: input, shape index: {}]
  %s3 = inlined_call_operand.hbm [shape: bf16[128,128], index: 3, kind: input, shape index: {}]
  %s4 = inlined_call_operand.vmem [shape: f32[1,128], index: 4, kind: input, shape index: {}]
  %s5 = inlined_call_operand.hbm [shape: f32[512,128], index: 5, kind: output, shape index: {}]
  %s6 = sld [smem:[#allocation0]]
  $region69: #{tpu_custom_call.1} parent=0
    _
  %s8 = ssub.s32 1, %s6
  %s9 = scalar_select 0, %s8, %s6
  $region1: #{tpu_custom_call.1} parent=0
    #allocation3 [shape = 'u8[524288]{0}', space=vmem, size = 0x80000, scoped, tag = 'input window, operand 0, single buffered']
    #allocation4 [shape = 's32[2]{0}', space=sflag, size = 0x8, scoped, tag = 'scoped memory for tpu_custom_call.1']
    #allocation5 [shape = 's32[2]{0}', space=sflag, size = 0x8, scoped, tag = 'scoped memory for tpu_custom_call.1']
    #allocation6 [shape = 'u8[131072]{0}', space=vmem, size = 0x20000, scoped, tag = 'input window, operand 1, single buffered']
    #allocation7 [shape = 's32[1]{0}', space=sflag, size = 0x4, scoped, tag = 'scoped memory for tpu_custom_call.1']
    #allocation8 [shape = 'u8[32768]{0}', space=vmem, size = 0x8000, scoped, tag = 'input window, operand 3, single buffered']
    #allocation9 [shape = 'u8[262144]{0}', space=vmem, size = 0x40000, scoped, tag = 'output window, operand 0']
    %10 = vsyncpa [#allocation4], 0
    %11 = vsyncpa [#allocation7], 0
    %12 = vsyncpa [#allocation5], 0
    %s13 = scalar_lea.sflag [#allocation5], 1
    %14 = vsyncpa %s13, 0
    loop: start=0, step=1, limit=4
    $region2: #{tpu_custom_call.1} parent=1 // loop_pre_header
      _
    $region3: #{tpu_custom_call.1} parent=1 // loop_header
      %s16 = sphi 0, %s20
      %p17 = scmp.ge.s32.totalorder %s16, 4
      %s24 = sphi 0, %s24
      %s26 = sphi 0, %s24
      %s27 = sphi 0, %s26
      %s41 = sphi 0, %s27
      %s45 = sphi 0, %s45
      %s47 = sphi 0, %s45
      %s48 = sphi 0, %s47
      %s62 = sphi 0, %s48
      %s66 = sphi 0, %s66
      %s68 = sphi 0, %s66
      %s69 = sphi 0, %s68
      %s83 = sphi 0, %s69
      %s87 = sphi 0, %s87
      %s89 = sphi 0, %s87
      %s90 = sphi 0, %s89
      %s104 = sphi 0, %s90
      %s108 = sphi 0, %s108
      %s110 = sphi 0, %s108
      %s111 = sphi 0, %s110
      %s125 = sphi 0, %s111
      %s131 = sphi 0, %s133
      %s134 = sphi 0, %s131
      %s135 = sphi 0, %s134
      %s151 = sphi 0, %s135
    $region4: #{tpu_custom_call.1} parent=1 // loop_header_branch
      %19 = sbr.rel (%p17) target = $region8
    $region5: #{tpu_custom_call.1} parent=1 // loop_body
      %s21 = ssub.s32 %s16, 1
      %s22 = ssub.s32 %s16, 2
      %s23 = sadd.s32 %s16, 1
      %s25 = sadd.s32 %s24, 1
      %p28 = scmp.eq.s32.totalorder %s16, 1
      %p29 = scmp.ne.s32.totalorder %s24, %s26
      %p30 = scmp.eq.s32.totalorder %s16, 0
      %p31 = por %p29, %p30
      %p32 = scmp.ne.s32.totalorder %s24, %s26
      %p33 = scmp.eq.s32.totalorder %s21, 1
      %p34 = por %p32, %p33
      %p35 = scmp.ne.s32.totalorder %s26, %s27
      %p36 = scmp.eq.s32.totalorder %s21, 0
      %p37 = por %p35, %p36
      %p38 = scmp.ne.s32.totalorder %s26, %s27
      %p39 = scmp.eq.s32.totalorder %s22, 1
      %p40 = por %p38, %p39
      %p42 = scmp.ne.s32.totalorder %s27, %s41
      %p43 = scmp.eq.s32.totalorder %s22, 0
      %p44 = por %p42, %p43
      %s46 = sadd.s32 %s45, 1
      %p49 = scmp.eq.s32.totalorder %s16, 1
      %p50 = scmp.ne.s32.totalorder %s45, %s47
      %p51 = scmp.eq.s32.totalorder %s16, 0
      %p52 = por %p50, %p51
      %p53 = scmp.ne.s32.totalorder %s45, %s47
      %p54 = scmp.eq.s32.totalorder %s21, 1
      %p55 = por %p53, %p54
      %p56 = scmp.ne.s32.totalorder %s47, %s48
      %p57 = scmp.eq.s32.totalorder %s21, 0
      %p58 = por %p56, %p57
      %p59 = scmp.ne.s32.totalorder %s47, %s48
      %p60 = scmp.eq.s32.totalorder %s22, 1
      %p61 = por %p59, %p60
      %p63 = scmp.ne.s32.totalorder %s48, %s62
      %p64 = scmp.eq.s32.totalorder %s22, 0
      %p65 = por %p63, %p64
      %s67 = sadd.s32 %s66, 1
      %p70 = scmp.eq.s32.totalorder %s16, 1
      %p71 = scmp.ne.s32.totalorder %s66, %s68
      %p72 = scmp.eq.s32.totalorder %s16, 0
      %p73 = por %p71, %p72
      %p74 = scmp.ne.s32.totalorder %s66, %s68
      %p75 = scmp.eq.s32.totalorder %s21, 1
      %p76 = por %p74, %p75
      %p77 = scmp.ne.s32.totalorder %s68, %s69
      %p78 = scmp.eq.s32.totalorder %s21, 0
      %p79 = por %p77, %p78
      %p80 = scmp.ne.s32.totalorder %s68, %s69
      %p81 = scmp.eq.s32.totalorder %s22, 1
      %p82 = por %p80, %p81
      %p84 = scmp.ne.s32.totalorder %s69, %s83
      %p85 = scmp.eq.s32.totalorder %s22, 0
      %p86 = por %p84, %p85
      %s88 = sadd.s32 %s87, 1
      %p91 = scmp.eq.s32.totalorder %s16, 1
      %p92 = scmp.ne.s32.totalorder %s87, %s89
      %p93 = scmp.eq.s32.totalorder %s16, 0
      %p94 = por %p92, %p93
      %p95 = scmp.ne.s32.totalorder %s87, %s89
      %p96 = scmp.eq.s32.totalorder %s21, 1
      %p97 = por %p95, %p96
      %p98 = scmp.ne.s32.totalorder %s89, %s90
      %p99 = scmp.eq.s32.totalorder %s21, 0
      %p100 = por %p98, %p99
      %p101 = scmp.ne.s32.totalorder %s89, %s90
      %p102 = scmp.eq.s32.totalorder %s22, 1
      %p103 = por %p101, %p102
      %p105 = scmp.ne.s32.totalorder %s90, %s104
      %p106 = scmp.eq.s32.totalorder %s22, 0
      %p107 = por %p105, %p106
      %s109 = sadd.s32 %s108, 1
      %p112 = scmp.eq.s32.totalorder %s16, 1
      %p113 = scmp.ne.s32.totalorder %s108, %s110
      %p114 = scmp.eq.s32.totalorder %s16, 0
      %p115 = por %p113, %p114
      %p116 = scmp.ne.s32.totalorder %s108, %s110
      %p117 = scmp.eq.s32.totalorder %s21, 1
      %p118 = por %p116, %p117
      %p119 = scmp.ne.s32.totalorder %s110, %s111
      %p120 = scmp.eq.s32.totalorder %s21, 0
      %p121 = por %p119, %p120
      %p122 = scmp.ne.s32.totalorder %s110, %s111
      %p123 = scmp.eq.s32.totalorder %s22, 1
      %p124 = por %p122, %p123
      %p126 = scmp.ne.s32.totalorder %s111, %s125
      %p127 = scmp.eq.s32.totalorder %s22, 0
      %p128 = por %p126, %p127
      %s129 = ssub.s32 %s16, %s23
      %p130 = scmp.eq.s32.totalorder %s129, 0
      %s132 = sadd.s32 %s131, 1
      %s133 = scalar_select %p130, %s131, %s132
      %p136 = pneg %p130
      %p137 = scmp.eq.s32.totalorder %s16, 1
      %p138 = por %p136, %p137
      %p139 = scmp.ne.s32.totalorder %s131, %s134
      %p140 = scmp.eq.s32.totalorder %s16, 0
      %p141 = por %p139, %p140
      %p142 = scmp.ne.s32.totalorder %s131, %s134
      %p143 = scmp.eq.s32.totalorder %s21, 1
      %p144 = por %p142, %p143
      %p145 = scmp.ne.s32.totalorder %s134, %s135
      %p146 = scmp.eq.s32.totalorder %s21, 0
      %p147 = por %p145, %p146
      %p148 = scmp.ne.s32.totalorder %s134, %s135
      %p149 = scmp.eq.s32.totalorder %s22, 1
      %p150 = por %p148, %p149
      %p152 = scmp.ne.s32.totalorder %s135, %s151
      %p153 = scmp.eq.s32.totalorder %s22, 0
      %p154 = por %p152, %p153
      %p155 = scmp.le.s32.totalorder 1, %s16
      %p156 = scmp.lt.s32.totalorder %s16, 3
      %p157 = pnand %p155, %p156
      %p158 = pneg %p157
      // Predicated region
      $region9: #{tpu_custom_call.1} parent=5 // pred_check
        _
      $region10: #{tpu_custom_call.1} parent=5 // pred_check_branch
        %160 = sbr.rel (%p157) target = $region12
      $region11: #{tpu_custom_call.1} parent=5 // pred_region
        %s161 = ssub.s32 %s16, 1
        // Predicated region
        $region13: #{tpu_custom_call.1} parent=11 // pred_check
          %p162 = pneg %p37
        $region14: #{tpu_custom_call.1} parent=11 // pred_check_branch
          %164 = sbr.rel (%p162) target = $region16
        $region15: #{tpu_custom_call.1} parent=11 // pred_region
          %166 = vsyncadd [#allocation4], 0
          %s167 = sshll.u32 %s0, 4
          %s168 = int_to_ptr.hbm [resolvable:$true] %s167
          %s169 = sshll.u32 [#allocation3], 4
          %s170 = int_to_ptr.vmem [resolvable:$true] %s169
          %175 = dma.hbm_to_vmem [thread:$0]  %s168, 16384, %s170, [#allocation4], 256, 256, 16
        $region16: #{tpu_custom_call.1} parent=11 // pred_fallthru
          _
        // Predicated region
        $region17: #{tpu_custom_call.1} parent=11 // pred_check
          %p176 = pneg %p58
        $region18: #{tpu_custom_call.1} parent=11 // pred_check_branch
          %178 = sbr.rel (%p176) target = $region20
        $region19: #{tpu_custom_call.1} parent=11 // pred_region
          %180 = vsyncadd [#allocation7], 0
          %s181 = sshll.u32 %s1, 4
          %s182 = int_to_ptr.hbm [resolvable:$true] %s181
          %s183 = sshll.u32 [#allocation6], 4
          %s184 = int_to_ptr.vmem [resolvable:$true] %s183
          %189 = dma.hbm_to_vmem [thread:$0]  %s182, 4096, %s184, [#allocation7], 64, 64, 4
        $region20: #{tpu_custom_call.1} parent=11 // pred_fallthru
          _
        // Predicated region
        $region21: #{tpu_custom_call.1} parent=11 // pred_check
          %p190 = pneg %p79
        $region22: #{tpu_custom_call.1} parent=11 // pred_check_branch
          %192 = sbr.rel (%p190) target = $region24
        $region23: #{tpu_custom_call.1} parent=11 // pred_region
          _
        $region24: #{tpu_custom_call.1} parent=11 // pred_fallthru
          _
        // Predicated region
        $region25: #{tpu_custom_call.1} parent=11 // pred_check
          %p193 = pneg %p100
        $region26: #{tpu_custom_call.1} parent=11 // pred_check_branch
          %195 = sbr.rel (%p193) target = $region28
        $region27: #{tpu_custom_call.1} parent=11 // pred_region
          %197 = vsyncadd [#allocation7], 0
          %s198 = sshll.u32 %s3, 4
          %s199 = int_to_ptr.hbm [resolvable:$true] %s198
          %s200 = sshll.u32 [#allocation8], 4
          %s201 = int_to_ptr.vmem [resolvable:$true] %s200
          %206 = dma.hbm_to_vmem [thread:$0]  %s199, 1024, %s201, [#allocation7], 64, 64, 4
        $region28: #{tpu_custom_call.1} parent=11 // pred_fallthru
          _
        // Predicated region
        $region29: #{tpu_custom_call.1} parent=11 // pred_check
          %p207 = pneg %p121
        $region30: #{tpu_custom_call.1} parent=11 // pred_check_branch
          %209 = sbr.rel (%p207) target = $region32
        $region31: #{tpu_custom_call.1} parent=11 // pred_region
          _
        $region32: #{tpu_custom_call.1} parent=11 // pred_fallthru
          _
      $region12: #{tpu_custom_call.1} parent=5 // pred_fallthru
        _
      %p210 = scmp.lt.s32.totalorder %s16, 2
      // Predicated region
      $region33: #{tpu_custom_call.1} parent=5 // pred_check
        %p211 = pneg %p210
      $region34: #{tpu_custom_call.1} parent=5 // pred_check_branch
        %213 = sbr.rel (%p211) target = $region36
      $region35: #{tpu_custom_call.1} parent=5 // pred_region
        _
      $region36: #{tpu_custom_call.1} parent=5 // pred_fallthru
        _
      %p214 = scmp.le.s32.totalorder 1, %s16
      %p215 = scmp.lt.s32.totalorder %s16, 3
      %p216 = pnand %p214, %p215
      %p217 = pneg %p216
      // Predicated region
      $region37: #{tpu_custom_call.1} parent=5 // pred_check
        _
      $region38: #{tpu_custom_call.1} parent=5 // pred_check_branch
        %219 = sbr.rel (%p216) target = $region40
      $region39: #{tpu_custom_call.1} parent=5 // pred_region
        %s220 = ssub.s32 %s16, 1
        // Predicated region
        $region41: #{tpu_custom_call.1} parent=39 // pred_check
          %p221 = pneg %p37
        $region42: #{tpu_custom_call.1} parent=39 // pred_check_branch
          %223 = sbr.rel (%p221) target = $region44
        $region43: #{tpu_custom_call.1} parent=39 // pred_region
          %225 = dma.done [#allocation4], 16384
        $region44: #{tpu_custom_call.1} parent=39 // pred_fallthru
          _
        // Predicated region
        $region45: #{tpu_custom_call.1} parent=39 // pred_check
          %p226 = pneg %p58
        $region46: #{tpu_custom_call.1} parent=39 // pred_check_branch
          %228 = sbr.rel (%p226) target = $region48
        $region47: #{tpu_custom_call.1} parent=39 // pred_region
          %230 = dma.done [#allocation7], 4096
        $region48: #{tpu_custom_call.1} parent=39 // pred_fallthru
          _
        // Predicated region
        $region49: #{tpu_custom_call.1} parent=39 // pred_check
          %p231 = pneg %p100
        $region50: #{tpu_custom_call.1} parent=39 // pred_check_branch
          %233 = sbr.rel (%p231) target = $region52
        $region51: #{tpu_custom_call.1} parent=39 // pred_region
          %235 = dma.done [#allocation7], 1024
        $region52: #{tpu_custom_call.1} parent=39 // pred_fallthru
          _
        %p236 = pneg %p37
        %p237 = pneg %p34
        %p238 = pneg %p58
        %p239 = pneg %p55
        %p240 = pneg %p79
        %p241 = pneg %p76
        %p242 = pneg %p100
        %p243 = pneg %p97
        %p244 = pneg %p121
        %p245 = pneg %p118
        %p246 = pneg %p147
        %p247 = pneg %p144
        %s248 = sand.u32 %s134, 1
        %s249 = scalar_lea.sflag [#allocation5], %s248
        %s250 = sand.u32 %s134, 1
        %s251 = smul.addr %s250, 256
        %s252 = scalar_lea.vmem [#allocation9], %s251
        %s253 = smul.u32 32, %s21
        %p254 = scmp.eq.s32.totalorder %s21, 0
        // Predicated region
        $region53: #{tpu_custom_call.1} parent=39 // pred_check
          %p255 = pneg %p254
        $region54: #{tpu_custom_call.1} parent=39 // pred_check_branch
          %257 = sbr.rel (%p255) target = $region56
        $region55: #{tpu_custom_call.1} parent=39 // pred_region
          %v258 = vld [vmem:[#allocation3] sm:$0xff]
          %v259 = vld [vmem:[#allocation3 + $0x8] sm:$0xff]
          %v260 = vld [vmem:[#allocation3 + $0x10] sm:$0xff]
          %v261 = vld [vmem:[#allocation3 + $0x18] sm:$0xff]
          %v262 = vld [vmem:[#allocation3 + $0x20] sm:$0xff]
          %v263 = vld [vmem:[#allocation3 + $0x28] sm:$0xff]
          %v264 = vld [vmem:[#allocation3 + $0x30] sm:$0xff]
          %v265 = vld [vmem:[#allocation3 + $0x38] sm:$0xff]
          %v266 = vld [vmem:[#allocation3 + $0x40] sm:$0xff]
          %v267 = vld [vmem:[#allocation3 + $0x48] sm:$0xff]
          %v268 = vld [vmem:[#allocation3 + $0x50] sm:$0xff]
          %v269 = vld [vmem:[#allocation3 + $0x58] sm:$0xff]
          %v270 = vld [vmem:[#allocation3 + $0x60] sm:$0xff]
          %v271 = vld [vmem:[#allocation3 + $0x68] sm:$0xff]
          %v272 = vld [vmem:[#allocation3 + $0x70] sm:$0xff]
          %v273 = vld [vmem:[#allocation3 + $0x78] sm:$0xff]
          %v274 = vld [vmem:[#allocation3 + $0x80] sm:$0xff]
          %v275 = vld [vmem:[#allocation3 + $0x88] sm:$0xff]
          %v276 = vld [vmem:[#allocation3 + $0x90] sm:$0xff]
          %v277 = vld [vmem:[#allocation3 + $0x98] sm:$0xff]
          %v278 = vld [vmem:[#allocation3 + $0xa0] sm:$0xff]
          %v279 = vld [vmem:[#allocation3 + $0xa8] sm:$0xff]
          %v280 = vld [vmem:[#allocation3 + $0xb0] sm:$0xff]
          %v281 = vld [vmem:[#allocation3 + $0xb8] sm:$0xff]
          %v282 = vld [vmem:[#allocation3 + $0xc0] sm:$0xff]
          %v283 = vld [vmem:[#allocation3 + $0xc8] sm:$0xff]
          %v284 = vld [vmem:[#allocation3 + $0xd0] sm:$0xff]
          %v285 = vld [vmem:[#allocation3 + $0xd8] sm:$0xff]
          %v286 = vld [vmem:[#allocation3 + $0xe0] sm:$0xff]
          %v287 = vld [vmem:[#allocation3 + $0xe8] sm:$0xff]
          %v288 = vld [vmem:[#allocation3 + $0xf0] sm:$0xff]
          %v289 = vld [vmem:[#allocation3 + $0xf8] sm:$0xff]
          %v290 = vld [vmem:[#allocation3 + $0x100] sm:$0xff]
          %v291 = vld [vmem:[#allocation3 + $0x108] sm:$0xff]
          %v292 = vld [vmem:[#allocation3 + $0x110] sm:$0xff]
          %v293 = vld [vmem:[#allocation3 + $0x118] sm:$0xff]
          %v294 = vld [vmem:[#allocation3 + $0x120] sm:$0xff]
          %v295 = vld [vmem:[#allocation3 + $0x128] sm:$0xff]
          %v296 = vld [vmem:[#allocation3 + $0x130] sm:$0xff]
          %v297 = vld [vmem:[#allocation3 + $0x138] sm:$0xff]
          %v298 = vld [vmem:[#allocation3 + $0x140] sm:$0xff]
          %v299 = vld [vmem:[#allocation3 + $0x148] sm:$0xff]
          %v300 = vld [vmem:[#allocation3 + $0x150] sm:$0xff]
          %v301 = vld [vmem:[#allocation3 + $0x158] sm:$0xff]
          %v302 = vld [vmem:[#allocation3 + $0x160] sm:$0xff]
          %v303 = vld [vmem:[#allocation3 + $0x168] sm:$0xff]
          %v304 = vld [vmem:[#allocation3 + $0x170] sm:$0xff]
          %v305 = vld [vmem:[#allocation3 + $0x178] sm:$0xff]
          %v306 = vld [vmem:[#allocation3 + $0x180] sm:$0xff]
          %v307 = vld [vmem:[#allocation3 + $0x188] sm:$0xff]
          %v308 = vld [vmem:[#allocation3 + $0x190] sm:$0xff]
          %v309 = vld [vmem:[#allocation3 + $0x198] sm:$0xff]
          %v310 = vld [vmem:[#allocation3 + $0x1a0] sm:$0xff]
          %v311 = vld [vmem:[#allocation3 + $0x1a8] sm:$0xff]
          %v312 = vld [vmem:[#allocation3 + $0x1b0] sm:$0xff]
          %v313 = vld [vmem:[#allocation3 + $0x1b8] sm:$0xff]
          %v314 = vld [vmem:[#allocation3 + $0x1c0] sm:$0xff]
          %v315 = vld [vmem:[#allocation3 + $0x1c8] sm:$0xff]
          %v316 = vld [vmem:[#allocation3 + $0x1d0] sm:$0xff]
          %v317 = vld [vmem:[#allocation3 + $0x1d8] sm:$0xff]
          %v318 = vld [vmem:[#allocation3 + $0x1e0] sm:$0xff]
          %v319 = vld [vmem:[#allocation3 + $0x1e8] sm:$0xff]
          %v320 = vld [vmem:[#allocation3 + $0x1f0] sm:$0xff]
          %v321 = vld [vmem:[#allocation3 + $0x1f8] sm:$0xff]
          %v322 = vld [vmem:[#allocation3 + $0x200] sm:$0xff]
          %v323 = vld [vmem:[#allocation3 + $0x208] sm:$0xff]
          %v324 = vld [vmem:[#allocation3 + $0x210] sm:$0xff]
          %v325 = vld [vmem:[#allocation3 + $0x218] sm:$0xff]
          %v326 = vld [vmem:[#allocation3 + $0x220] sm:$0xff]
          %v327 = vld [vmem:[#allocation3 + $0x228] sm:$0xff]
          %v328 = vld [vmem:[#allocation3 + $0x230] sm:$0xff]
          %v329 = vld [vmem:[#allocation3 + $0x238] sm:$0xff]
          %v330 = vld [vmem:[#allocation3 + $0x240] sm:$0xff]
          %v331 = vld [vmem:[#allocation3 + $0x248] sm:$0xff]
          %v332 = vld [vmem:[#allocation3 + $0x250] sm:$0xff]
          %v333 = vld [vmem:[#allocation3 + $0x258] sm:$0xff]
          %v334 = vld [vmem:[#allocation3 + $0x260] sm:$0xff]
          %v335 = vld [vmem:[#allocation3 + $0x268] sm:$0xff]
          %v336 = vld [vmem:[#allocation3 + $0x270] sm:$0xff]
          %v337 = vld [vmem:[#allocation3 + $0x278] sm:$0xff]
          %v338 = vld [vmem:[#allocation3 + $0x280] sm:$0xff]
          %v339 = vld [vmem:[#allocation3 + $0x288] sm:$0xff]
          %v340 = vld [vmem:[#allocation3 + $0x290] sm:$0xff]
          %v341 = vld [vmem:[#allocation3 + $0x298] sm:$0xff]
          %v342 = vld [vmem:[#allocation3 + $0x2a0] sm:$0xff]
          %v343 = vld [vmem:[#allocation3 + $0x2a8] sm:$0xff]
          %v344 = vld [vmem:[#allocation3 + $0x2b0] sm:$0xff]
          %v345 = vld [vmem:[#allocation3 + $0x2b8] sm:$0xff]
          %v346 = vld [vmem:[#allocation3 + $0x2c0] sm:$0xff]
          %v347 = vld [vmem:[#allocation3 + $0x2c8] sm:$0xff]
          %v348 = vld [vmem:[#allocation3 + $0x2d0] sm:$0xff]
          %v349 = vld [vmem:[#allocation3 + $0x2d8] sm:$0xff]
          %v350 = vld [vmem:[#allocation3 + $0x2e0] sm:$0xff]
          %v351 = vld [vmem:[#allocation3 + $0x2e8] sm:$0xff]
          %v352 = vld [vmem:[#allocation3 + $0x2f0] sm:$0xff]
          %v353 = vld [vmem:[#allocation3 + $0x2f8] sm:$0xff]
          %v354 = vld [vmem:[#allocation3 + $0x300] sm:$0xff]
          %v355 = vld [vmem:[#allocation3 + $0x308] sm:$0xff]
          %v356 = vld [vmem:[#allocation3 + $0x310] sm:$0xff]
          %v357 = vld [vmem:[#allocation3 + $0x318] sm:$0xff]
          %v358 = vld [vmem:[#allocation3 + $0x320] sm:$0xff]
          %v359 = vld [vmem:[#allocation3 + $0x328] sm:$0xff]
          %v360 = vld [vmem:[#allocation3 + $0x330] sm:$0xff]
          %v361 = vld [vmem:[#allocation3 + $0x338] sm:$0xff]
          %v362 = vld [vmem:[#allocation3 + $0x340] sm:$0xff]
          %v363 = vld [vmem:[#allocation3 + $0x348] sm:$0xff]
          %v364 = vld [vmem:[#allocation3 + $0x350] sm:$0xff]
          %v365 = vld [vmem:[#allocation3 + $0x358] sm:$0xff]
          %v366 = vld [vmem:[#allocation3 + $0x360] sm:$0xff]
          %v367 = vld [vmem:[#allocation3 + $0x368] sm:$0xff]
          %v368 = vld [vmem:[#allocation3 + $0x370] sm:$0xff]
          %v369 = vld [vmem:[#allocation3 + $0x378] sm:$0xff]
          %v370 = vld [vmem:[#allocation3 + $0x380] sm:$0xff]
          %v371 = vld [vmem:[#allocation3 + $0x388] sm:$0xff]
          %v372 = vld [vmem:[#allocation3 + $0x390] sm:$0xff]
          %v373 = vld [vmem:[#allocation3 + $0x398] sm:$0xff]
          %v374 = vld [vmem:[#allocation3 + $0x3a0] sm:$0xff]
          %v375 = vld [vmem:[#allocation3 + $0x3a8] sm:$0xff]
          %v376 = vld [vmem:[#allocation3 + $0x3b0] sm:$0xff]
          %v377 = vld [vmem:[#allocation3 + $0x3b8] sm:$0xff]
          %v378 = vld [vmem:[#allocation3 + $0x3c0] sm:$0xff]
          %v379 = vld [vmem:[#allocation3 + $0x3c8] sm:$0xff]
          %v380 = vld [vmem:[#allocation3 + $0x3d0] sm:$0xff]
          %v381 = vld [vmem:[#allocation3 + $0x3d8] sm:$0xff]
          %v382 = vld [vmem:[#allocation3 + $0x3e0] sm:$0xff]
          %v383 = vld [vmem:[#allocation3 + $0x3e8] sm:$0xff]
          %v384 = vld [vmem:[#allocation3 + $0x3f0] sm:$0xff]
          %v385 = vld [vmem:[#allocation3 + $0x3f8] sm:$0xff]
          %v386 = vld [vmem:[#allocation6] sm:$0xf]
          %v387 = vld [vmem:[#allocation6 + $0x4] sm:$0xf]
          %v388 = vld [vmem:[#allocation6 + $0x8] sm:$0xf]
          %v389 = vld [vmem:[#allocation6 + $0xc] sm:$0xf]
          %v390 = vld [vmem:[#allocation6 + $0x10] sm:$0xf]
          %v391 = vld [vmem:[#allocation6 + $0x14] sm:$0xf]
          %v392 = vld [vmem:[#allocation6 + $0x18] sm:$0xf]
          %v393 = vld [vmem:[#allocation6 + $0x1c] sm:$0xf]
          %v394 = vld [vmem:[#allocation6 + $0x20] sm:$0xf]
          %v395 = vld [vmem:[#allocation6 + $0x24] sm:$0xf]
          %v396 = vld [vmem:[#allocation6 + $0x28] sm:$0xf]
          %v397 = vld [vmem:[#allocation6 + $0x2c] sm:$0xf]
          %v398 = vld [vmem:[#allocation6 + $0x30] sm:$0xf]
          %v399 = vld [vmem:[#allocation6 + $0x34] sm:$0xf]
          %v400 = vld [vmem:[#allocation6 + $0x38] sm:$0xf]
          %v401 = vld [vmem:[#allocation6 + $0x3c] sm:$0xf]
          %v402 = vld [vmem:[#allocation6 + $0x40] sm:$0xf]
          %v403 = vld [vmem:[#allocation6 + $0x44] sm:$0xf]
          %v404 = vld [vmem:[#allocation6 + $0x48] sm:$0xf]
          %v405 = vld [vmem:[#allocation6 + $0x4c] sm:$0xf]
          %v406 = vld [vmem:[#allocation6 + $0x50] sm:$0xf]
          %v407 = vld [vmem:[#allocation6 + $0x54] sm:$0xf]
          %v408 = vld [vmem:[#allocation6 + $0x58] sm:$0xf]
          %v409 = vld [vmem:[#allocation6 + $0x5c] sm:$0xf]
          %v410 = vld [vmem:[#allocation6 + $0x60] sm:$0xf]
          %v411 = vld [vmem:[#allocation6 + $0x64] sm:$0xf]
          %v412 = vld [vmem:[#allocation6 + $0x68] sm:$0xf]
          %v413 = vld [vmem:[#allocation6 + $0x6c] sm:$0xf]
          %v414 = vld [vmem:[#allocation6 + $0x70] sm:$0xf]
          %v415 = vld [vmem:[#allocation6 + $0x74] sm:$0xf]
          %v416 = vld [vmem:[#allocation6 + $0x78] sm:$0xf]
          %v417 = vld [vmem:[#allocation6 + $0x7c] sm:$0xf]
          %v418 = vld [vmem:[#allocation6 + $0x80] sm:$0xf]
          %v419 = vld [vmem:[#allocation6 + $0x84] sm:$0xf]
          %v420 = vld [vmem:[#allocation6 + $0x88] sm:$0xf]
          %v421 = vld [vmem:[#allocation6 + $0x8c] sm:$0xf]
          %v422 = vld [vmem:[#allocation6 + $0x90] sm:$0xf]
          %v423 = vld [vmem:[#allocation6 + $0x94] sm:$0xf]
          %v424 = vld [vmem:[#allocation6 + $0x98] sm:$0xf]
          %v425 = vld [vmem:[#allocation6 + $0x9c] sm:$0xf]
          %v426 = vld [vmem:[#allocation6 + $0xa0] sm:$0xf]
          %v427 = vld [vmem:[#allocation6 + $0xa4] sm:$0xf]
          %v428 = vld [vmem:[#allocation6 + $0xa8] sm:$0xf]
          %v429 = vld [vmem:[#allocation6 + $0xac] sm:$0xf]
          %v430 = vld [vmem:[#allocation6 + $0xb0] sm:$0xf]
          %v431 = vld [vmem:[#allocation6 + $0xb4] sm:$0xf]
          %v432 = vld [vmem:[#allocation6 + $0xb8] sm:$0xf]
          %v433 = vld [vmem:[#allocation6 + $0xbc] sm:$0xf]
          %v434 = vld [vmem:[#allocation6 + $0xc0] sm:$0xf]
          %v435 = vld [vmem:[#allocation6 + $0xc4] sm:$0xf]
          %v436 = vld [vmem:[#allocation6 + $0xc8] sm:$0xf]
          %v437 = vld [vmem:[#allocation6 + $0xcc] sm:$0xf]
          %v438 = vld [vmem:[#allocation6 + $0xd0] sm:$0xf]
          %v439 = vld [vmem:[#allocation6 + $0xd4] sm:$0xf]
          %v440 = vld [vmem:[#allocation6 + $0xd8] sm:$0xf]
          %v441 = vld [vmem:[#allocation6 + $0xdc] sm:$0xf]
          %v442 = vld [vmem:[#allocation6 + $0xe0] sm:$0xf]
          %v443 = vld [vmem:[#allocation6 + $0xe4] sm:$0xf]
          %v444 = vld [vmem:[#allocation6 + $0xe8] sm:$0xf]
          %v445 = vld [vmem:[#allocation6 + $0xec] sm:$0xf]
          %v446 = vld [vmem:[#allocation6 + $0xf0] sm:$0xf]
          %v447 = vld [vmem:[#allocation6 + $0xf4] sm:$0xf]
          %v448 = vld [vmem:[#allocation6 + $0xf8] sm:$0xf]
          %v449 = vld [vmem:[#allocation6 + $0xfc] sm:$0xf]
          %v450 = vld [vmem:[%s2] sm:$0x1]
          %v452 = vperm.slane %v450, 0
          %v582 = vunpack.c.l.b16 %v258
          %v583 = vunpack.c.h.b16 %v258
          %v584 = vunpack.c.l.b16 %v259
          %v585 = vunpack.c.h.b16 %v259
          %v586 = vunpack.c.l.b16 %v260
          %v587 = vunpack.c.h.b16 %v260
          %v588 = vunpack.c.l.b16 %v261
          %v589 = vunpack.c.h.b16 %v261
          %v590 = vunpack.c.l.b16 %v262
          %v591 = vunpack.c.h.b16 %v262
          %v592 = vunpack.c.l.b16 %v263
          %v593 = vunpack.c.h.b16 %v263
          %v594 = vunpack.c.l.b16 %v264
          %v595 = vunpack.c.h.b16 %v264
          %v596 = vunpack.c.l.b16 %v265
          %v597 = vunpack.c.h.b16 %v265
          %v598 = vunpack.c.l.b16 %v266
          %v599 = vunpack.c.h.b16 %v266
          %v600 = vunpack.c.l.b16 %v267
          %v601 = vunpack.c.h.b16 %v267
          %v602 = vunpack.c.l.b16 %v268
          %v603 = vunpack.c.h.b16 %v268
          %v604 = vunpack.c.l.b16 %v269
          %v605 = vunpack.c.h.b16 %v269
          %v606 = vunpack.c.l.b16 %v270
          %v607 = vunpack.c.h.b16 %v270
          %v608 = vunpack.c.l.b16 %v271
          %v609 = vunpack.c.h.b16 %v271
          %v610 = vunpack.c.l.b16 %v272
          %v611 = vunpack.c.h.b16 %v272
          %v612 = vunpack.c.l.b16 %v273
          %v613 = vunpack.c.h.b16 %v273
          %v614 = vunpack.c.l.b16 %v274
          %v615 = vunpack.c.h.b16 %v274
          %v616 = vunpack.c.l.b16 %v275
          %v617 = vunpack.c.h.b16 %v275
          %v618 = vunpack.c.l.b16 %v276
          %v619 = vunpack.c.h.b16 %v276
          %v620 = vunpack.c.l.b16 %v277
          %v621 = vunpack.c.h.b16 %v277
          %v622 = vunpack.c.l.b16 %v278
          %v623 = vunpack.c.h.b16 %v278
          %v624 = vunpack.c.l.b16 %v279
          %v625 = vunpack.c.h.b16 %v279
          %v626 = vunpack.c.l.b16 %v280
          %v627 = vunpack.c.h.b16 %v280
          %v628 = vunpack.c.l.b16 %v281
          %v629 = vunpack.c.h.b16 %v281
          %v630 = vunpack.c.l.b16 %v282
          %v631 = vunpack.c.h.b16 %v282
          %v632 = vunpack.c.l.b16 %v283
          %v633 = vunpack.c.h.b16 %v283
          %v634 = vunpack.c.l.b16 %v284
          %v635 = vunpack.c.h.b16 %v284
          %v636 = vunpack.c.l.b16 %v285
          %v637 = vunpack.c.h.b16 %v285
          %v638 = vunpack.c.l.b16 %v286
          %v639 = vunpack.c.h.b16 %v286
          %v640 = vunpack.c.l.b16 %v287
          %v641 = vunpack.c.h.b16 %v287
          %v642 = vunpack.c.l.b16 %v288
          %v643 = vunpack.c.h.b16 %v288
          %v644 = vunpack.c.l.b16 %v289
          %v645 = vunpack.c.h.b16 %v289
          %v646 = vunpack.c.l.b16 %v290
          %v647 = vunpack.c.h.b16 %v290
          %v648 = vunpack.c.l.b16 %v291
          %v649 = vunpack.c.h.b16 %v291
          %v650 = vunpack.c.l.b16 %v292
          %v651 = vunpack.c.h.b16 %v292
          %v652 = vunpack.c.l.b16 %v293
          %v653 = vunpack.c.h.b16 %v293
          %v654 = vunpack.c.l.b16 %v294
          %v655 = vunpack.c.h.b16 %v294
          %v656 = vunpack.c.l.b16 %v295
          %v657 = vunpack.c.h.b16 %v295
          %v658 = vunpack.c.l.b16 %v296
          %v659 = vunpack.c.h.b16 %v296
          %v660 = vunpack.c.l.b16 %v297
          %v661 = vunpack.c.h.b16 %v297
          %v662 = vunpack.c.l.b16 %v298
          %v663 = vunpack.c.h.b16 %v298
          %v664 = vunpack.c.l.b16 %v299
          %v665 = vunpack.c.h.b16 %v299
          %v666 = vunpack.c.l.b16 %v300
          %v667 = vunpack.c.h.b16 %v300
          %v668 = vunpack.c.l.b16 %v301
          %v669 = vunpack.c.h.b16 %v301
          %v670 = vunpack.c.l.b16 %v302
          %v671 = vunpack.c.h.b16 %v302
          %v672 = vunpack.c.l.b16 %v303
          %v673 = vunpack.c.h.b16 %v303
          %v674 = vunpack.c.l.b16 %v304
          %v675 = vunpack.c.h.b16 %v304
          %v676 = vunpack.c.l.b16 %v305
          %v677 = vunpack.c.h.b16 %v305
          %v678 = vunpack.c.l.b16 %v306
          %v679 = vunpack.c.h.b16 %v306
          %v680 = vunpack.c.l.b16 %v307
          %v681 = vunpack.c.h.b16 %v307
          %v682 = vunpack.c.l.b16 %v308
          %v683 = vunpack.c.h.b16 %v308
          %v684 = vunpack.c.l.b16 %v309
          %v685 = vunpack.c.h.b16 %v309
          %v686 = vunpack.c.l.b16 %v310
          %v687 = vunpack.c.h.b16 %v310
          %v688 = vunpack.c.l.b16 %v311
          %v689 = vunpack.c.h.b16 %v311
          %v690 = vunpack.c.l.b16 %v312
          %v691 = vunpack.c.h.b16 %v312
          %v692 = vunpack.c.l.b16 %v313
          %v693 = vunpack.c.h.b16 %v313
          %v694 = vunpack.c.l.b16 %v314
          %v695 = vunpack.c.h.b16 %v314
          %v696 = vunpack.c.l.b16 %v315
          %v697 = vunpack.c.h.b16 %v315
          %v698 = vunpack.c.l.b16 %v316
          %v699 = vunpack.c.h.b16 %v316
          %v700 = vunpack.c.l.b16 %v317
          %v701 = vunpack.c.h.b16 %v317
          %v702 = vunpack.c.l.b16 %v318
          %v703 = vunpack.c.h.b16 %v318
          %v704 = vunpack.c.l.b16 %v319
          %v705 = vunpack.c.h.b16 %v319
          %v706 = vunpack.c.l.b16 %v320
          %v707 = vunpack.c.h.b16 %v320
          %v708 = vunpack.c.l.b16 %v321
          %v709 = vunpack.c.h.b16 %v321
          %v710 = vunpack.c.l.b16 %v322
          %v711 = vunpack.c.h.b16 %v322
          %v712 = vunpack.c.l.b16 %v323
          %v713 = vunpack.c.h.b16 %v323
          %v714 = vunpack.c.l.b16 %v324
          %v715 = vunpack.c.h.b16 %v324
          %v716 = vunpack.c.l.b16 %v325
          %v717 = vunpack.c.h.b16 %v325
          %v718 = vunpack.c.l.b16 %v326
          %v719 = vunpack.c.h.b16 %v326
          %v720 = vunpack.c.l.b16 %v327
          %v721 = vunpack.c.h.b16 %v327
          %v722 = vunpack.c.l.b16 %v328
          %v723 = vunpack.c.h.b16 %v328
          %v724 = vunpack.c.l.b16 %v329
          %v725 = vunpack.c.h.b16 %v329
          %v726 = vunpack.c.l.b16 %v330
          %v727 = vunpack.c.h.b16 %v330
          %v728 = vunpack.c.l.b16 %v331
          %v729 = vunpack.c.h.b16 %v331
          %v730 = vunpack.c.l.b16 %v332
          %v731 = vunpack.c.h.b16 %v332
          %v732 = vunpack.c.l.b16 %v333
          %v733 = vunpack.c.h.b16 %v333
          %v734 = vunpack.c.l.b16 %v334
          %v735 = vunpack.c.h.b16 %v334
          %v736 = vunpack.c.l.b16 %v335
          %v737 = vunpack.c.h.b16 %v335
          %v738 = vunpack.c.l.b16 %v336
          %v739 = vunpack.c.h.b16 %v336
          %v740 = vunpack.c.l.b16 %v337
          %v741 = vunpack.c.h.b16 %v337
          %v742 = vunpack.c.l.b16 %v338
          %v743 = vunpack.c.h.b16 %v338
          %v744 = vunpack.c.l.b16 %v339
          %v745 = vunpack.c.h.b16 %v339
          %v746 = vunpack.c.l.b16 %v340
          %v747 = vunpack.c.h.b16 %v340
          %v748 = vunpack.c.l.b16 %v341
          %v749 = vunpack.c.h.b16 %v341
          %v750 = vunpack.c.l.b16 %v342
          %v751 = vunpack.c.h.b16 %v342
          %v752 = vunpack.c.l.b16 %v343
          %v753 = vunpack.c.h.b16 %v343
          %v754 = vunpack.c.l.b16 %v344
          %v755 = vunpack.c.h.b16 %v344
          %v756 = vunpack.c.l.b16 %v345
          %v757 = vunpack.c.h.b16 %v345
          %v758 = vunpack.c.l.b16 %v346
          %v759 = vunpack.c.h.b16 %v346
          %v760 = vunpack.c.l.b16 %v347
          %v761 = vunpack.c.h.b16 %v347
          %v762 = vunpack.c.l.b16 %v348
          %v763 = vunpack.c.h.b16 %v348
          %v764 = vunpack.c.l.b16 %v349
          %v765 = vunpack.c.h.b16 %v349
          %v766 = vunpack.c.l.b16 %v350
          %v767 = vunpack.c.h.b16 %v350
          %v768 = vunpack.c.l.b16 %v351
          %v769 = vunpack.c.h.b16 %v351
          %v770 = vunpack.c.l.b16 %v352
          %v771 = vunpack.c.h.b16 %v352
          %v772 = vunpack.c.l.b16 %v353
          %v773 = vunpack.c.h.b16 %v353
          %v774 = vunpack.c.l.b16 %v354
          %v775 = vunpack.c.h.b16 %v354
          %v776 = vunpack.c.l.b16 %v355
          %v777 = vunpack.c.h.b16 %v355
          %v778 = vunpack.c.l.b16 %v356
          %v779 = vunpack.c.h.b16 %v356
          %v780 = vunpack.c.l.b16 %v357
          %v781 = vunpack.c.h.b16 %v357
          %v782 = vunpack.c.l.b16 %v358
          %v783 = vunpack.c.h.b16 %v358
          %v784 = vunpack.c.l.b16 %v359
          %v785 = vunpack.c.h.b16 %v359
          %v786 = vunpack.c.l.b16 %v360
          %v787 = vunpack.c.h.b16 %v360
          %v788 = vunpack.c.l.b16 %v361
          %v789 = vunpack.c.h.b16 %v361
          %v790 = vunpack.c.l.b16 %v362
          %v791 = vunpack.c.h.b16 %v362
          %v792 = vunpack.c.l.b16 %v363
          %v793 = vunpack.c.h.b16 %v363
          %v794 = vunpack.c.l.b16 %v364
          %v795 = vunpack.c.h.b16 %v364
          %v796 = vunpack.c.l.b16 %v365
          %v797 = vunpack.c.h.b16 %v365
          %v798 = vunpack.c.l.b16 %v366
          %v799 = vunpack.c.h.b16 %v366
          %v800 = vunpack.c.l.b16 %v367
          %v801 = vunpack.c.h.b16 %v367
          %v802 = vunpack.c.l.b16 %v368
          %v803 = vunpack.c.h.b16 %v368
          %v804 = vunpack.c.l.b16 %v369
          %v805 = vunpack.c.h.b16 %v369
          %v806 = vunpack.c.l.b16 %v370
          %v807 = vunpack.c.h.b16 %v370
          %v808 = vunpack.c.l.b16 %v371
          %v809 = vunpack.c.h.b16 %v371
          %v810 = vunpack.c.l.b16 %v372
          %v811 = vunpack.c.h.b16 %v372
          %v812 = vunpack.c.l.b16 %v373
          %v813 = vunpack.c.h.b16 %v373
          %v814 = vunpack.c.l.b16 %v374
          %v815 = vunpack.c.h.b16 %v374
          %v816 = vunpack.c.l.b16 %v375
          %v817 = vunpack.c.h.b16 %v375
          %v818 = vunpack.c.l.b16 %v376
          %v819 = vunpack.c.h.b16 %v376
          %v820 = vunpack.c.l.b16 %v377
          %v821 = vunpack.c.h.b16 %v377
          %v822 = vunpack.c.l.b16 %v378
          %v823 = vunpack.c.h.b16 %v378
          %v824 = vunpack.c.l.b16 %v379
          %v825 = vunpack.c.h.b16 %v379
          %v826 = vunpack.c.l.b16 %v380
          %v827 = vunpack.c.h.b16 %v380
          %v828 = vunpack.c.l.b16 %v381
          %v829 = vunpack.c.h.b16 %v381
          %v830 = vunpack.c.l.b16 %v382
          %v831 = vunpack.c.h.b16 %v382
          %v832 = vunpack.c.l.b16 %v383
          %v833 = vunpack.c.h.b16 %v383
          %v834 = vunpack.c.l.b16 %v384
          %v835 = vunpack.c.h.b16 %v384
          %v836 = vunpack.c.l.b16 %v385
          %v837 = vunpack.c.h.b16 %v385
          %v838 = vpack.c.b16 %v586, %v582
          %v839 = vpack.c.b16 %v587, %v583
          %v840 = vpack.c.b16 %v588, %v584
          %v841 = vpack.c.b16 %v589, %v585
          %v842 = vpack.c.b16 %v594, %v590
          %v843 = vpack.c.b16 %v595, %v591
          %v844 = vpack.c.b16 %v596, %v592
          %v845 = vpack.c.b16 %v597, %v593
          %v846 = vpack.c.b16 %v602, %v598
          %v847 = vpack.c.b16 %v603, %v599
          %v848 = vpack.c.b16 %v604, %v600
          %v849 = vpack.c.b16 %v605, %v601
          %v850 = vpack.c.b16 %v610, %v606
          %v851 = vpack.c.b16 %v611, %v607
          %v852 = vpack.c.b16 %v612, %v608
          %v853 = vpack.c.b16 %v613, %v609
          %v854 = vpack.c.b16 %v618, %v614
          %v855 = vpack.c.b16 %v619, %v615
          %v856 = vpack.c.b16 %v620, %v616
          %v857 = vpack.c.b16 %v621, %v617
          %v858 = vpack.c.b16 %v626, %v622
          %v859 = vpack.c.b16 %v627, %v623
          %v860 = vpack.c.b16 %v628, %v624
          %v861 = vpack.c.b16 %v629, %v625
          %v862 = vpack.c.b16 %v634, %v630
          %v863 = vpack.c.b16 %v635, %v631
          %v864 = vpack.c.b16 %v636, %v632
          %v865 = vpack.c.b16 %v637, %v633
          %v866 = vpack.c.b16 %v642, %v638
          %v867 = vpack.c.b16 %v643, %v639
          %v868 = vpack.c.b16 %v644, %v640
          %v869 = vpack.c.b16 %v645, %v641
          %v870 = vpack.c.b16 %v650, %v646
          %v871 = vpack.c.b16 %v651, %v647
          %v872 = vpack.c.b16 %v652, %v648
          %v873 = vpack.c.b16 %v653, %v649
          %v874 = vpack.c.b16 %v658, %v654
          %v875 = vpack.c.b16 %v659, %v655
          %v876 = vpack.c.b16 %v660, %v656
          %v877 = vpack.c.b16 %v661, %v657
          %v878 = vpack.c.b16 %v666, %v662
          %v879 = vpack.c.b16 %v667, %v663
          %v880 = vpack.c.b16 %v668, %v664
          %v881 = vpack.c.b16 %v669, %v665
          %v882 = vpack.c.b16 %v674, %v670
          %v883 = vpack.c.b16 %v675, %v671
          %v884 = vpack.c.b16 %v676, %v672
          %v885 = vpack.c.b16 %v677, %v673
          %v886 = vpack.c.b16 %v682, %v678
          %v887 = vpack.c.b16 %v683, %v679
          %v888 = vpack.c.b16 %v684, %v680
          %v889 = vpack.c.b16 %v685, %v681
          %v890 = vpack.c.b16 %v690, %v686
          %v891 = vpack.c.b16 %v691, %v687
          %v892 = vpack.c.b16 %v692, %v688
          %v893 = vpack.c.b16 %v693, %v689
          %v894 = vpack.c.b16 %v698, %v694
          %v895 = vpack.c.b16 %v699, %v695
          %v896 = vpack.c.b16 %v700, %v696
          %v897 = vpack.c.b16 %v701, %v697
          %v898 = vpack.c.b16 %v706, %v702
          %v899 = vpack.c.b16 %v707, %v703
          %v900 = vpack.c.b16 %v708, %v704
          %v901 = vpack.c.b16 %v709, %v705
          %v902 = vpack.c.b16 %v714, %v710
          %v903 = vpack.c.b16 %v715, %v711
          %v904 = vpack.c.b16 %v716, %v712
          %v905 = vpack.c.b16 %v717, %v713
          %v906 = vpack.c.b16 %v722, %v718
          %v907 = vpack.c.b16 %v723, %v719
          %v908 = vpack.c.b16 %v724, %v720
          %v909 = vpack.c.b16 %v725, %v721
          %v910 = vpack.c.b16 %v730, %v726
          %v911 = vpack.c.b16 %v731, %v727
          %v912 = vpack.c.b16 %v732, %v728
          %v913 = vpack.c.b16 %v733, %v729
          %v914 = vpack.c.b16 %v738, %v734
          %v915 = vpack.c.b16 %v739, %v735
          %v916 = vpack.c.b16 %v740, %v736
          %v917 = vpack.c.b16 %v741, %v737
          %v918 = vpack.c.b16 %v746, %v742
          %v919 = vpack.c.b16 %v747, %v743
          %v920 = vpack.c.b16 %v748, %v744
          %v921 = vpack.c.b16 %v749, %v745
          %v922 = vpack.c.b16 %v754, %v750
          %v923 = vpack.c.b16 %v755, %v751
          %v924 = vpack.c.b16 %v756, %v752
          %v925 = vpack.c.b16 %v757, %v753
          %v926 = vpack.c.b16 %v762, %v758
          %v927 = vpack.c.b16 %v763, %v759
          %v928 = vpack.c.b16 %v764, %v760
          %v929 = vpack.c.b16 %v765, %v761
          %v930 = vpack.c.b16 %v770, %v766
          %v931 = vpack.c.b16 %v771, %v767
          %v932 = vpack.c.b16 %v772, %v768
          %v933 = vpack.c.b16 %v773, %v769
          %v934 = vpack.c.b16 %v778, %v774
          %v935 = vpack.c.b16 %v779, %v775
          %v936 = vpack.c.b16 %v780, %v776
          %v937 = vpack.c.b16 %v781, %v777
          %v938 = vpack.c.b16 %v786, %v782
          %v939 = vpack.c.b16 %v787, %v783
          %v940 = vpack.c.b16 %v788, %v784
          %v941 = vpack.c.b16 %v789, %v785
          %v942 = vpack.c.b16 %v794, %v790
          %v943 = vpack.c.b16 %v795, %v791
          %v944 = vpack.c.b16 %v796, %v792
          %v945 = vpack.c.b16 %v797, %v793
          %v946 = vpack.c.b16 %v802, %v798
          %v947 = vpack.c.b16 %v803, %v799
          %v948 = vpack.c.b16 %v804, %v800
          %v949 = vpack.c.b16 %v805, %v801
          %v950 = vpack.c.b16 %v810, %v806
          %v951 = vpack.c.b16 %v811, %v807
          %v952 = vpack.c.b16 %v812, %v808
          %v953 = vpack.c.b16 %v813, %v809
          %v954 = vpack.c.b16 %v818, %v814
          %v955 = vpack.c.b16 %v819, %v815
          %v956 = vpack.c.b16 %v820, %v816
          %v957 = vpack.c.b16 %v821, %v817
          %v958 = vpack.c.b16 %v826, %v822
          %v959 = vpack.c.b16 %v827, %v823
          %v960 = vpack.c.b16 %v828, %v824
          %v961 = vpack.c.b16 %v829, %v825
          %v962 = vpack.c.b16 %v834, %v830
          %v963 = vpack.c.b16 %v835, %v831
          %v964 = vpack.c.b16 %v836, %v832
          %v965 = vpack.c.b16 %v837, %v833
          %v1158 = vunpack.c.l.b16 %v386
          %v1159 = vunpack.c.l.b16 %v387
          %v1160 = vunpack.c.l.b16 %v388
          %v1161 = vunpack.c.l.b16 %v389
          %v1162 = vunpack.c.l.b16 %v390
          %v1163 = vunpack.c.l.b16 %v391
          %v1164 = vunpack.c.l.b16 %v392
          %v1165 = vunpack.c.l.b16 %v393
          %v1166 = vunpack.c.l.b16 %v394
          %v1167 = vunpack.c.l.b16 %v395
          %v1168 = vunpack.c.l.b16 %v396
          %v1169 = vunpack.c.l.b16 %v397
          %v1170 = vunpack.c.l.b16 %v398
          %v1171 = vunpack.c.l.b16 %v399
          %v1172 = vunpack.c.l.b16 %v400
          %v1173 = vunpack.c.l.b16 %v401
          %v1174 = vunpack.c.l.b16 %v402
          %v1175 = vunpack.c.l.b16 %v403
          %v1176 = vunpack.c.l.b16 %v404
          %v1177 = vunpack.c.l.b16 %v405
          %v1178 = vunpack.c.l.b16 %v406
          %v1179 = vunpack.c.l.b16 %v407
          %v1180 = vunpack.c.l.b16 %v408
          %v1181 = vunpack.c.l.b16 %v409
          %v1182 = vunpack.c.l.b16 %v410
          %v1183 = vunpack.c.l.b16 %v411
          %v1184 = vunpack.c.l.b16 %v412
          %v1185 = vunpack.c.l.b16 %v413
          %v1186 = vunpack.c.l.b16 %v414
          %v1187 = vunpack.c.l.b16 %v415
          %v1188 = vunpack.c.l.b16 %v416
          %v1189 = vunpack.c.l.b16 %v417
          %v1190 = vunpack.c.l.b16 %v418
          %v1191 = vunpack.c.l.b16 %v419
          %v1192 = vunpack.c.l.b16 %v420
          %v1193 = vunpack.c.l.b16 %v421
          %v1194 = vunpack.c.l.b16 %v422
          %v1195 = vunpack.c.l.b16 %v423
          %v1196 = vunpack.c.l.b16 %v424
          %v1197 = vunpack.c.l.b16 %v425
          %v1198 = vunpack.c.l.b16 %v426
          %v1199 = vunpack.c.l.b16 %v427
          %v1200 = vunpack.c.l.b16 %v428
          %v1201 = vunpack.c.l.b16 %v429
          %v1202 = vunpack.c.l.b16 %v430
          %v1203 = vunpack.c.l.b16 %v431
          %v1204 = vunpack.c.l.b16 %v432
          %v1205 = vunpack.c.l.b16 %v433
          %v1206 = vunpack.c.l.b16 %v434
          %v1207 = vunpack.c.l.b16 %v435
          %v1208 = vunpack.c.l.b16 %v436
          %v1209 = vunpack.c.l.b16 %v437
          %v1210 = vunpack.c.l.b16 %v438
          %v1211 = vunpack.c.l.b16 %v439
          %v1212 = vunpack.c.l.b16 %v440
          %v1213 = vunpack.c.l.b16 %v441
          %v1214 = vunpack.c.l.b16 %v442
          %v1215 = vunpack.c.l.b16 %v443
          %v1216 = vunpack.c.l.b16 %v444
          %v1217 = vunpack.c.l.b16 %v445
          %v1218 = vunpack.c.l.b16 %v446
          %v1219 = vunpack.c.l.b16 %v447
          %v1220 = vunpack.c.l.b16 %v448
          %v1221 = vunpack.c.l.b16 %v449
          %v1222 = vpack.c.b16 %v1159, %v1158
          %v1223 = vpack.c.b16 %v1161, %v1160
          %v1224 = vpack.c.b16 %v1163, %v1162
          %v1225 = vpack.c.b16 %v1165, %v1164
          %v1226 = vpack.c.b16 %v1167, %v1166
          %v1227 = vpack.c.b16 %v1169, %v1168
          %v1228 = vpack.c.b16 %v1171, %v1170
          %v1229 = vpack.c.b16 %v1173, %v1172
          %v1230 = vpack.c.b16 %v1175, %v1174
          %v1231 = vpack.c.b16 %v1177, %v1176
          %v1232 = vpack.c.b16 %v1179, %v1178
          %v1233 = vpack.c.b16 %v1181, %v1180
          %v1234 = vpack.c.b16 %v1183, %v1182
          %v1235 = vpack.c.b16 %v1185, %v1184
          %v1236 = vpack.c.b16 %v1187, %v1186
          %v1237 = vpack.c.b16 %v1189, %v1188
          %v1238 = vpack.c.b16 %v1191, %v1190
          %v1239 = vpack.c.b16 %v1193, %v1192
          %v1240 = vpack.c.b16 %v1195, %v1194
          %v1241 = vpack.c.b16 %v1197, %v1196
          %v1242 = vpack.c.b16 %v1199, %v1198
          %v1243 = vpack.c.b16 %v1201, %v1200
          %v1244 = vpack.c.b16 %v1203, %v1202
          %v1245 = vpack.c.b16 %v1205, %v1204
          %v1246 = vpack.c.b16 %v1207, %v1206
          %v1247 = vpack.c.b16 %v1209, %v1208
          %v1248 = vpack.c.b16 %v1211, %v1210
          %v1249 = vpack.c.b16 %v1213, %v1212
          %v1250 = vpack.c.b16 %v1215, %v1214
          %v1251 = vpack.c.b16 %v1217, %v1216
          %v1252 = vpack.c.b16 %v1219, %v1218
          %v1253 = vpack.c.b16 %v1221, %v1220
          %1286 = vmatpush.bf16.msra.mxu0 %v1229
          %1287 = vmatpush.bf16.msra.mxu0 %v1228
          %1288 = vmatpush.bf16.msra.mxu0 %v1227
          %1289 = vmatpush.bf16.msra.mxu0 %v1226
          %1290 = vmatpush.bf16.msra.mxu0 %v1225
          %1291 = vmatpush.bf16.msra.mxu0 %v1224
          %1292 = vmatpush.bf16.msra.mxu0 %v1223
          %1293 = vmatpush.bf16.msra.mxu0 %v1222
          %1294 = vmatmul.bf16.gmra.mxu0 %v838
          %v1295 = vpop.f32.mrf.mxu0
          %v1296 = vadd.f32 %v452, %v1295
          %v1297 = vpop.f32.mrf.mxu0
          %v1298 = vadd.f32 %v452, %v1297
          %1299 = vmatmul.bf16.gmra.mxu0 %v842
          %v1300 = vpop.f32.mrf.mxu0
          %v1301 = vadd.f32 %v452, %v1300
          %v1302 = vpop.f32.mrf.mxu0
          %v1303 = vadd.f32 %v452, %v1302
          %1304 = vmatmul.bf16.gmra.mxu0 %v846
          %v1305 = vpop.f32.mrf.mxu0
          %v1306 = vadd.f32 %v452, %v1305
          %v1307 = vpop.f32.mrf.mxu0
          %v1308 = vadd.f32 %v452, %v1307
          %1309 = vmatmul.bf16.gmra.mxu0 %v850
          %v1310 = vpop.f32.mrf.mxu0
          %v1311 = vadd.f32 %v452, %v1310
          %v1312 = vpop.f32.mrf.mxu0
          %v1313 = vadd.f32 %v452, %v1312
          %1314 = vmatmul.bf16.gmra.mxu0 %v854
          %v1315 = vpop.f32.mrf.mxu0
          %v1316 = vadd.f32 %v452, %v1315
          %v1317 = vpop.f32.mrf.mxu0
          %v1318 = vadd.f32 %v452, %v1317
          %1319 = vmatmul.bf16.gmra.mxu0 %v858
          %v1320 = vpop.f32.mrf.mxu0
          %v1321 = vadd.f32 %v452, %v1320
          %v1322 = vpop.f32.mrf.mxu0
          %v1323 = vadd.f32 %v452, %v1322
          %1324 = vmatmul.bf16.gmra.mxu0 %v862
          %v1325 = vpop.f32.mrf.mxu0
          %v1326 = vadd.f32 %v452, %v1325
          %v1327 = vpop.f32.mrf.mxu0
          %v1328 = vadd.f32 %v452, %v1327
          %1329 = vmatmul.bf16.gmra.mxu0 %v866
          %v1330 = vpop.f32.mrf.mxu0
          %v1331 = vadd.f32 %v452, %v1330
          %v1332 = vpop.f32.mrf.mxu0
          %v1333 = vadd.f32 %v452, %v1332
          %1334 = vmatmul.bf16.gmra.mxu0 %v870
          %v1335 = vpop.f32.mrf.mxu0
          %v1336 = vadd.f32 %v452, %v1335
          %v1337 = vpop.f32.mrf.mxu0
          %v1338 = vadd.f32 %v452, %v1337
          %1339 = vmatmul.bf16.gmra.mxu0 %v874
          %v1340 = vpop.f32.mrf.mxu0
          %v1341 = vadd.f32 %v452, %v1340
          %v1342 = vpop.f32.mrf.mxu0
          %v1343 = vadd.f32 %v452, %v1342
          %1344 = vmatmul.bf16.gmra.mxu0 %v878
          %v1345 = vpop.f32.mrf.mxu0
          %v1346 = vadd.f32 %v452, %v1345
          %v1347 = vpop.f32.mrf.mxu0
          %v1348 = vadd.f32 %v452, %v1347
          %1349 = vmatmul.bf16.gmra.mxu0 %v882
          %v1350 = vpop.f32.mrf.mxu0
          %v1351 = vadd.f32 %v452, %v1350
          %v1352 = vpop.f32.mrf.mxu0
          %v1353 = vadd.f32 %v452, %v1352
          %1354 = vmatmul.bf16.gmra.mxu0 %v886
          %v1355 = vpop.f32.mrf.mxu0
          %v1356 = vadd.f32 %v452, %v1355
          %v1357 = vpop.f32.mrf.mxu0
          %v1358 = vadd.f32 %v452, %v1357
          %1359 = vmatmul.bf16.gmra.mxu0 %v890
          %v1360 = vpop.f32.mrf.mxu0
          %v1361 = vadd.f32 %v452, %v1360
          %v1362 = vpop.f32.mrf.mxu0
          %v1363 = vadd.f32 %v452, %v1362
          %1364 = vmatmul.bf16.gmra.mxu0 %v894
          %v1365 = vpop.f32.mrf.mxu0
          %v1366 = vadd.f32 %v452, %v1365
          %v1367 = vpop.f32.mrf.mxu0
          %v1368 = vadd.f32 %v452, %v1367
          %1369 = vmatmul.bf16.gmra.mxu0 %v898
          %v1370 = vpop.f32.mrf.mxu0
          %v1371 = vadd.f32 %v452, %v1370
          %v1372 = vpop.f32.mrf.mxu0
          %v1373 = vadd.f32 %v452, %v1372
          %1374 = vmatmul.bf16.gmra.mxu0 %v902
          %v1375 = vpop.f32.mrf.mxu0
          %v1376 = vadd.f32 %v452, %v1375
          %v1377 = vpop.f32.mrf.mxu0
          %v1378 = vadd.f32 %v452, %v1377
          %1379 = vmatmul.bf16.gmra.mxu0 %v906
          %v1380 = vpop.f32.mrf.mxu0
          %v1381 = vadd.f32 %v452, %v1380
          %v1382 = vpop.f32.mrf.mxu0
          %v1383 = vadd.f32 %v452, %v1382
          %1384 = vmatmul.bf16.gmra.mxu0 %v910
          %v1385 = vpop.f32.mrf.mxu0
          %v1386 = vadd.f32 %v452, %v1385
          %v1387 = vpop.f32.mrf.mxu0
          %v1388 = vadd.f32 %v452, %v1387
          %1389 = vmatmul.bf16.gmra.mxu0 %v914
          %v1390 = vpop.f32.mrf.mxu0
          %v1391 = vadd.f32 %v452, %v1390
          %v1392 = vpop.f32.mrf.mxu0
          %v1393 = vadd.f32 %v452, %v1392
          %1394 = vmatmul.bf16.gmra.mxu0 %v918
          %v1395 = vpop.f32.mrf.mxu0
          %v1396 = vadd.f32 %v452, %v1395
          %v1397 = vpop.f32.mrf.mxu0
          %v1398 = vadd.f32 %v452, %v1397
          %1399 = vmatmul.bf16.gmra.mxu0 %v922
          %v1400 = vpop.f32.mrf.mxu0
          %v1401 = vadd.f32 %v452, %v1400
          %v1402 = vpop.f32.mrf.mxu0
          %v1403 = vadd.f32 %v452, %v1402
          %1404 = vmatmul.bf16.gmra.mxu0 %v926
          %v1405 = vpop.f32.mrf.mxu0
          %v1406 = vadd.f32 %v452, %v1405
          %v1407 = vpop.f32.mrf.mxu0
          %v1408 = vadd.f32 %v452, %v1407
          %1409 = vmatmul.bf16.gmra.mxu0 %v930
          %v1410 = vpop.f32.mrf.mxu0
          %v1411 = vadd.f32 %v452, %v1410
          %v1412 = vpop.f32.mrf.mxu0
          %v1413 = vadd.f32 %v452, %v1412
          %1414 = vmatmul.bf16.gmra.mxu0 %v934
          %v1415 = vpop.f32.mrf.mxu0
          %v1416 = vadd.f32 %v452, %v1415
          %v1417 = vpop.f32.mrf.mxu0
          %v1418 = vadd.f32 %v452, %v1417
          %1419 = vmatmul.bf16.gmra.mxu0 %v938
          %v1420 = vpop.f32.mrf.mxu0
          %v1421 = vadd.f32 %v452, %v1420
          %v1422 = vpop.f32.mrf.mxu0
          %v1423 = vadd.f32 %v452, %v1422
          %1424 = vmatmul.bf16.gmra.mxu0 %v942
          %v1425 = vpop.f32.mrf.mxu0
          %v1426 = vadd.f32 %v452, %v1425
          %v1427 = vpop.f32.mrf.mxu0
          %v1428 = vadd.f32 %v452, %v1427
          %1429 = vmatmul.bf16.gmra.mxu0 %v946
          %v1430 = vpop.f32.mrf.mxu0
          %v1431 = vadd.f32 %v452, %v1430
          %v1432 = vpop.f32.mrf.mxu0
          %v1433 = vadd.f32 %v452, %v1432
          %1434 = vmatmul.bf16.gmra.mxu0 %v950
          %v1435 = vpop.f32.mrf.mxu0
          %v1436 = vadd.f32 %v452, %v1435
          %v1437 = vpop.f32.mrf.mxu0
          %v1438 = vadd.f32 %v452, %v1437
          %1439 = vmatmul.bf16.gmra.mxu0 %v954
          %v1440 = vpop.f32.mrf.mxu0
          %v1441 = vadd.f32 %v452, %v1440
          %v1442 = vpop.f32.mrf.mxu0
          %v1443 = vadd.f32 %v452, %v1442
          %1444 = vmatmul.bf16.gmra.mxu0 %v958
          %v1445 = vpop.f32.mrf.mxu0
          %v1446 = vadd.f32 %v452, %v1445
          %v1447 = vpop.f32.mrf.mxu0
          %v1448 = vadd.f32 %v452, %v1447
          %1449 = vmatmul.bf16.gmra.mxu0 %v962
          %v1450 = vpop.f32.mrf.mxu0
          %v1451 = vadd.f32 %v452, %v1450
          %v1452 = vpop.f32.mrf.mxu0
          %v1453 = vadd.f32 %v452, %v1452
          %1454 = vdwg.mxu0
          %1455 = vmatpush.bf16.msra.mxu0 %v1237
          %1456 = vmatpush.bf16.msra.mxu0 %v1236
          %1457 = vmatpush.bf16.msra.mxu0 %v1235
          %1458 = vmatpush.bf16.msra.mxu0 %v1234
          %1459 = vmatpush.bf16.msra.mxu0 %v1233
          %1460 = vmatpush.bf16.msra.mxu0 %v1232
          %1461 = vmatpush.bf16.msra.mxu0 %v1231
          %1462 = vmatpush.bf16.msra.mxu0 %v1230
          %1463 = vmatmul.bf16.gmra.mxu0 %v839
          %v1464 = vpop.f32.mrf.mxu0
          %v1465 = vadd.f32 %v1296, %v1464
          %v1466 = vpop.f32.mrf.mxu0
          %v1467 = vadd.f32 %v1298, %v1466
          %1468 = vmatmul.bf16.gmra.mxu0 %v843
          %v1469 = vpop.f32.mrf.mxu0
          %v1470 = vadd.f32 %v1301, %v1469
          %v1471 = vpop.f32.mrf.mxu0
          %v1472 = vadd.f32 %v1303, %v1471
          %1473 = vmatmul.bf16.gmra.mxu0 %v847
          %v1474 = vpop.f32.mrf.mxu0
          %v1475 = vadd.f32 %v1306, %v1474
          %v1476 = vpop.f32.mrf.mxu0
          %v1477 = vadd.f32 %v1308, %v1476
          %1478 = vmatmul.bf16.gmra.mxu0 %v851
          %v1479 = vpop.f32.mrf.mxu0
          %v1480 = vadd.f32 %v1311, %v1479
          %v1481 = vpop.f32.mrf.mxu0
          %v1482 = vadd.f32 %v1313, %v1481
          %1483 = vmatmul.bf16.gmra.mxu0 %v855
          %v1484 = vpop.f32.mrf.mxu0
          %v1485 = vadd.f32 %v1316, %v1484
          %v1486 = vpop.f32.mrf.mxu0
          %v1487 = vadd.f32 %v1318, %v1486
          %1488 = vmatmul.bf16.gmra.mxu0 %v859
          %v1489 = vpop.f32.mrf.mxu0
          %v1490 = vadd.f32 %v1321, %v1489
          %v1491 = vpop.f32.mrf.mxu0
          %v1492 = vadd.f32 %v1323, %v1491
          %1493 = vmatmul.bf16.gmra.mxu0 %v863
          %v1494 = vpop.f32.mrf.mxu0
          %v1495 = vadd.f32 %v1326, %v1494
          %v1496 = vpop.f32.mrf.mxu0
          %v1497 = vadd.f32 %v1328, %v1496
          %1498 = vmatmul.bf16.gmra.mxu0 %v867
          %v1499 = vpop.f32.mrf.mxu0
          %v1500 = vadd.f32 %v1331, %v1499
          %v1501 = vpop.f32.mrf.mxu0
          %v1502 = vadd.f32 %v1333, %v1501
          %1503 = vmatmul.bf16.gmra.mxu0 %v871
          %v1504 = vpop.f32.mrf.mxu0
          %v1505 = vadd.f32 %v1336, %v1504
          %v1506 = vpop.f32.mrf.mxu0
          %v1507 = vadd.f32 %v1338, %v1506
          %1508 = vmatmul.bf16.gmra.mxu0 %v875
          %v1509 = vpop.f32.mrf.mxu0
          %v1510 = vadd.f32 %v1341, %v1509
          %v1511 = vpop.f32.mrf.mxu0
          %v1512 = vadd.f32 %v1343, %v1511
          %1513 = vmatmul.bf16.gmra.mxu0 %v879
          %v1514 = vpop.f32.mrf.mxu0
          %v1515 = vadd.f32 %v1346, %v1514
          %v1516 = vpop.f32.mrf.mxu0
          %v1517 = vadd.f32 %v1348, %v1516
          %1518 = vmatmul.bf16.gmra.mxu0 %v883
          %v1519 = vpop.f32.mrf.mxu0
          %v1520 = vadd.f32 %v1351, %v1519
          %v1521 = vpop.f32.mrf.mxu0
          %v1522 = vadd.f32 %v1353, %v1521
          %1523 = vmatmul.bf16.gmra.mxu0 %v887
          %v1524 = vpop.f32.mrf.mxu0
          %v1525 = vadd.f32 %v1356, %v1524
          %v1526 = vpop.f32.mrf.mxu0
          %v1527 = vadd.f32 %v1358, %v1526
          %1528 = vmatmul.bf16.gmra.mxu0 %v891
          %v1529 = vpop.f32.mrf.mxu0
          %v1530 = vadd.f32 %v1361, %v1529
          %v1531 = vpop.f32.mrf.mxu0
          %v1532 = vadd.f32 %v1363, %v1531
          %1533 = vmatmul.bf16.gmra.mxu0 %v895
          %v1534 = vpop.f32.mrf.mxu0
          %v1535 = vadd.f32 %v1366, %v1534
          %v1536 = vpop.f32.mrf.mxu0
          %v1537 = vadd.f32 %v1368, %v1536
          %1538 = vmatmul.bf16.gmra.mxu0 %v899
          %v1539 = vpop.f32.mrf.mxu0
          %v1540 = vadd.f32 %v1371, %v1539
          %v1541 = vpop.f32.mrf.mxu0
          %v1542 = vadd.f32 %v1373, %v1541
          %1543 = vmatmul.bf16.gmra.mxu0 %v903
          %v1544 = vpop.f32.mrf.mxu0
          %v1545 = vadd.f32 %v1376, %v1544
          %v1546 = vpop.f32.mrf.mxu0
          %v1547 = vadd.f32 %v1378, %v1546
          %1548 = vmatmul.bf16.gmra.mxu0 %v907
          %v1549 = vpop.f32.mrf.mxu0
          %v1550 = vadd.f32 %v1381, %v1549
          %v1551 = vpop.f32.mrf.mxu0
          %v1552 = vadd.f32 %v1383, %v1551
          %1553 = vmatmul.bf16.gmra.mxu0 %v911
          %v1554 = vpop.f32.mrf.mxu0
          %v1555 = vadd.f32 %v1386, %v1554
          %v1556 = vpop.f32.mrf.mxu0
          %v1557 = vadd.f32 %v1388, %v1556
          %1558 = vmatmul.bf16.gmra.mxu0 %v915
          %v1559 = vpop.f32.mrf.mxu0
          %v1560 = vadd.f32 %v1391, %v1559
          %v1561 = vpop.f32.mrf.mxu0
          %v1562 = vadd.f32 %v1393, %v1561
          %1563 = vmatmul.bf16.gmra.mxu0 %v919
          %v1564 = vpop.f32.mrf.mxu0
          %v1565 = vadd.f32 %v1396, %v1564
          %v1566 = vpop.f32.mrf.mxu0
          %v1567 = vadd.f32 %v1398, %v1566
          %1568 = vmatmul.bf16.gmra.mxu0 %v923
          %v1569 = vpop.f32.mrf.mxu0
          %v1570 = vadd.f32 %v1401, %v1569
          %v1571 = vpop.f32.mrf.mxu0
          %v1572 = vadd.f32 %v1403, %v1571
          %1573 = vmatmul.bf16.gmra.mxu0 %v927
          %v1574 = vpop.f32.mrf.mxu0
          %v1575 = vadd.f32 %v1406, %v1574
          %v1576 = vpop.f32.mrf.mxu0
          %v1577 = vadd.f32 %v1408, %v1576
          %1578 = vmatmul.bf16.gmra.mxu0 %v931
          %v1579 = vpop.f32.mrf.mxu0
          %v1580 = vadd.f32 %v1411, %v1579
          %v1581 = vpop.f32.mrf.mxu0
          %v1582 = vadd.f32 %v1413, %v1581
          %1583 = vmatmul.bf16.gmra.mxu0 %v935
          %v1584 = vpop.f32.mrf.mxu0
          %v1585 = vadd.f32 %v1416, %v1584
          %v1586 = vpop.f32.mrf.mxu0
          %v1587 = vadd.f32 %v1418, %v1586
          %1588 = vmatmul.bf16.gmra.mxu0 %v939
          %v1589 = vpop.f32.mrf.mxu0
          %v1590 = vadd.f32 %v1421, %v1589
          %v1591 = vpop.f32.mrf.mxu0
          %v1592 = vadd.f32 %v1423, %v1591
          %1593 = vmatmul.bf16.gmra.mxu0 %v943
          %v1594 = vpop.f32.mrf.mxu0
          %v1595 = vadd.f32 %v1426, %v1594
          %v1596 = vpop.f32.mrf.mxu0
          %v1597 = vadd.f32 %v1428, %v1596
          %1598 = vmatmul.bf16.gmra.mxu0 %v947
          %v1599 = vpop.f32.mrf.mxu0
          %v1600 = vadd.f32 %v1431, %v1599
          %v1601 = vpop.f32.mrf.mxu0
          %v1602 = vadd.f32 %v1433, %v1601
          %1603 = vmatmul.bf16.gmra.mxu0 %v951
          %v1604 = vpop.f32.mrf.mxu0
          %v1605 = vadd.f32 %v1436, %v1604
          %v1606 = vpop.f32.mrf.mxu0
          %v1607 = vadd.f32 %v1438, %v1606
          %1608 = vmatmul.bf16.gmra.mxu0 %v955
          %v1609 = vpop.f32.mrf.mxu0
          %v1610 = vadd.f32 %v1441, %v1609
          %v1611 = vpop.f32.mrf.mxu0
          %v1612 = vadd.f32 %v1443, %v1611
          %1613 = vmatmul.bf16.gmra.mxu0 %v959
          %v1614 = vpop.f32.mrf.mxu0
          %v1615 = vadd.f32 %v1446, %v1614
          %v1616 = vpop.f32.mrf.mxu0
          %v1617 = vadd.f32 %v1448, %v1616
          %1618 = vmatmul.bf16.gmra.mxu0 %v963
          %v1619 = vpop.f32.mrf.mxu0
          %v1620 = vadd.f32 %v1451, %v1619
          %v1621 = vpop.f32.mrf.mxu0
          %v1622 = vadd.f32 %v1453, %v1621
          %1623 = vdwg.mxu0
          %1624 = vmatpush.bf16.msra.mxu0 %v1245
          %1625 = vmatpush.bf16.msra.mxu0 %v1244
          %1626 = vmatpush.bf16.msra.mxu0 %v1243
          %1627 = vmatpush.bf16.msra.mxu0 %v1242
          %1628 = vmatpush.bf16.msra.mxu0 %v1241
          %1629 = vmatpush.bf16.msra.mxu0 %v1240
          %1630 = vmatpush.bf16.msra.mxu0 %v1239
          %1631 = vmatpush.bf16.msra.mxu0 %v1238
          %1632 = vmatmul.bf16.gmra.mxu0 %v840
          %v1633 = vpop.f32.mrf.mxu0
          %v1634 = vadd.f32 %v1465, %v1633
          %v1635 = vpop.f32.mrf.mxu0
          %v1636 = vadd.f32 %v1467, %v1635
          %1637 = vmatmul.bf16.gmra.mxu0 %v844
          %v1638 = vpop.f32.mrf.mxu0
          %v1639 = vadd.f32 %v1470, %v1638
          %v1640 = vpop.f32.mrf.mxu0
          %v1641 = vadd.f32 %v1472, %v1640
          %1642 = vmatmul.bf16.gmra.mxu0 %v848
          %v1643 = vpop.f32.mrf.mxu0
          %v1644 = vadd.f32 %v1475, %v1643
          %v1645 = vpop.f32.mrf.mxu0
          %v1646 = vadd.f32 %v1477, %v1645
          %1647 = vmatmul.bf16.gmra.mxu0 %v852
          %v1648 = vpop.f32.mrf.mxu0
          %v1649 = vadd.f32 %v1480, %v1648
          %v1650 = vpop.f32.mrf.mxu0
          %v1651 = vadd.f32 %v1482, %v1650
          %1652 = vmatmul.bf16.gmra.mxu0 %v856
          %v1653 = vpop.f32.mrf.mxu0
          %v1654 = vadd.f32 %v1485, %v1653
          %v1655 = vpop.f32.mrf.mxu0
          %v1656 = vadd.f32 %v1487, %v1655
          %1657 = vmatmul.bf16.gmra.mxu0 %v860
          %v1658 = vpop.f32.mrf.mxu0
          %v1659 = vadd.f32 %v1490, %v1658
          %v1660 = vpop.f32.mrf.mxu0
          %v1661 = vadd.f32 %v1492, %v1660
          %1662 = vmatmul.bf16.gmra.mxu0 %v864
          %v1663 = vpop.f32.mrf.mxu0
          %v1664 = vadd.f32 %v1495, %v1663
          %v1665 = vpop.f32.mrf.mxu0
          %v1666 = vadd.f32 %v1497, %v1665
          %1667 = vmatmul.bf16.gmra.mxu0 %v868
          %v1668 = vpop.f32.mrf.mxu0
          %v1669 = vadd.f32 %v1500, %v1668
          %v1670 = vpop.f32.mrf.mxu0
          %v1671 = vadd.f32 %v1502, %v1670
          %1672 = vmatmul.bf16.gmra.mxu0 %v872
          %v1673 = vpop.f32.mrf.mxu0
          %v1674 = vadd.f32 %v1505, %v1673
          %v1675 = vpop.f32.mrf.mxu0
          %v1676 = vadd.f32 %v1507, %v1675
          %1677 = vmatmul.bf16.gmra.mxu0 %v876
          %v1678 = vpop.f32.mrf.mxu0
          %v1679 = vadd.f32 %v1510, %v1678
          %v1680 = vpop.f32.mrf.mxu0
          %v1681 = vadd.f32 %v1512, %v1680
          %1682 = vmatmul.bf16.gmra.mxu0 %v880
          %v1683 = vpop.f32.mrf.mxu0
          %v1684 = vadd.f32 %v1515, %v1683
          %v1685 = vpop.f32.mrf.mxu0
          %v1686 = vadd.f32 %v1517, %v1685
          %1687 = vmatmul.bf16.gmra.mxu0 %v884
          %v1688 = vpop.f32.mrf.mxu0
          %v1689 = vadd.f32 %v1520, %v1688
          %v1690 = vpop.f32.mrf.mxu0
          %v1691 = vadd.f32 %v1522, %v1690
          %1692 = vmatmul.bf16.gmra.mxu0 %v888
          %v1693 = vpop.f32.mrf.mxu0
          %v1694 = vadd.f32 %v1525, %v1693
          %v1695 = vpop.f32.mrf.mxu0
          %v1696 = vadd.f32 %v1527, %v1695
          %1697 = vmatmul.bf16.gmra.mxu0 %v892
          %v1698 = vpop.f32.mrf.mxu0
          %v1699 = vadd.f32 %v1530, %v1698
          %v1700 = vpop.f32.mrf.mxu0
          %v1701 = vadd.f32 %v1532, %v1700
          %1702 = vmatmul.bf16.gmra.mxu0 %v896
          %v1703 = vpop.f32.mrf.mxu0
          %v1704 = vadd.f32 %v1535, %v1703
          %v1705 = vpop.f32.mrf.mxu0
          %v1706 = vadd.f32 %v1537, %v1705
          %1707 = vmatmul.bf16.gmra.mxu0 %v900
          %v1708 = vpop.f32.mrf.mxu0
          %v1709 = vadd.f32 %v1540, %v1708
          %v1710 = vpop.f32.mrf.mxu0
          %v1711 = vadd.f32 %v1542, %v1710
          %1712 = vmatmul.bf16.gmra.mxu0 %v904
          %v1713 = vpop.f32.mrf.mxu0
          %v1714 = vadd.f32 %v1545, %v1713
          %v1715 = vpop.f32.mrf.mxu0
          %v1716 = vadd.f32 %v1547, %v1715
          %1717 = vmatmul.bf16.gmra.mxu0 %v908
          %v1718 = vpop.f32.mrf.mxu0
          %v1719 = vadd.f32 %v1550, %v1718
          %v1720 = vpop.f32.mrf.mxu0
          %v1721 = vadd.f32 %v1552, %v1720
          %1722 = vmatmul.bf16.gmra.mxu0 %v912
          %v1723 = vpop.f32.mrf.mxu0
          %v1724 = vadd.f32 %v1555, %v1723
          %v1725 = vpop.f32.mrf.mxu0
          %v1726 = vadd.f32 %v1557, %v1725
          %1727 = vmatmul.bf16.gmra.mxu0 %v916
          %v1728 = vpop.f32.mrf.mxu0
          %v1729 = vadd.f32 %v1560, %v1728
          %v1730 = vpop.f32.mrf.mxu0
          %v1731 = vadd.f32 %v1562, %v1730
          %1732 = vmatmul.bf16.gmra.mxu0 %v920
          %v1733 = vpop.f32.mrf.mxu0
          %v1734 = vadd.f32 %v1565, %v1733
          %v1735 = vpop.f32.mrf.mxu0
          %v1736 = vadd.f32 %v1567, %v1735
          %1737 = vmatmul.bf16.gmra.mxu0 %v924
          %v1738 = vpop.f32.mrf.mxu0
          %v1739 = vadd.f32 %v1570, %v1738
          %v1740 = vpop.f32.mrf.mxu0
          %v1741 = vadd.f32 %v1572, %v1740
          %1742 = vmatmul.bf16.gmra.mxu0 %v928
          %v1743 = vpop.f32.mrf.mxu0
          %v1744 = vadd.f32 %v1575, %v1743
          %v1745 = vpop.f32.mrf.mxu0
          %v1746 = vadd.f32 %v1577, %v1745
          %1747 = vmatmul.bf16.gmra.mxu0 %v932
          %v1748 = vpop.f32.mrf.mxu0
          %v1749 = vadd.f32 %v1580, %v1748
          %v1750 = vpop.f32.mrf.mxu0
          %v1751 = vadd.f32 %v1582, %v1750
          %1752 = vmatmul.bf16.gmra.mxu0 %v936
          %v1753 = vpop.f32.mrf.mxu0
          %v1754 = vadd.f32 %v1585, %v1753
          %v1755 = vpop.f32.mrf.mxu0
          %v1756 = vadd.f32 %v1587, %v1755
          %1757 = vmatmul.bf16.gmra.mxu0 %v940
          %v1758 = vpop.f32.mrf.mxu0
          %v1759 = vadd.f32 %v1590, %v1758
          %v1760 = vpop.f32.mrf.mxu0
          %v1761 = vadd.f32 %v1592, %v1760
          %1762 = vmatmul.bf16.gmra.mxu0 %v944
          %v1763 = vpop.f32.mrf.mxu0
          %v1764 = vadd.f32 %v1595, %v1763
          %v1765 = vpop.f32.mrf.mxu0
          %v1766 = vadd.f32 %v1597, %v1765
          %1767 = vmatmul.bf16.gmra.mxu0 %v948
          %v1768 = vpop.f32.mrf.mxu0
          %v1769 = vadd.f32 %v1600, %v1768
          %v1770 = vpop.f32.mrf.mxu0
          %v1771 = vadd.f32 %v1602, %v1770
          %1772 = vmatmul.bf16.gmra.mxu0 %v952
          %v1773 = vpop.f32.mrf.mxu0
          %v1774 = vadd.f32 %v1605, %v1773
          %v1775 = vpop.f32.mrf.mxu0
          %v1776 = vadd.f32 %v1607, %v1775
          %1777 = vmatmul.bf16.gmra.mxu0 %v956
          %v1778 = vpop.f32.mrf.mxu0
          %v1779 = vadd.f32 %v1610, %v1778
          %v1780 = vpop.f32.mrf.mxu0
          %v1781 = vadd.f32 %v1612, %v1780
          %1782 = vmatmul.bf16.gmra.mxu0 %v960
          %v1783 = vpop.f32.mrf.mxu0
          %v1784 = vadd.f32 %v1615, %v1783
          %v1785 = vpop.f32.mrf.mxu0
          %v1786 = vadd.f32 %v1617, %v1785
          %1787 = vmatmul.bf16.gmra.mxu0 %v964
          %v1788 = vpop.f32.mrf.mxu0
          %v1789 = vadd.f32 %v1620, %v1788
          %v1790 = vpop.f32.mrf.mxu0
          %v1791 = vadd.f32 %v1622, %v1790
          %1792 = vdwg.mxu0
          %1793 = vmatpush.bf16.msra.mxu0 %v1253
          %1794 = vmatpush.bf16.msra.mxu0 %v1252
          %1795 = vmatpush.bf16.msra.mxu0 %v1251
          %1796 = vmatpush.bf16.msra.mxu0 %v1250
          %1797 = vmatpush.bf16.msra.mxu0 %v1249
          %1798 = vmatpush.bf16.msra.mxu0 %v1248
          %1799 = vmatpush.bf16.msra.mxu0 %v1247
          %1800 = vmatpush.bf16.msra.mxu0 %v1246
          %1801 = vmatmul.bf16.gmra.mxu0 %v841
          %v1802 = vpop.f32.mrf.mxu0
          %v1803 = vadd.f32 %v1634, %v1802
          %v1804 = vpop.f32.mrf.mxu0
          %v1805 = vadd.f32 %v1636, %v1804
          %1806 = vmatmul.bf16.gmra.mxu0 %v845
          %v1807 = vpop.f32.mrf.mxu0
          %v1808 = vadd.f32 %v1639, %v1807
          %v1809 = vpop.f32.mrf.mxu0
          %v1810 = vadd.f32 %v1641, %v1809
          %1811 = vmatmul.bf16.gmra.mxu0 %v849
          %v1812 = vpop.f32.mrf.mxu0
          %v1813 = vadd.f32 %v1644, %v1812
          %v1814 = vpop.f32.mrf.mxu0
          %v1815 = vadd.f32 %v1646, %v1814
          %1816 = vmatmul.bf16.gmra.mxu0 %v853
          %v1817 = vpop.f32.mrf.mxu0
          %v1818 = vadd.f32 %v1649, %v1817
          %v1819 = vpop.f32.mrf.mxu0
          %v1820 = vadd.f32 %v1651, %v1819
          %1821 = vmatmul.bf16.gmra.mxu0 %v857
          %v1822 = vpop.f32.mrf.mxu0
          %v1823 = vadd.f32 %v1654, %v1822
          %v1824 = vpop.f32.mrf.mxu0
          %v1825 = vadd.f32 %v1656, %v1824
          %1826 = vmatmul.bf16.gmra.mxu0 %v861
          %v1827 = vpop.f32.mrf.mxu0
          %v1828 = vadd.f32 %v1659, %v1827
          %v1829 = vpop.f32.mrf.mxu0
          %v1830 = vadd.f32 %v1661, %v1829
          %1831 = vmatmul.bf16.gmra.mxu0 %v865
          %v1832 = vpop.f32.mrf.mxu0
          %v1833 = vadd.f32 %v1664, %v1832
          %v1834 = vpop.f32.mrf.mxu0
          %v1835 = vadd.f32 %v1666, %v1834
          %1836 = vmatmul.bf16.gmra.mxu0 %v869
          %v1837 = vpop.f32.mrf.mxu0
          %v1838 = vadd.f32 %v1669, %v1837
          %v1839 = vpop.f32.mrf.mxu0
          %v1840 = vadd.f32 %v1671, %v1839
          %1841 = vmatmul.bf16.gmra.mxu0 %v873
          %v1842 = vpop.f32.mrf.mxu0
          %v1843 = vadd.f32 %v1674, %v1842
          %v1844 = vpop.f32.mrf.mxu0
          %v1845 = vadd.f32 %v1676, %v1844
          %1846 = vmatmul.bf16.gmra.mxu0 %v877
          %v1847 = vpop.f32.mrf.mxu0
          %v1848 = vadd.f32 %v1679, %v1847
          %v1849 = vpop.f32.mrf.mxu0
          %v1850 = vadd.f32 %v1681, %v1849
          %1851 = vmatmul.bf16.gmra.mxu0 %v881
          %v1852 = vpop.f32.mrf.mxu0
          %v1853 = vadd.f32 %v1684, %v1852
          %v1854 = vpop.f32.mrf.mxu0
          %v1855 = vadd.f32 %v1686, %v1854
          %1856 = vmatmul.bf16.gmra.mxu0 %v885
          %v1857 = vpop.f32.mrf.mxu0
          %v1858 = vadd.f32 %v1689, %v1857
          %v1859 = vpop.f32.mrf.mxu0
          %v1860 = vadd.f32 %v1691, %v1859
          %1861 = vmatmul.bf16.gmra.mxu0 %v889
          %v1862 = vpop.f32.mrf.mxu0
          %v1863 = vadd.f32 %v1694, %v1862
          %v1864 = vpop.f32.mrf.mxu0
          %v1865 = vadd.f32 %v1696, %v1864
          %1866 = vmatmul.bf16.gmra.mxu0 %v893
          %v1867 = vpop.f32.mrf.mxu0
          %v1868 = vadd.f32 %v1699, %v1867
          %v1869 = vpop.f32.mrf.mxu0
          %v1870 = vadd.f32 %v1701, %v1869
          %1871 = vmatmul.bf16.gmra.mxu0 %v897
          %v1872 = vpop.f32.mrf.mxu0
          %v1873 = vadd.f32 %v1704, %v1872
          %v1874 = vpop.f32.mrf.mxu0
          %v1875 = vadd.f32 %v1706, %v1874
          %1876 = vmatmul.bf16.gmra.mxu0 %v901
          %v1877 = vpop.f32.mrf.mxu0
          %v1878 = vadd.f32 %v1709, %v1877
          %v1879 = vpop.f32.mrf.mxu0
          %v1880 = vadd.f32 %v1711, %v1879
          %1881 = vmatmul.bf16.gmra.mxu0 %v905
          %v1882 = vpop.f32.mrf.mxu0
          %v1883 = vadd.f32 %v1714, %v1882
          %v1884 = vpop.f32.mrf.mxu0
          %v1885 = vadd.f32 %v1716, %v1884
          %1886 = vmatmul.bf16.gmra.mxu0 %v909
          %v1887 = vpop.f32.mrf.mxu0
          %v1888 = vadd.f32 %v1719, %v1887
          %v1889 = vpop.f32.mrf.mxu0
          %v1890 = vadd.f32 %v1721, %v1889
          %1891 = vmatmul.bf16.gmra.mxu0 %v913
          %v1892 = vpop.f32.mrf.mxu0
          %v1893 = vadd.f32 %v1724, %v1892
          %v1894 = vpop.f32.mrf.mxu0
          %v1895 = vadd.f32 %v1726, %v1894
          %1896 = vmatmul.bf16.gmra.mxu0 %v917
          %v1897 = vpop.f32.mrf.mxu0
          %v1898 = vadd.f32 %v1729, %v1897
          %v1899 = vpop.f32.mrf.mxu0
          %v1900 = vadd.f32 %v1731, %v1899
          %1901 = vmatmul.bf16.gmra.mxu0 %v921
          %v1902 = vpop.f32.mrf.mxu0
          %v1903 = vadd.f32 %v1734, %v1902
          %v1904 = vpop.f32.mrf.mxu0
          %v1905 = vadd.f32 %v1736, %v1904
          %1906 = vmatmul.bf16.gmra.mxu0 %v925
          %v1907 = vpop.f32.mrf.mxu0
          %v1908 = vadd.f32 %v1739, %v1907
          %v1909 = vpop.f32.mrf.mxu0
          %v1910 = vadd.f32 %v1741, %v1909
          %1911 = vmatmul.bf16.gmra.mxu0 %v929
          %v1912 = vpop.f32.mrf.mxu0
          %v1913 = vadd.f32 %v1744, %v1912
          %v1914 = vpop.f32.mrf.mxu0
          %v1915 = vadd.f32 %v1746, %v1914
          %1916 = vmatmul.bf16.gmra.mxu0 %v933
          %v1917 = vpop.f32.mrf.mxu0
          %v1918 = vadd.f32 %v1749, %v1917
          %v1919 = vpop.f32.mrf.mxu0
          %v1920 = vadd.f32 %v1751, %v1919
          %1921 = vmatmul.bf16.gmra.mxu0 %v937
          %v1922 = vpop.f32.mrf.mxu0
          %v1923 = vadd.f32 %v1754, %v1922
          %v1924 = vpop.f32.mrf.mxu0
          %v1925 = vadd.f32 %v1756, %v1924
          %1926 = vmatmul.bf16.gmra.mxu0 %v941
          %v1927 = vpop.f32.mrf.mxu0
          %v1928 = vadd.f32 %v1759, %v1927
          %v1929 = vpop.f32.mrf.mxu0
          %v1930 = vadd.f32 %v1761, %v1929
          %1931 = vmatmul.bf16.gmra.mxu0 %v945
          %v1932 = vpop.f32.mrf.mxu0
          %v1933 = vadd.f32 %v1764, %v1932
          %v1934 = vpop.f32.mrf.mxu0
          %v1935 = vadd.f32 %v1766, %v1934
          %1936 = vmatmul.bf16.gmra.mxu0 %v949
          %v1937 = vpop.f32.mrf.mxu0
          %v1938 = vadd.f32 %v1769, %v1937
          %v1939 = vpop.f32.mrf.mxu0
          %v1940 = vadd.f32 %v1771, %v1939
          %1941 = vmatmul.bf16.gmra.mxu0 %v953
          %v1942 = vpop.f32.mrf.mxu0
          %v1943 = vadd.f32 %v1774, %v1942
          %v1944 = vpop.f32.mrf.mxu0
          %v1945 = vadd.f32 %v1776, %v1944
          %1946 = vmatmul.bf16.gmra.mxu0 %v957
          %v1947 = vpop.f32.mrf.mxu0
          %v1948 = vadd.f32 %v1779, %v1947
          %v1949 = vpop.f32.mrf.mxu0
          %v1950 = vadd.f32 %v1781, %v1949
          %1951 = vmatmul.bf16.gmra.mxu0 %v961
          %v1952 = vpop.f32.mrf.mxu0
          %v1953 = vadd.f32 %v1784, %v1952
          %v1954 = vpop.f32.mrf.mxu0
          %v1955 = vadd.f32 %v1786, %v1954
          %1956 = vmatmul.bf16.gmra.mxu0 %v965
          %v1957 = vpop.f32.mrf.mxu0
          %v1958 = vadd.f32 %v1789, %v1957
          %v1959 = vpop.f32.mrf.mxu0
          %v1960 = vadd.f32 %v1791, %v1959
          %1961 = vdwg.mxu0
          %v1962 = vmax.f32 %v1803, 0.0
          %v1963 = vmax.f32 %v1805, 0.0
          %v1964 = vmax.f32 %v1808, 0.0
          %v1965 = vmax.f32 %v1810, 0.0
          %v1966 = vmax.f32 %v1813, 0.0
          %v1967 = vmax.f32 %v1815, 0.0
          %v1968 = vmax.f32 %v1818, 0.0
          %v1969 = vmax.f32 %v1820, 0.0
          %v1970 = vmax.f32 %v1823, 0.0
          %v1971 = vmax.f32 %v1825, 0.0
          %v1972 = vmax.f32 %v1828, 0.0
          %v1973 = vmax.f32 %v1830, 0.0
          %v1974 = vmax.f32 %v1833, 0.0
          %v1975 = vmax.f32 %v1835, 0.0
          %v1976 = vmax.f32 %v1838, 0.0
          %v1977 = vmax.f32 %v1840, 0.0
          %v1978 = vmax.f32 %v1843, 0.0
          %v1979 = vmax.f32 %v1845, 0.0
          %v1980 = vmax.f32 %v1848, 0.0
          %v1981 = vmax.f32 %v1850, 0.0
          %v1982 = vmax.f32 %v1853, 0.0
          %v1983 = vmax.f32 %v1855, 0.0
          %v1984 = vmax.f32 %v1858, 0.0
          %v1985 = vmax.f32 %v1860, 0.0
          %v1986 = vmax.f32 %v1863, 0.0
          %v1987 = vmax.f32 %v1865, 0.0
          %v1988 = vmax.f32 %v1868, 0.0
          %v1989 = vmax.f32 %v1870, 0.0
          %v1990 = vmax.f32 %v1873, 0.0
          %v1991 = vmax.f32 %v1875, 0.0
          %v1992 = vmax.f32 %v1878, 0.0
          %v1993 = vmax.f32 %v1880, 0.0
          %v1994 = vmax.f32 %v1883, 0.0
          %v1995 = vmax.f32 %v1885, 0.0
          %v1996 = vmax.f32 %v1888, 0.0
          %v1997 = vmax.f32 %v1890, 0.0
          %v1998 = vmax.f32 %v1893, 0.0
          %v1999 = vmax.f32 %v1895, 0.0
          %v2000 = vmax.f32 %v1898, 0.0
          %v2001 = vmax.f32 %v1900, 0.0
          %v2002 = vmax.f32 %v1903, 0.0
          %v2003 = vmax.f32 %v1905, 0.0
          %v2004 = vmax.f32 %v1908, 0.0
          %v2005 = vmax.f32 %v1910, 0.0
          %v2006 = vmax.f32 %v1913, 0.0
          %v2007 = vmax.f32 %v1915, 0.0
          %v2008 = vmax.f32 %v1918, 0.0
          %v2009 = vmax.f32 %v1920, 0.0
          %v2010 = vmax.f32 %v1923, 0.0
          %v2011 = vmax.f32 %v1925, 0.0
          %v2012 = vmax.f32 %v1928, 0.0
          %v2013 = vmax.f32 %v1930, 0.0
          %v2014 = vmax.f32 %v1933, 0.0
          %v2015 = vmax.f32 %v1935, 0.0
          %v2016 = vmax.f32 %v1938, 0.0
          %v2017 = vmax.f32 %v1940, 0.0
          %v2018 = vmax.f32 %v1943, 0.0
          %v2019 = vmax.f32 %v1945, 0.0
          %v2020 = vmax.f32 %v1948, 0.0
          %v2021 = vmax.f32 %v1950, 0.0
          %v2022 = vmax.f32 %v1953, 0.0
          %v2023 = vmax.f32 %v1955, 0.0
          %v2024 = vmax.f32 %v1958, 0.0
          %v2025 = vmax.f32 %v1960, 0.0
          %v2026 = vpack.c.bf16 %v1963, %v1962
          %v2027 = vpack.c.bf16 %v1965, %v1964
          %v2028 = vpack.c.bf16 %v1967, %v1966
          %v2029 = vpack.c.bf16 %v1969, %v1968
          %v2030 = vpack.c.bf16 %v1971, %v1970
          %v2031 = vpack.c.bf16 %v1973, %v1972
          %v2032 = vpack.c.bf16 %v1975, %v1974
          %v2033 = vpack.c.bf16 %v1977, %v1976
          %v2034 = vpack.c.bf16 %v1979, %v1978
          %v2035 = vpack.c.bf16 %v1981, %v1980
          %v2036 = vpack.c.bf16 %v1983, %v1982
          %v2037 = vpack.c.bf16 %v1985, %v1984
          %v2038 = vpack.c.bf16 %v1987, %v1986
          %v2039 = vpack.c.bf16 %v1989, %v1988
          %v2040 = vpack.c.bf16 %v1991, %v1990
          %v2041 = vpack.c.bf16 %v1993, %v1992
          %v2042 = vpack.c.bf16 %v1995, %v1994
          %v2043 = vpack.c.bf16 %v1997, %v1996
          %v2044 = vpack.c.bf16 %v1999, %v1998
          %v2045 = vpack.c.bf16 %v2001, %v2000
          %v2046 = vpack.c.bf16 %v2003, %v2002
          %v2047 = vpack.c.bf16 %v2005, %v2004
          %v2048 = vpack.c.bf16 %v2007, %v2006
          %v2049 = vpack.c.bf16 %v2009, %v2008
          %v2050 = vpack.c.bf16 %v2011, %v2010
          %v2051 = vpack.c.bf16 %v2013, %v2012
          %v2052 = vpack.c.bf16 %v2015, %v2014
          %v2053 = vpack.c.bf16 %v2017, %v2016
          %v2054 = vpack.c.bf16 %v2019, %v2018
          %v2055 = vpack.c.bf16 %v2021, %v2020
          %v2056 = vpack.c.bf16 %v2023, %v2022
          %v2057 = vpack.c.bf16 %v2025, %v2024
          %v2058 = vld [vmem:[#allocation8] sm:$0xf]
          %v2059 = vld [vmem:[#allocation8 + $0x4] sm:$0xf]
          %v2060 = vld [vmem:[#allocation8 + $0x8] sm:$0xf]
          %v2061 = vld [vmem:[#allocation8 + $0xc] sm:$0xf]
          %v2062 = vld [vmem:[#allocation8 + $0x10] sm:$0xf]
          %v2063 = vld [vmem:[#allocation8 + $0x14] sm:$0xf]
          %v2064 = vld [vmem:[#allocation8 + $0x18] sm:$0xf]
          %v2065 = vld [vmem:[#allocation8 + $0x1c] sm:$0xf]
          %v2066 = vld [vmem:[#allocation8 + $0x20] sm:$0xf]
          %v2067 = vld [vmem:[#allocation8 + $0x24] sm:$0xf]
          %v2068 = vld [vmem:[#allocation8 + $0x28] sm:$0xf]
          %v2069 = vld [vmem:[#allocation8 + $0x2c] sm:$0xf]
          %v2070 = vld [vmem:[#allocation8 + $0x30] sm:$0xf]
          %v2071 = vld [vmem:[#allocation8 + $0x34] sm:$0xf]
          %v2072 = vld [vmem:[#allocation8 + $0x38] sm:$0xf]
          %v2073 = vld [vmem:[#allocation8 + $0x3c] sm:$0xf]
          %v2090 = vunpack.c.l.b16 %v2058
          %v2091 = vunpack.c.l.b16 %v2059
          %v2092 = vunpack.c.l.b16 %v2060
          %v2093 = vunpack.c.l.b16 %v2061
          %v2094 = vunpack.c.l.b16 %v2062
          %v2095 = vunpack.c.l.b16 %v2063
          %v2096 = vunpack.c.l.b16 %v2064
          %v2097 = vunpack.c.l.b16 %v2065
          %v2098 = vunpack.c.l.b16 %v2066
          %v2099 = vunpack.c.l.b16 %v2067
          %v2100 = vunpack.c.l.b16 %v2068
          %v2101 = vunpack.c.l.b16 %v2069
          %v2102 = vunpack.c.l.b16 %v2070
          %v2103 = vunpack.c.l.b16 %v2071
          %v2104 = vunpack.c.l.b16 %v2072
          %v2105 = vunpack.c.l.b16 %v2073
          %v2106 = vpack.c.b16 %v2091, %v2090
          %v2107 = vpack.c.b16 %v2093, %v2092
          %v2108 = vpack.c.b16 %v2095, %v2094
          %v2109 = vpack.c.b16 %v2097, %v2096
          %v2110 = vpack.c.b16 %v2099, %v2098
          %v2111 = vpack.c.b16 %v2101, %v2100
          %v2112 = vpack.c.b16 %v2103, %v2102
          %v2113 = vpack.c.b16 %v2105, %v2104
          %2122 = vmatpush.bf16.msra.mxu0 %v2113
          %2123 = vmatpush.bf16.msra.mxu0 %v2112
          %2124 = vmatpush.bf16.msra.mxu0 %v2111
          %2125 = vmatpush.bf16.msra.mxu0 %v2110
          %2126 = vmatpush.bf16.msra.mxu0 %v2109
          %2127 = vmatpush.bf16.msra.mxu0 %v2108
          %2128 = vmatpush.bf16.msra.mxu0 %v2107
          %2129 = vmatpush.bf16.msra.mxu0 %v2106
          %2130 = vmatmul.bf16.gmra.mxu0 %v2026
          %v2131 = vpop.f32.mrf.mxu0
          %v2132 = vadd.f32 0.0, %v2131
          %v2133 = vpop.f32.mrf.mxu0
          %v2134 = vadd.f32 0.0, %v2133
          %2135 = vmatmul.bf16.gmra.mxu0 %v2027
          %v2136 = vpop.f32.mrf.mxu0
          %v2137 = vadd.f32 0.0, %v2136
          %v2138 = vpop.f32.mrf.mxu0
          %v2139 = vadd.f32 0.0, %v2138
          %2140 = vmatmul.bf16.gmra.mxu0 %v2028
          %v2141 = vpop.f32.mrf.mxu0
          %v2142 = vadd.f32 0.0, %v2141
          %v2143 = vpop.f32.mrf.mxu0
          %v2144 = vadd.f32 0.0, %v2143
          %2145 = vmatmul.bf16.gmra.mxu0 %v2029
          %v2146 = vpop.f32.mrf.mxu0
          %v2147 = vadd.f32 0.0, %v2146
          %v2148 = vpop.f32.mrf.mxu0
          %v2149 = vadd.f32 0.0, %v2148
          %2150 = vmatmul.bf16.gmra.mxu0 %v2030
          %v2151 = vpop.f32.mrf.mxu0
          %v2152 = vadd.f32 0.0, %v2151
          %v2153 = vpop.f32.mrf.mxu0
          %v2154 = vadd.f32 0.0, %v2153
          %2155 = vmatmul.bf16.gmra.mxu0 %v2031
          %v2156 = vpop.f32.mrf.mxu0
          %v2157 = vadd.f32 0.0, %v2156
          %v2158 = vpop.f32.mrf.mxu0
          %v2159 = vadd.f32 0.0, %v2158
          %2160 = vmatmul.bf16.gmra.mxu0 %v2032
          %v2161 = vpop.f32.mrf.mxu0
          %v2162 = vadd.f32 0.0, %v2161
          %v2163 = vpop.f32.mrf.mxu0
          %v2164 = vadd.f32 0.0, %v2163
          %2165 = vmatmul.bf16.gmra.mxu0 %v2033
          %v2166 = vpop.f32.mrf.mxu0
          %v2167 = vadd.f32 0.0, %v2166
          %v2168 = vpop.f32.mrf.mxu0
          %v2169 = vadd.f32 0.0, %v2168
          %2170 = vmatmul.bf16.gmra.mxu0 %v2034
          %v2171 = vpop.f32.mrf.mxu0
          %v2172 = vadd.f32 0.0, %v2171
          %v2173 = vpop.f32.mrf.mxu0
          %v2174 = vadd.f32 0.0, %v2173
          %2175 = vmatmul.bf16.gmra.mxu0 %v2035
          %v2176 = vpop.f32.mrf.mxu0
          %v2177 = vadd.f32 0.0, %v2176
          %v2178 = vpop.f32.mrf.mxu0
          %v2179 = vadd.f32 0.0, %v2178
          %2180 = vmatmul.bf16.gmra.mxu0 %v2036
          %v2181 = vpop.f32.mrf.mxu0
          %v2182 = vadd.f32 0.0, %v2181
          %v2183 = vpop.f32.mrf.mxu0
          %v2184 = vadd.f32 0.0, %v2183
          %2185 = vmatmul.bf16.gmra.mxu0 %v2037
          %v2186 = vpop.f32.mrf.mxu0
          %v2187 = vadd.f32 0.0, %v2186
          %v2188 = vpop.f32.mrf.mxu0
          %v2189 = vadd.f32 0.0, %v2188
          %2190 = vmatmul.bf16.gmra.mxu0 %v2038
          %v2191 = vpop.f32.mrf.mxu0
          %v2192 = vadd.f32 0.0, %v2191
          %v2193 = vpop.f32.mrf.mxu0
          %v2194 = vadd.f32 0.0, %v2193
          %2195 = vmatmul.bf16.gmra.mxu0 %v2039
          %v2196 = vpop.f32.mrf.mxu0
          %v2197 = vadd.f32 0.0, %v2196
          %v2198 = vpop.f32.mrf.mxu0
          %v2199 = vadd.f32 0.0, %v2198
          %2200 = vmatmul.bf16.gmra.mxu0 %v2040
          %v2201 = vpop.f32.mrf.mxu0
          %v2202 = vadd.f32 0.0, %v2201
          %v2203 = vpop.f32.mrf.mxu0
          %v2204 = vadd.f32 0.0, %v2203
          %2205 = vmatmul.bf16.gmra.mxu0 %v2041
          %v2206 = vpop.f32.mrf.mxu0
          %v2207 = vadd.f32 0.0, %v2206
          %v2208 = vpop.f32.mrf.mxu0
          %v2209 = vadd.f32 0.0, %v2208
          %2210 = vmatmul.bf16.gmra.mxu0 %v2042
          %v2211 = vpop.f32.mrf.mxu0
          %v2212 = vadd.f32 0.0, %v2211
          %v2213 = vpop.f32.mrf.mxu0
          %v2214 = vadd.f32 0.0, %v2213
          %2215 = vmatmul.bf16.gmra.mxu0 %v2043
          %v2216 = vpop.f32.mrf.mxu0
          %v2217 = vadd.f32 0.0, %v2216
          %v2218 = vpop.f32.mrf.mxu0
          %v2219 = vadd.f32 0.0, %v2218
          %2220 = vmatmul.bf16.gmra.mxu0 %v2044
          %v2221 = vpop.f32.mrf.mxu0
          %v2222 = vadd.f32 0.0, %v2221
          %v2223 = vpop.f32.mrf.mxu0
          %v2224 = vadd.f32 0.0, %v2223
          %2225 = vmatmul.bf16.gmra.mxu0 %v2045
          %v2226 = vpop.f32.mrf.mxu0
          %v2227 = vadd.f32 0.0, %v2226
          %v2228 = vpop.f32.mrf.mxu0
          %v2229 = vadd.f32 0.0, %v2228
          %2230 = vmatmul.bf16.gmra.mxu0 %v2046
          %v2231 = vpop.f32.mrf.mxu0
          %v2232 = vadd.f32 0.0, %v2231
          %v2233 = vpop.f32.mrf.mxu0
          %v2234 = vadd.f32 0.0, %v2233
          %2235 = vmatmul.bf16.gmra.mxu0 %v2047
          %v2236 = vpop.f32.mrf.mxu0
          %v2237 = vadd.f32 0.0, %v2236
          %v2238 = vpop.f32.mrf.mxu0
          %v2239 = vadd.f32 0.0, %v2238
          %2240 = vmatmul.bf16.gmra.mxu0 %v2048
          %v2241 = vpop.f32.mrf.mxu0
          %v2242 = vadd.f32 0.0, %v2241
          %v2243 = vpop.f32.mrf.mxu0
          %v2244 = vadd.f32 0.0, %v2243
          %2245 = vmatmul.bf16.gmra.mxu0 %v2049
          %v2246 = vpop.f32.mrf.mxu0
          %v2247 = vadd.f32 0.0, %v2246
          %v2248 = vpop.f32.mrf.mxu0
          %v2249 = vadd.f32 0.0, %v2248
          %2250 = vmatmul.bf16.gmra.mxu0 %v2050
          %v2251 = vpop.f32.mrf.mxu0
          %v2252 = vadd.f32 0.0, %v2251
          %v2253 = vpop.f32.mrf.mxu0
          %v2254 = vadd.f32 0.0, %v2253
          %2255 = vmatmul.bf16.gmra.mxu0 %v2051
          %v2256 = vpop.f32.mrf.mxu0
          %v2257 = vadd.f32 0.0, %v2256
          %v2258 = vpop.f32.mrf.mxu0
          %v2259 = vadd.f32 0.0, %v2258
          %2260 = vmatmul.bf16.gmra.mxu0 %v2052
          %v2261 = vpop.f32.mrf.mxu0
          %v2262 = vadd.f32 0.0, %v2261
          %v2263 = vpop.f32.mrf.mxu0
          %v2264 = vadd.f32 0.0, %v2263
          %2265 = vmatmul.bf16.gmra.mxu0 %v2053
          %v2266 = vpop.f32.mrf.mxu0
          %v2267 = vadd.f32 0.0, %v2266
          %v2268 = vpop.f32.mrf.mxu0
          %v2269 = vadd.f32 0.0, %v2268
          %2270 = vmatmul.bf16.gmra.mxu0 %v2054
          %v2271 = vpop.f32.mrf.mxu0
          %v2272 = vadd.f32 0.0, %v2271
          %v2273 = vpop.f32.mrf.mxu0
          %v2274 = vadd.f32 0.0, %v2273
          %2275 = vmatmul.bf16.gmra.mxu0 %v2055
          %v2276 = vpop.f32.mrf.mxu0
          %v2277 = vadd.f32 0.0, %v2276
          %v2278 = vpop.f32.mrf.mxu0
          %v2279 = vadd.f32 0.0, %v2278
          %2280 = vmatmul.bf16.gmra.mxu0 %v2056
          %v2281 = vpop.f32.mrf.mxu0
          %v2282 = vadd.f32 0.0, %v2281
          %v2283 = vpop.f32.mrf.mxu0
          %v2284 = vadd.f32 0.0, %v2283
          %2285 = vmatmul.bf16.gmra.mxu0 %v2057
          %v2286 = vpop.f32.mrf.mxu0
          %v2287 = vadd.f32 0.0, %v2286
          %v2288 = vpop.f32.mrf.mxu0
          %v2289 = vadd.f32 0.0, %v2288
          %2290 = vdwg.mxu0
          %v2291 = vpack.c.bf16 %v2132, %v2132
          %v2292 = vpack.c.bf16 %v2134, %v2134
          %v2293 = vpack.c.bf16 %v2137, %v2137
          %v2294 = vpack.c.bf16 %v2139, %v2139
          %v2295 = vpack.c.bf16 %v2142, %v2142
          %v2296 = vpack.c.bf16 %v2144, %v2144
          %v2297 = vpack.c.bf16 %v2147, %v2147
          %v2298 = vpack.c.bf16 %v2149, %v2149
          %v2299 = vpack.c.bf16 %v2152, %v2152
          %v2300 = vpack.c.bf16 %v2154, %v2154
          %v2301 = vpack.c.bf16 %v2157, %v2157
          %v2302 = vpack.c.bf16 %v2159, %v2159
          %v2303 = vpack.c.bf16 %v2162, %v2162
          %v2304 = vpack.c.bf16 %v2164, %v2164
          %v2305 = vpack.c.bf16 %v2167, %v2167
          %v2306 = vpack.c.bf16 %v2169, %v2169
          %v2307 = vpack.c.bf16 %v2172, %v2172
          %v2308 = vpack.c.bf16 %v2174, %v2174
          %v2309 = vpack.c.bf16 %v2177, %v2177
          %v2310 = vpack.c.bf16 %v2179, %v2179
          %v2311 = vpack.c.bf16 %v2182, %v2182
          %v2312 = vpack.c.bf16 %v2184, %v2184
          %v2313 = vpack.c.bf16 %v2187, %v2187
          %v2314 = vpack.c.bf16 %v2189, %v2189
          %v2315 = vpack.c.bf16 %v2192, %v2192
          %v2316 = vpack.c.bf16 %v2194, %v2194
          %v2317 = vpack.c.bf16 %v2197, %v2197
          %v2318 = vpack.c.bf16 %v2199, %v2199
          %v2319 = vpack.c.bf16 %v2202, %v2202
          %v2320 = vpack.c.bf16 %v2204, %v2204
          %v2321 = vpack.c.bf16 %v2207, %v2207
          %v2322 = vpack.c.bf16 %v2209, %v2209
          %v2323 = vpack.c.bf16 %v2212, %v2212
          %v2324 = vpack.c.bf16 %v2214, %v2214
          %v2325 = vpack.c.bf16 %v2217, %v2217
          %v2326 = vpack.c.bf16 %v2219, %v2219
          %v2327 = vpack.c.bf16 %v2222, %v2222
          %v2328 = vpack.c.bf16 %v2224, %v2224
          %v2329 = vpack.c.bf16 %v2227, %v2227
          %v2330 = vpack.c.bf16 %v2229, %v2229
          %v2331 = vpack.c.bf16 %v2232, %v2232
          %v2332 = vpack.c.bf16 %v2234, %v2234
          %v2333 = vpack.c.bf16 %v2237, %v2237
          %v2334 = vpack.c.bf16 %v2239, %v2239
          %v2335 = vpack.c.bf16 %v2242, %v2242
          %v2336 = vpack.c.bf16 %v2244, %v2244
          %v2337 = vpack.c.bf16 %v2247, %v2247
          %v2338 = vpack.c.bf16 %v2249, %v2249
          %v2339 = vpack.c.bf16 %v2252, %v2252
          %v2340 = vpack.c.bf16 %v2254, %v2254
          %v2341 = vpack.c.bf16 %v2257, %v2257
          %v2342 = vpack.c.bf16 %v2259, %v2259
          %v2343 = vpack.c.bf16 %v2262, %v2262
          %v2344 = vpack.c.bf16 %v2264, %v2264
          %v2345 = vpack.c.bf16 %v2267, %v2267
          %v2346 = vpack.c.bf16 %v2269, %v2269
          %v2347 = vpack.c.bf16 %v2272, %v2272
          %v2348 = vpack.c.bf16 %v2274, %v2274
          %v2349 = vpack.c.bf16 %v2277, %v2277
          %v2350 = vpack.c.bf16 %v2279, %v2279
          %v2351 = vpack.c.bf16 %v2282, %v2282
          %v2352 = vpack.c.bf16 %v2284, %v2284
          %v2353 = vpack.c.bf16 %v2287, %v2287
          %v2354 = vpack.c.bf16 %v2289, %v2289
          %2355 = vst [vmem:[#allocation2] sm:$0xf] %v2291
          %2356 = vst [vmem:[#allocation2 + $0x4] sm:$0xf] %v2292
          %2357 = vst [vmem:[#allocation2 + $0x8] sm:$0xf] %v2293
          %2358 = vst [vmem:[#allocation2 + $0xc] sm:$0xf] %v2294
          %2359 = vst [vmem:[#allocation2 + $0x10] sm:$0xf] %v2295
          %2360 = vst [vmem:[#allocation2 + $0x14] sm:$0xf] %v2296
          %2361 = vst [vmem:[#allocation2 + $0x18] sm:$0xf] %v2297
          %2362 = vst [vmem:[#allocation2 + $0x1c] sm:$0xf] %v2298
          %2363 = vst [vmem:[#allocation2 + $0x20] sm:$0xf] %v2299
          %2364 = vst [vmem:[#allocation2 + $0x24] sm:$0xf] %v2300
          %2365 = vst [vmem:[#allocation2 + $0x28] sm:$0xf] %v2301
          %2366 = vst [vmem:[#allocation2 + $0x2c] sm:$0xf] %v2302
          %2367 = vst [vmem:[#allocation2 + $0x30] sm:$0xf] %v2303
          %2368 = vst [vmem:[#allocation2 + $0x34] sm:$0xf] %v2304
          %2369 = vst [vmem:[#allocation2 + $0x38] sm:$0xf] %v2305
          %2370 = vst [vmem:[#allocation2 + $0x3c] sm:$0xf] %v2306
          %2371 = vst [vmem:[#allocation2 + $0x40] sm:$0xf] %v2307
          %2372 = vst [vmem:[#allocation2 + $0x44] sm:$0xf] %v2308
          %2373 = vst [vmem:[#allocation2 + $0x48] sm:$0xf] %v2309
          %2374 = vst [vmem:[#allocation2 + $0x4c] sm:$0xf] %v2310
          %2375 = vst [vmem:[#allocation2 + $0x50] sm:$0xf] %v2311
          %2376 = vst [vmem:[#allocation2 + $0x54] sm:$0xf] %v2312
          %2377 = vst [vmem:[#allocation2 + $0x58] sm:$0xf] %v2313
          %2378 = vst [vmem:[#allocation2 + $0x5c] sm:$0xf] %v2314
          %2379 = vst [vmem:[#allocation2 + $0x60] sm:$0xf] %v2315
          %2380 = vst [vmem:[#allocation2 + $0x64] sm:$0xf] %v2316
          %2381 = vst [vmem:[#allocation2 + $0x68] sm:$0xf] %v2317
          %2382 = vst [vmem:[#allocation2 + $0x6c] sm:$0xf] %v2318
          %2383 = vst [vmem:[#allocation2 + $0x70] sm:$0xf] %v2319
          %2384 = vst [vmem:[#allocation2 + $0x74] sm:$0xf] %v2320
          %2385 = vst [vmem:[#allocation2 + $0x78] sm:$0xf] %v2321
          %2386 = vst [vmem:[#allocation2 + $0x7c] sm:$0xf] %v2322
          %2387 = vst [vmem:[#allocation2 + $0x80] sm:$0xf] %v2323
          %2388 = vst [vmem:[#allocation2 + $0x84] sm:$0xf] %v2324
          %2389 = vst [vmem:[#allocation2 + $0x88] sm:$0xf] %v2325
          %2390 = vst [vmem:[#allocation2 + $0x8c] sm:$0xf] %v2326
          %2391 = vst [vmem:[#allocation2 + $0x90] sm:$0xf] %v2327
          %2392 = vst [vmem:[#allocation2 + $0x94] sm:$0xf] %v2328
          %2393 = vst [vmem:[#allocation2 + $0x98] sm:$0xf] %v2329
          %2394 = vst [vmem:[#allocation2 + $0x9c] sm:$0xf] %v2330
          %2395 = vst [vmem:[#allocation2 + $0xa0] sm:$0xf] %v2331
          %2396 = vst [vmem:[#allocation2 + $0xa4] sm:$0xf] %v2332
          %2397 = vst [vmem:[#allocation2 + $0xa8] sm:$0xf] %v2333
          %2398 = vst [vmem:[#allocation2 + $0xac] sm:$0xf] %v2334
          %2399 = vst [vmem:[#allocation2 + $0xb0] sm:$0xf] %v2335
          %2400 = vst [vmem:[#allocation2 + $0xb4] sm:$0xf] %v2336
          %2401 = vst [vmem:[#allocation2 + $0xb8] sm:$0xf] %v2337
          %2402 = vst [vmem:[#allocation2 + $0xbc] sm:$0xf] %v2338
          %2403 = vst [vmem:[#allocation2 + $0xc0] sm:$0xf] %v2339
          %2404 = vst [vmem:[#allocation2 + $0xc4] sm:$0xf] %v2340
          %2405 = vst [vmem:[#allocation2 + $0xc8] sm:$0xf] %v2341
          %2406 = vst [vmem:[#allocation2 + $0xcc] sm:$0xf] %v2342
          %2407 = vst [vmem:[#allocation2 + $0xd0] sm:$0xf] %v2343
          %2408 = vst [vmem:[#allocation2 + $0xd4] sm:$0xf] %v2344
          %2409 = vst [vmem:[#allocation2 + $0xd8] sm:$0xf] %v2345
          %2410 = vst [vmem:[#allocation2 + $0xdc] sm:$0xf] %v2346
          %2411 = vst [vmem:[#allocation2 + $0xe0] sm:$0xf] %v2347
          %2412 = vst [vmem:[#allocation2 + $0xe4] sm:$0xf] %v2348
          %2413 = vst [vmem:[#allocation2 + $0xe8] sm:$0xf] %v2349
          %2414 = vst [vmem:[#allocation2 + $0xec] sm:$0xf] %v2350
          %2415 = vst [vmem:[#allocation2 + $0xf0] sm:$0xf] %v2351
          %2416 = vst [vmem:[#allocation2 + $0xf4] sm:$0xf] %v2352
          %2417 = vst [vmem:[#allocation2 + $0xf8] sm:$0xf] %v2353
          %2418 = vst [vmem:[#allocation2 + $0xfc] sm:$0xf] %v2354
        $region56: #{tpu_custom_call.1} parent=39 // pred_fallthru
          _
        %s2419 = smul.u32 %s21, 256
        %s2420 = sshra.s32 %s2419, 3
        %s2421 = sand.u32 %s2419, 7
        %s2422 = smul.u32 %s2420, 4
        %s2423 = smul.addr %s2422, 4
        %s2424 = scalar_lea.vmem [#allocation3], %s2423
        %v2425 = vld [vmem:[%s2424] sm:$0xff]
        %v2426 = vld [vmem:[%s2424 + $0x8] sm:$0xff]
        %v2427 = vld [vmem:[%s2424 + $0x10] sm:$0xff]
        %v2428 = vld [vmem:[%s2424 + $0x18] sm:$0xff]
        %v2429 = vld [vmem:[%s2424 + $0x20] sm:$0xff]
        %v2430 = vld [vmem:[%s2424 + $0x28] sm:$0xff]
        %v2431 = vld [vmem:[%s2424 + $0x30] sm:$0xff]
        %v2432 = vld [vmem:[%s2424 + $0x38] sm:$0xff]
        %v2433 = vld [vmem:[%s2424 + $0x40] sm:$0xff]
        %v2434 = vld [vmem:[%s2424 + $0x48] sm:$0xff]
        %v2435 = vld [vmem:[%s2424 + $0x50] sm:$0xff]
        %v2436 = vld [vmem:[%s2424 + $0x58] sm:$0xff]
        %v2437 = vld [vmem:[%s2424 + $0x60] sm:$0xff]
        %v2438 = vld [vmem:[%s2424 + $0x68] sm:$0xff]
        %v2439 = vld [vmem:[%s2424 + $0x70] sm:$0xff]
        %v2440 = vld [vmem:[%s2424 + $0x78] sm:$0xff]
        %v2441 = vld [vmem:[%s2424 + $0x80] sm:$0xff]
        %v2442 = vld [vmem:[%s2424 + $0x88] sm:$0xff]
        %v2443 = vld [vmem:[%s2424 + $0x90] sm:$0xff]
        %v2444 = vld [vmem:[%s2424 + $0x98] sm:$0xff]
        %v2445 = vld [vmem:[%s2424 + $0xa0] sm:$0xff]
        %v2446 = vld [vmem:[%s2424 + $0xa8] sm:$0xff]
        %v2447 = vld [vmem:[%s2424 + $0xb0] sm:$0xff]
        %v2448 = vld [vmem:[%s2424 + $0xb8] sm:$0xff]
        %v2449 = vld [vmem:[%s2424 + $0xc0] sm:$0xff]
        %v2450 = vld [vmem:[%s2424 + $0xc8] sm:$0xff]
        %v2451 = vld [vmem:[%s2424 + $0xd0] sm:$0xff]
        %v2452 = vld [vmem:[%s2424 + $0xd8] sm:$0xff]
        %v2453 = vld [vmem:[%s2424 + $0xe0] sm:$0xff]
        %v2454 = vld [vmem:[%s2424 + $0xe8] sm:$0xff]
        %v2455 = vld [vmem:[%s2424 + $0xf0] sm:$0xff]
        %v2456 = vld [vmem:[%s2424 + $0xf8] sm:$0xff]
        %v2457 = vld [vmem:[%s2424 + $0x100] sm:$0xff]
        %v2458 = vld [vmem:[%s2424 + $0x108] sm:$0xff]
        %v2459 = vld [vmem:[%s2424 + $0x110] sm:$0xff]
        %v2460 = vld [vmem:[%s2424 + $0x118] sm:$0xff]
        %v2461 = vld [vmem:[%s2424 + $0x120] sm:$0xff]
        %v2462 = vld [vmem:[%s2424 + $0x128] sm:$0xff]
        %v2463 = vld [vmem:[%s2424 + $0x130] sm:$0xff]
        %v2464 = vld [vmem:[%s2424 + $0x138] sm:$0xff]
        %v2465 = vld [vmem:[%s2424 + $0x140] sm:$0xff]
        %v2466 = vld [vmem:[%s2424 + $0x148] sm:$0xff]
        %v2467 = vld [vmem:[%s2424 + $0x150] sm:$0xff]
        %v2468 = vld [vmem:[%s2424 + $0x158] sm:$0xff]
        %v2469 = vld [vmem:[%s2424 + $0x160] sm:$0xff]
        %v2470 = vld [vmem:[%s2424 + $0x168] sm:$0xff]
        %v2471 = vld [vmem:[%s2424 + $0x170] sm:$0xff]
        %v2472 = vld [vmem:[%s2424 + $0x178] sm:$0xff]
        %v2473 = vld [vmem:[%s2424 + $0x180] sm:$0xff]
        %v2474 = vld [vmem:[%s2424 + $0x188] sm:$0xff]
        %v2475 = vld [vmem:[%s2424 + $0x190] sm:$0xff]
        %v2476 = vld [vmem:[%s2424 + $0x198] sm:$0xff]
        %v2477 = vld [vmem:[%s2424 + $0x1a0] sm:$0xff]
        %v2478 = vld [vmem:[%s2424 + $0x1a8] sm:$0xff]
        %v2479 = vld [vmem:[%s2424 + $0x1b0] sm:$0xff]
        %v2480 = vld [vmem:[%s2424 + $0x1b8] sm:$0xff]
        %v2481 = vld [vmem:[%s2424 + $0x1c0] sm:$0xff]
        %v2482 = vld [vmem:[%s2424 + $0x1c8] sm:$0xff]
        %v2483 = vld [vmem:[%s2424 + $0x1d0] sm:$0xff]
        %v2484 = vld [vmem:[%s2424 + $0x1d8] sm:$0xff]
        %v2485 = vld [vmem:[%s2424 + $0x1e0] sm:$0xff]
        %v2486 = vld [vmem:[%s2424 + $0x1e8] sm:$0xff]
        %v2487 = vld [vmem:[%s2424 + $0x1f0] sm:$0xff]
        %v2488 = vld [vmem:[%s2424 + $0x1f8] sm:$0xff]
        %v2489 = vld [vmem:[#allocation2] sm:$0xf]
        %v2490 = vld [vmem:[#allocation2 + $0x4] sm:$0xf]
        %v2491 = vld [vmem:[#allocation2 + $0x8] sm:$0xf]
        %v2492 = vld [vmem:[#allocation2 + $0xc] sm:$0xf]
        %v2493 = vld [vmem:[#allocation2 + $0x10] sm:$0xf]
        %v2494 = vld [vmem:[#allocation2 + $0x14] sm:$0xf]
        %v2495 = vld [vmem:[#allocation2 + $0x18] sm:$0xf]
        %v2496 = vld [vmem:[#allocation2 + $0x1c] sm:$0xf]
        %v2497 = vld [vmem:[#allocation2 + $0x20] sm:$0xf]
        %v2498 = vld [vmem:[#allocation2 + $0x24] sm:$0xf]
        %v2499 = vld [vmem:[#allocation2 + $0x28] sm:$0xf]
        %v2500 = vld [vmem:[#allocation2 + $0x2c] sm:$0xf]
        %v2501 = vld [vmem:[#allocation2 + $0x30] sm:$0xf]
        %v2502 = vld [vmem:[#allocation2 + $0x34] sm:$0xf]
        %v2503 = vld [vmem:[#allocation2 + $0x38] sm:$0xf]
        %v2504 = vld [vmem:[#allocation2 + $0x3c] sm:$0xf]
        %v2505 = vld [vmem:[#allocation2 + $0x40] sm:$0xf]
        %v2506 = vld [vmem:[#allocation2 + $0x44] sm:$0xf]
        %v2507 = vld [vmem:[#allocation2 + $0x48] sm:$0xf]
        %v2508 = vld [vmem:[#allocation2 + $0x4c] sm:$0xf]
        %v2509 = vld [vmem:[#allocation2 + $0x50] sm:$0xf]
        %v2510 = vld [vmem:[#allocation2 + $0x54] sm:$0xf]
        %v2511 = vld [vmem:[#allocation2 + $0x58] sm:$0xf]
        %v2512 = vld [vmem:[#allocation2 + $0x5c] sm:$0xf]
        %v2513 = vld [vmem:[#allocation2 + $0x60] sm:$0xf]
        %v2514 = vld [vmem:[#allocation2 + $0x64] sm:$0xf]
        %v2515 = vld [vmem:[#allocation2 + $0x68] sm:$0xf]
        %v2516 = vld [vmem:[#allocation2 + $0x6c] sm:$0xf]
        %v2517 = vld [vmem:[#allocation2 + $0x70] sm:$0xf]
        %v2518 = vld [vmem:[#allocation2 + $0x74] sm:$0xf]
        %v2519 = vld [vmem:[#allocation2 + $0x78] sm:$0xf]
        %v2520 = vld [vmem:[#allocation2 + $0x7c] sm:$0xf]
        %v2521 = vld [vmem:[#allocation2 + $0x80] sm:$0xf]
        %v2522 = vld [vmem:[#allocation2 + $0x84] sm:$0xf]
        %v2523 = vld [vmem:[#allocation2 + $0x88] sm:$0xf]
        %v2524 = vld [vmem:[#allocation2 + $0x8c] sm:$0xf]
        %v2525 = vld [vmem:[#allocation2 + $0x90] sm:$0xf]
        %v2526 = vld [vmem:[#allocation2 + $0x94] sm:$0xf]
        %v2527 = vld [vmem:[#allocation2 + $0x98] sm:$0xf]
        %v2528 = vld [vmem:[#allocation2 + $0x9c] sm:$0xf]
        %v2529 = vld [vmem:[#allocation2 + $0xa0] sm:$0xf]
        %v2530 = vld [vmem:[#allocation2 + $0xa4] sm:$0xf]
        %v2531 = vld [vmem:[#allocation2 + $0xa8] sm:$0xf]
        %v2532 = vld [vmem:[#allocation2 + $0xac] sm:$0xf]
        %v2533 = vld [vmem:[#allocation2 + $0xb0] sm:$0xf]
        %v2534 = vld [vmem:[#allocation2 + $0xb4] sm:$0xf]
        %v2535 = vld [vmem:[#allocation2 + $0xb8] sm:$0xf]
        %v2536 = vld [vmem:[#allocation2 + $0xbc] sm:$0xf]
        %v2537 = vld [vmem:[#allocation2 + $0xc0] sm:$0xf]
        %v2538 = vld [vmem:[#allocation2 + $0xc4] sm:$0xf]
        %v2539 = vld [vmem:[#allocation2 + $0xc8] sm:$0xf]
        %v2540 = vld [vmem:[#allocation2 + $0xcc] sm:$0xf]
        %v2541 = vld [vmem:[#allocation2 + $0xd0] sm:$0xf]
        %v2542 = vld [vmem:[#allocation2 + $0xd4] sm:$0xf]
        %v2543 = vld [vmem:[#allocation2 + $0xd8] sm:$0xf]
        %v2544 = vld [vmem:[#allocation2 + $0xdc] sm:$0xf]
        %v2545 = vld [vmem:[#allocation2 + $0xe0] sm:$0xf]
        %v2546 = vld [vmem:[#allocation2 + $0xe4] sm:$0xf]
        %v2547 = vld [vmem:[#allocation2 + $0xe8] sm:$0xf]
        %v2548 = vld [vmem:[#allocation2 + $0xec] sm:$0xf]
        %v2549 = vld [vmem:[#allocation2 + $0xf0] sm:$0xf]
        %v2550 = vld [vmem:[#allocation2 + $0xf4] sm:$0xf]
        %v2551 = vld [vmem:[#allocation2 + $0xf8] sm:$0xf]
        %v2552 = vld [vmem:[#allocation2 + $0xfc] sm:$0xf]
        %v2553 = vld [vmem:[%s4] sm:$0x1]
        %v2555 = vperm.slane %v2553, 0
        %v2621 = vunpack.c.l.b16 %v2425
        %v2622 = vunpack.c.h.b16 %v2425
        %v2623 = vunpack.c.l.b16 %v2426
        %v2624 = vunpack.c.h.b16 %v2426
        %v2625 = vunpack.c.l.b16 %v2427
        %v2626 = vunpack.c.h.b16 %v2427
        %v2627 = vunpack.c.l.b16 %v2428
        %v2628 = vunpack.c.h.b16 %v2428
        %v2629 = vunpack.c.l.b16 %v2429
        %v2630 = vunpack.c.h.b16 %v2429
        %v2631 = vunpack.c.l.b16 %v2430
        %v2632 = vunpack.c.h.b16 %v2430
        %v2633 = vunpack.c.l.b16 %v2431
        %v2634 = vunpack.c.h.b16 %v2431
        %v2635 = vunpack.c.l.b16 %v2432
        %v2636 = vunpack.c.h.b16 %v2432
        %v2637 = vunpack.c.l.b16 %v2433
        %v2638 = vunpack.c.h.b16 %v2433
        %v2639 = vunpack.c.l.b16 %v2434
        %v2640 = vunpack.c.h.b16 %v2434
        %v2641 = vunpack.c.l.b16 %v2435
        %v2642 = vunpack.c.h.b16 %v2435
        %v2643 = vunpack.c.l.b16 %v2436
        %v2644 = vunpack.c.h.b16 %v2436
        %v2645 = vunpack.c.l.b16 %v2437
        %v2646 = vunpack.c.h.b16 %v2437
        %v2647 = vunpack.c.l.b16 %v2438
        %v2648 = vunpack.c.h.b16 %v2438
        %v2649 = vunpack.c.l.b16 %v2439
        %v2650 = vunpack.c.h.b16 %v2439
        %v2651 = vunpack.c.l.b16 %v2440
        %v2652 = vunpack.c.h.b16 %v2440
        %v2653 = vunpack.c.l.b16 %v2441
        %v2654 = vunpack.c.h.b16 %v2441
        %v2655 = vunpack.c.l.b16 %v2442
        %v2656 = vunpack.c.h.b16 %v2442
        %v2657 = vunpack.c.l.b16 %v2443
        %v2658 = vunpack.c.h.b16 %v2443
        %v2659 = vunpack.c.l.b16 %v2444
        %v2660 = vunpack.c.h.b16 %v2444
        %v2661 = vunpack.c.l.b16 %v2445
        %v2662 = vunpack.c.h.b16 %v2445
        %v2663 = vunpack.c.l.b16 %v2446
        %v2664 = vunpack.c.h.b16 %v2446
        %v2665 = vunpack.c.l.b16 %v2447
        %v2666 = vunpack.c.h.b16 %v2447
        %v2667 = vunpack.c.l.b16 %v2448
        %v2668 = vunpack.c.h.b16 %v2448
        %v2669 = vunpack.c.l.b16 %v2449
        %v2670 = vunpack.c.h.b16 %v2449
        %v2671 = vunpack.c.l.b16 %v2450
        %v2672 = vunpack.c.h.b16 %v2450
        %v2673 = vunpack.c.l.b16 %v2451
        %v2674 = vunpack.c.h.b16 %v2451
        %v2675 = vunpack.c.l.b16 %v2452
        %v2676 = vunpack.c.h.b16 %v2452
        %v2677 = vunpack.c.l.b16 %v2453
        %v2678 = vunpack.c.h.b16 %v2453
        %v2679 = vunpack.c.l.b16 %v2454
        %v2680 = vunpack.c.h.b16 %v2454
        %v2681 = vunpack.c.l.b16 %v2455
        %v2682 = vunpack.c.h.b16 %v2455
        %v2683 = vunpack.c.l.b16 %v2456
        %v2684 = vunpack.c.h.b16 %v2456
        %v2685 = vunpack.c.l.b16 %v2457
        %v2686 = vunpack.c.h.b16 %v2457
        %v2687 = vunpack.c.l.b16 %v2458
        %v2688 = vunpack.c.h.b16 %v2458
        %v2689 = vunpack.c.l.b16 %v2459
        %v2690 = vunpack.c.h.b16 %v2459
        %v2691 = vunpack.c.l.b16 %v2460
        %v2692 = vunpack.c.h.b16 %v2460
        %v2693 = vunpack.c.l.b16 %v2461
        %v2694 = vunpack.c.h.b16 %v2461
        %v2695 = vunpack.c.l.b16 %v2462
        %v2696 = vunpack.c.h.b16 %v2462
        %v2697 = vunpack.c.l.b16 %v2463
        %v2698 = vunpack.c.h.b16 %v2463
        %v2699 = vunpack.c.l.b16 %v2464
        %v2700 = vunpack.c.h.b16 %v2464
        %v2701 = vunpack.c.l.b16 %v2465
        %v2702 = vunpack.c.h.b16 %v2465
        %v2703 = vunpack.c.l.b16 %v2466
        %v2704 = vunpack.c.h.b16 %v2466
        %v2705 = vunpack.c.l.b16 %v2467
        %v2706 = vunpack.c.h.b16 %v2467
        %v2707 = vunpack.c.l.b16 %v2468
        %v2708 = vunpack.c.h.b16 %v2468
        %v2709 = vunpack.c.l.b16 %v2469
        %v2710 = vunpack.c.h.b16 %v2469
        %v2711 = vunpack.c.l.b16 %v2470
        %v2712 = vunpack.c.h.b16 %v2470
        %v2713 = vunpack.c.l.b16 %v2471
        %v2714 = vunpack.c.h.b16 %v2471
        %v2715 = vunpack.c.l.b16 %v2472
        %v2716 = vunpack.c.h.b16 %v2472
        %v2717 = vunpack.c.l.b16 %v2473
        %v2718 = vunpack.c.h.b16 %v2473
        %v2719 = vunpack.c.l.b16 %v2474
        %v2720 = vunpack.c.h.b16 %v2474
        %v2721 = vunpack.c.l.b16 %v2475
        %v2722 = vunpack.c.h.b16 %v2475
        %v2723 = vunpack.c.l.b16 %v2476
        %v2724 = vunpack.c.h.b16 %v2476
        %v2725 = vunpack.c.l.b16 %v2477
        %v2726 = vunpack.c.h.b16 %v2477
        %v2727 = vunpack.c.l.b16 %v2478
        %v2728 = vunpack.c.h.b16 %v2478
        %v2729 = vunpack.c.l.b16 %v2479
        %v2730 = vunpack.c.h.b16 %v2479
        %v2731 = vunpack.c.l.b16 %v2480
        %v2732 = vunpack.c.h.b16 %v2480
        %v2733 = vunpack.c.l.b16 %v2481
        %v2734 = vunpack.c.h.b16 %v2481
        %v2735 = vunpack.c.l.b16 %v2482
        %v2736 = vunpack.c.h.b16 %v2482
        %v2737 = vunpack.c.l.b16 %v2483
        %v2738 = vunpack.c.h.b16 %v2483
        %v2739 = vunpack.c.l.b16 %v2484
        %v2740 = vunpack.c.h.b16 %v2484
        %v2741 = vunpack.c.l.b16 %v2485
        %v2742 = vunpack.c.h.b16 %v2485
        %v2743 = vunpack.c.l.b16 %v2486
        %v2744 = vunpack.c.h.b16 %v2486
        %v2745 = vunpack.c.l.b16 %v2487
        %v2746 = vunpack.c.h.b16 %v2487
        %v2747 = vunpack.c.l.b16 %v2488
        %v2748 = vunpack.c.h.b16 %v2488
        %v2749 = vpack.c.b16 %v2625, %v2621
        %v2750 = vpack.c.b16 %v2626, %v2622
        %v2751 = vpack.c.b16 %v2627, %v2623
        %v2752 = vpack.c.b16 %v2628, %v2624
        %v2753 = vpack.c.b16 %v2633, %v2629
        %v2754 = vpack.c.b16 %v2634, %v2630
        %v2755 = vpack.c.b16 %v2635, %v2631
        %v2756 = vpack.c.b16 %v2636, %v2632
        %v2757 = vpack.c.b16 %v2641, %v2637
        %v2758 = vpack.c.b16 %v2642, %v2638
        %v2759 = vpack.c.b16 %v2643, %v2639
        %v2760 = vpack.c.b16 %v2644, %v2640
        %v2761 = vpack.c.b16 %v2649, %v2645
        %v2762 = vpack.c.b16 %v2650, %v2646
        %v2763 = vpack.c.b16 %v2651, %v2647
        %v2764 = vpack.c.b16 %v2652, %v2648
        %v2765 = vpack.c.b16 %v2657, %v2653
        %v2766 = vpack.c.b16 %v2658, %v2654
        %v2767 = vpack.c.b16 %v2659, %v2655
        %v2768 = vpack.c.b16 %v2660, %v2656
        %v2769 = vpack.c.b16 %v2665, %v2661
        %v2770 = vpack.c.b16 %v2666, %v2662
        %v2771 = vpack.c.b16 %v2667, %v2663
        %v2772 = vpack.c.b16 %v2668, %v2664
        %v2773 = vpack.c.b16 %v2673, %v2669
        %v2774 = vpack.c.b16 %v2674, %v2670
        %v2775 = vpack.c.b16 %v2675, %v2671
        %v2776 = vpack.c.b16 %v2676, %v2672
        %v2777 = vpack.c.b16 %v2681, %v2677
        %v2778 = vpack.c.b16 %v2682, %v2678
        %v2779 = vpack.c.b16 %v2683, %v2679
        %v2780 = vpack.c.b16 %v2684, %v2680
        %v2781 = vpack.c.b16 %v2689, %v2685
        %v2782 = vpack.c.b16 %v2690, %v2686
        %v2783 = vpack.c.b16 %v2691, %v2687
        %v2784 = vpack.c.b16 %v2692, %v2688
        %v2785 = vpack.c.b16 %v2697, %v2693
        %v2786 = vpack.c.b16 %v2698, %v2694
        %v2787 = vpack.c.b16 %v2699, %v2695
        %v2788 = vpack.c.b16 %v2700, %v2696
        %v2789 = vpack.c.b16 %v2705, %v2701
        %v2790 = vpack.c.b16 %v2706, %v2702
        %v2791 = vpack.c.b16 %v2707, %v2703
        %v2792 = vpack.c.b16 %v2708, %v2704
        %v2793 = vpack.c.b16 %v2713, %v2709
        %v2794 = vpack.c.b16 %v2714, %v2710
        %v2795 = vpack.c.b16 %v2715, %v2711
        %v2796 = vpack.c.b16 %v2716, %v2712
        %v2797 = vpack.c.b16 %v2721, %v2717
        %v2798 = vpack.c.b16 %v2722, %v2718
        %v2799 = vpack.c.b16 %v2723, %v2719
        %v2800 = vpack.c.b16 %v2724, %v2720
        %v2801 = vpack.c.b16 %v2729, %v2725
        %v2802 = vpack.c.b16 %v2730, %v2726
        %v2803 = vpack.c.b16 %v2731, %v2727
        %v2804 = vpack.c.b16 %v2732, %v2728
        %v2805 = vpack.c.b16 %v2737, %v2733
        %v2806 = vpack.c.b16 %v2738, %v2734
        %v2807 = vpack.c.b16 %v2739, %v2735
        %v2808 = vpack.c.b16 %v2740, %v2736
        %v2809 = vpack.c.b16 %v2745, %v2741
        %v2810 = vpack.c.b16 %v2746, %v2742
        %v2811 = vpack.c.b16 %v2747, %v2743
        %v2812 = vpack.c.b16 %v2748, %v2744
        %v2941 = vunpack.c.l.b16 %v2489
        %v2942 = vunpack.c.l.b16 %v2490
        %v2943 = vunpack.c.l.b16 %v2491
        %v2944 = vunpack.c.l.b16 %v2492
        %v2945 = vunpack.c.l.b16 %v2493
        %v2946 = vunpack.c.l.b16 %v2494
        %v2947 = vunpack.c.l.b16 %v2495
        %v2948 = vunpack.c.l.b16 %v2496
        %v2949 = vunpack.c.l.b16 %v2497
        %v2950 = vunpack.c.l.b16 %v2498
        %v2951 = vunpack.c.l.b16 %v2499
        %v2952 = vunpack.c.l.b16 %v2500
        %v2953 = vunpack.c.l.b16 %v2501
        %v2954 = vunpack.c.l.b16 %v2502
        %v2955 = vunpack.c.l.b16 %v2503
        %v2956 = vunpack.c.l.b16 %v2504
        %v2957 = vunpack.c.l.b16 %v2505
        %v2958 = vunpack.c.l.b16 %v2506
        %v2959 = vunpack.c.l.b16 %v2507
        %v2960 = vunpack.c.l.b16 %v2508
        %v2961 = vunpack.c.l.b16 %v2509
        %v2962 = vunpack.c.l.b16 %v2510
        %v2963 = vunpack.c.l.b16 %v2511
        %v2964 = vunpack.c.l.b16 %v2512
        %v2965 = vunpack.c.l.b16 %v2513
        %v2966 = vunpack.c.l.b16 %v2514
        %v2967 = vunpack.c.l.b16 %v2515
        %v2968 = vunpack.c.l.b16 %v2516
        %v2969 = vunpack.c.l.b16 %v2517
        %v2970 = vunpack.c.l.b16 %v2518
        %v2971 = vunpack.c.l.b16 %v2519
        %v2972 = vunpack.c.l.b16 %v2520
        %v2973 = vunpack.c.l.b16 %v2521
        %v2974 = vunpack.c.l.b16 %v2522
        %v2975 = vunpack.c.l.b16 %v2523
        %v2976 = vunpack.c.l.b16 %v2524
        %v2977 = vunpack.c.l.b16 %v2525
        %v2978 = vunpack.c.l.b16 %v2526
        %v2979 = vunpack.c.l.b16 %v2527
        %v2980 = vunpack.c.l.b16 %v2528
        %v2981 = vunpack.c.l.b16 %v2529
        %v2982 = vunpack.c.l.b16 %v2530
        %v2983 = vunpack.c.l.b16 %v2531
        %v2984 = vunpack.c.l.b16 %v2532
        %v2985 = vunpack.c.l.b16 %v2533
        %v2986 = vunpack.c.l.b16 %v2534
        %v2987 = vunpack.c.l.b16 %v2535
        %v2988 = vunpack.c.l.b16 %v2536
        %v2989 = vunpack.c.l.b16 %v2537
        %v2990 = vunpack.c.l.b16 %v2538
        %v2991 = vunpack.c.l.b16 %v2539
        %v2992 = vunpack.c.l.b16 %v2540
        %v2993 = vunpack.c.l.b16 %v2541
        %v2994 = vunpack.c.l.b16 %v2542
        %v2995 = vunpack.c.l.b16 %v2543
        %v2996 = vunpack.c.l.b16 %v2544
        %v2997 = vunpack.c.l.b16 %v2545
        %v2998 = vunpack.c.l.b16 %v2546
        %v2999 = vunpack.c.l.b16 %v2547
        %v3000 = vunpack.c.l.b16 %v2548
        %v3001 = vunpack.c.l.b16 %v2549
        %v3002 = vunpack.c.l.b16 %v2550
        %v3003 = vunpack.c.l.b16 %v2551
        %v3004 = vunpack.c.l.b16 %v2552
        %v3005 = vpack.c.b16 %v2942, %v2941
        %v3006 = vpack.c.b16 %v2944, %v2943
        %v3007 = vpack.c.b16 %v2946, %v2945
        %v3008 = vpack.c.b16 %v2948, %v2947
        %v3009 = vpack.c.b16 %v2950, %v2949
        %v3010 = vpack.c.b16 %v2952, %v2951
        %v3011 = vpack.c.b16 %v2954, %v2953
        %v3012 = vpack.c.b16 %v2956, %v2955
        %v3013 = vpack.c.b16 %v2958, %v2957
        %v3014 = vpack.c.b16 %v2960, %v2959
        %v3015 = vpack.c.b16 %v2962, %v2961
        %v3016 = vpack.c.b16 %v2964, %v2963
        %v3017 = vpack.c.b16 %v2966, %v2965
        %v3018 = vpack.c.b16 %v2968, %v2967
        %v3019 = vpack.c.b16 %v2970, %v2969
        %v3020 = vpack.c.b16 %v2972, %v2971
        %v3021 = vpack.c.b16 %v2974, %v2973
        %v3022 = vpack.c.b16 %v2976, %v2975
        %v3023 = vpack.c.b16 %v2978, %v2977
        %v3024 = vpack.c.b16 %v2980, %v2979
        %v3025 = vpack.c.b16 %v2982, %v2981
        %v3026 = vpack.c.b16 %v2984, %v2983
        %v3027 = vpack.c.b16 %v2986, %v2985
        %v3028 = vpack.c.b16 %v2988, %v2987
        %v3029 = vpack.c.b16 %v2990, %v2989
        %v3030 = vpack.c.b16 %v2992, %v2991
        %v3031 = vpack.c.b16 %v2994, %v2993
        %v3032 = vpack.c.b16 %v2996, %v2995
        %v3033 = vpack.c.b16 %v2998, %v2997
        %v3034 = vpack.c.b16 %v3000, %v2999
        %v3035 = vpack.c.b16 %v3002, %v3001
        %v3036 = vpack.c.b16 %v3004, %v3003
        %3069 = vmatpush.bf16.msra.mxu0 %v3012
        %3070 = vmatpush.bf16.msra.mxu0 %v3011
        %3071 = vmatpush.bf16.msra.mxu0 %v3010
        %3072 = vmatpush.bf16.msra.mxu0 %v3009
        %3073 = vmatpush.bf16.msra.mxu0 %v3008
        %3074 = vmatpush.bf16.msra.mxu0 %v3007
        %3075 = vmatpush.bf16.msra.mxu0 %v3006
        %3076 = vmatpush.bf16.msra.mxu0 %v3005
        %3077 = vmatmul.bf16.gmra.mxu0 %v2749
        %v3078 = vpop.f32.mrf.mxu0
        %v3079 = vadd.f32 %v2555, %v3078
        %v3080 = vpop.f32.mrf.mxu0
        %v3081 = vadd.f32 %v2555, %v3080
        %3082 = vmatmul.bf16.gmra.mxu0 %v2753
        %v3083 = vpop.f32.mrf.mxu0
        %v3084 = vadd.f32 %v2555, %v3083
        %v3085 = vpop.f32.mrf.mxu0
        %v3086 = vadd.f32 %v2555, %v3085
        %3087 = vmatmul.bf16.gmra.mxu0 %v2757
        %v3088 = vpop.f32.mrf.mxu0
        %v3089 = vadd.f32 %v2555, %v3088
        %v3090 = vpop.f32.mrf.mxu0
        %v3091 = vadd.f32 %v2555, %v3090
        %3092 = vmatmul.bf16.gmra.mxu0 %v2761
        %v3093 = vpop.f32.mrf.mxu0
        %v3094 = vadd.f32 %v2555, %v3093
        %v3095 = vpop.f32.mrf.mxu0
        %v3096 = vadd.f32 %v2555, %v3095
        %3097 = vmatmul.bf16.gmra.mxu0 %v2765
        %v3098 = vpop.f32.mrf.mxu0
        %v3099 = vadd.f32 %v2555, %v3098
        %v3100 = vpop.f32.mrf.mxu0
        %v3101 = vadd.f32 %v2555, %v3100
        %3102 = vmatmul.bf16.gmra.mxu0 %v2769
        %v3103 = vpop.f32.mrf.mxu0
        %v3104 = vadd.f32 %v2555, %v3103
        %v3105 = vpop.f32.mrf.mxu0
        %v3106 = vadd.f32 %v2555, %v3105
        %3107 = vmatmul.bf16.gmra.mxu0 %v2773
        %v3108 = vpop.f32.mrf.mxu0
        %v3109 = vadd.f32 %v2555, %v3108
        %v3110 = vpop.f32.mrf.mxu0
        %v3111 = vadd.f32 %v2555, %v3110
        %3112 = vmatmul.bf16.gmra.mxu0 %v2777
        %v3113 = vpop.f32.mrf.mxu0
        %v3114 = vadd.f32 %v2555, %v3113
        %v3115 = vpop.f32.mrf.mxu0
        %v3116 = vadd.f32 %v2555, %v3115
        %3117 = vmatmul.bf16.gmra.mxu0 %v2781
        %v3118 = vpop.f32.mrf.mxu0
        %v3119 = vadd.f32 %v2555, %v3118
        %v3120 = vpop.f32.mrf.mxu0
        %v3121 = vadd.f32 %v2555, %v3120
        %3122 = vmatmul.bf16.gmra.mxu0 %v2785
        %v3123 = vpop.f32.mrf.mxu0
        %v3124 = vadd.f32 %v2555, %v3123
        %v3125 = vpop.f32.mrf.mxu0
        %v3126 = vadd.f32 %v2555, %v3125
        %3127 = vmatmul.bf16.gmra.mxu0 %v2789
        %v3128 = vpop.f32.mrf.mxu0
        %v3129 = vadd.f32 %v2555, %v3128
        %v3130 = vpop.f32.mrf.mxu0
        %v3131 = vadd.f32 %v2555, %v3130
        %3132 = vmatmul.bf16.gmra.mxu0 %v2793
        %v3133 = vpop.f32.mrf.mxu0
        %v3134 = vadd.f32 %v2555, %v3133
        %v3135 = vpop.f32.mrf.mxu0
        %v3136 = vadd.f32 %v2555, %v3135
        %3137 = vmatmul.bf16.gmra.mxu0 %v2797
        %v3138 = vpop.f32.mrf.mxu0
        %v3139 = vadd.f32 %v2555, %v3138
        %v3140 = vpop.f32.mrf.mxu0
        %v3141 = vadd.f32 %v2555, %v3140
        %3142 = vmatmul.bf16.gmra.mxu0 %v2801
        %v3143 = vpop.f32.mrf.mxu0
        %v3144 = vadd.f32 %v2555, %v3143
        %v3145 = vpop.f32.mrf.mxu0
        %v3146 = vadd.f32 %v2555, %v3145
        %3147 = vmatmul.bf16.gmra.mxu0 %v2805
        %v3148 = vpop.f32.mrf.mxu0
        %v3149 = vadd.f32 %v2555, %v3148
        %v3150 = vpop.f32.mrf.mxu0
        %v3151 = vadd.f32 %v2555, %v3150
        %3152 = vmatmul.bf16.gmra.mxu0 %v2809
        %v3153 = vpop.f32.mrf.mxu0
        %v3154 = vadd.f32 %v2555, %v3153
        %v3155 = vpop.f32.mrf.mxu0
        %v3156 = vadd.f32 %v2555, %v3155
        %3157 = vdwg.mxu0
        %3158 = vmatpush.bf16.msra.mxu0 %v3020
        %3159 = vmatpush.bf16.msra.mxu0 %v3019
        %3160 = vmatpush.bf16.msra.mxu0 %v3018
        %3161 = vmatpush.bf16.msra.mxu0 %v3017
        %3162 = vmatpush.bf16.msra.mxu0 %v3016
        %3163 = vmatpush.bf16.msra.mxu0 %v3015
        %3164 = vmatpush.bf16.msra.mxu0 %v3014
        %3165 = vmatpush.bf16.msra.mxu0 %v3013
        %3166 = vmatmul.bf16.gmra.mxu0 %v2750
        %v3167 = vpop.f32.mrf.mxu0
        %v3168 = vadd.f32 %v3079, %v3167
        %v3169 = vpop.f32.mrf.mxu0
        %v3170 = vadd.f32 %v3081, %v3169
        %3171 = vmatmul.bf16.gmra.mxu0 %v2754
        %v3172 = vpop.f32.mrf.mxu0
        %v3173 = vadd.f32 %v3084, %v3172
        %v3174 = vpop.f32.mrf.mxu0
        %v3175 = vadd.f32 %v3086, %v3174
        %3176 = vmatmul.bf16.gmra.mxu0 %v2758
        %v3177 = vpop.f32.mrf.mxu0
        %v3178 = vadd.f32 %v3089, %v3177
        %v3179 = vpop.f32.mrf.mxu0
        %v3180 = vadd.f32 %v3091, %v3179
        %3181 = vmatmul.bf16.gmra.mxu0 %v2762
        %v3182 = vpop.f32.mrf.mxu0
        %v3183 = vadd.f32 %v3094, %v3182
        %v3184 = vpop.f32.mrf.mxu0
        %v3185 = vadd.f32 %v3096, %v3184
        %3186 = vmatmul.bf16.gmra.mxu0 %v2766
        %v3187 = vpop.f32.mrf.mxu0
        %v3188 = vadd.f32 %v3099, %v3187
        %v3189 = vpop.f32.mrf.mxu0
        %v3190 = vadd.f32 %v3101, %v3189
        %3191 = vmatmul.bf16.gmra.mxu0 %v2770
        %v3192 = vpop.f32.mrf.mxu0
        %v3193 = vadd.f32 %v3104, %v3192
        %v3194 = vpop.f32.mrf.mxu0
        %v3195 = vadd.f32 %v3106, %v3194
        %3196 = vmatmul.bf16.gmra.mxu0 %v2774
        %v3197 = vpop.f32.mrf.mxu0
        %v3198 = vadd.f32 %v3109, %v3197
        %v3199 = vpop.f32.mrf.mxu0
        %v3200 = vadd.f32 %v3111, %v3199
        %3201 = vmatmul.bf16.gmra.mxu0 %v2778
        %v3202 = vpop.f32.mrf.mxu0
        %v3203 = vadd.f32 %v3114, %v3202
        %v3204 = vpop.f32.mrf.mxu0
        %v3205 = vadd.f32 %v3116, %v3204
        %3206 = vmatmul.bf16.gmra.mxu0 %v2782
        %v3207 = vpop.f32.mrf.mxu0
        %v3208 = vadd.f32 %v3119, %v3207
        %v3209 = vpop.f32.mrf.mxu0
        %v3210 = vadd.f32 %v3121, %v3209
        %3211 = vmatmul.bf16.gmra.mxu0 %v2786
        %v3212 = vpop.f32.mrf.mxu0
        %v3213 = vadd.f32 %v3124, %v3212
        %v3214 = vpop.f32.mrf.mxu0
        %v3215 = vadd.f32 %v3126, %v3214
        %3216 = vmatmul.bf16.gmra.mxu0 %v2790
        %v3217 = vpop.f32.mrf.mxu0
        %v3218 = vadd.f32 %v3129, %v3217
        %v3219 = vpop.f32.mrf.mxu0
        %v3220 = vadd.f32 %v3131, %v3219
        %3221 = vmatmul.bf16.gmra.mxu0 %v2794
        %v3222 = vpop.f32.mrf.mxu0
        %v3223 = vadd.f32 %v3134, %v3222
        %v3224 = vpop.f32.mrf.mxu0
        %v3225 = vadd.f32 %v3136, %v3224
        %3226 = vmatmul.bf16.gmra.mxu0 %v2798
        %v3227 = vpop.f32.mrf.mxu0
        %v3228 = vadd.f32 %v3139, %v3227
        %v3229 = vpop.f32.mrf.mxu0
        %v3230 = vadd.f32 %v3141, %v3229
        %3231 = vmatmul.bf16.gmra.mxu0 %v2802
        %v3232 = vpop.f32.mrf.mxu0
        %v3233 = vadd.f32 %v3144, %v3232
        %v3234 = vpop.f32.mrf.mxu0
        %v3235 = vadd.f32 %v3146, %v3234
        %3236 = vmatmul.bf16.gmra.mxu0 %v2806
        %v3237 = vpop.f32.mrf.mxu0
        %v3238 = vadd.f32 %v3149, %v3237
        %v3239 = vpop.f32.mrf.mxu0
        %v3240 = vadd.f32 %v3151, %v3239
        %3241 = vmatmul.bf16.gmra.mxu0 %v2810
        %v3242 = vpop.f32.mrf.mxu0
        %v3243 = vadd.f32 %v3154, %v3242
        %v3244 = vpop.f32.mrf.mxu0
        %v3245 = vadd.f32 %v3156, %v3244
        %3246 = vdwg.mxu0
        %3247 = vmatpush.bf16.msra.mxu0 %v3028
        %3248 = vmatpush.bf16.msra.mxu0 %v3027
        %3249 = vmatpush.bf16.msra.mxu0 %v3026
        %3250 = vmatpush.bf16.msra.mxu0 %v3025
        %3251 = vmatpush.bf16.msra.mxu0 %v3024
        %3252 = vmatpush.bf16.msra.mxu0 %v3023
        %3253 = vmatpush.bf16.msra.mxu0 %v3022
        %3254 = vmatpush.bf16.msra.mxu0 %v3021
        %3255 = vmatmul.bf16.gmra.mxu0 %v2751
        %v3256 = vpop.f32.mrf.mxu0
        %v3257 = vadd.f32 %v3168, %v3256
        %v3258 = vpop.f32.mrf.mxu0
        %v3259 = vadd.f32 %v3170, %v3258
        %3260 = vmatmul.bf16.gmra.mxu0 %v2755
        %v3261 = vpop.f32.mrf.mxu0
        %v3262 = vadd.f32 %v3173, %v3261
        %v3263 = vpop.f32.mrf.mxu0
        %v3264 = vadd.f32 %v3175, %v3263
        %3265 = vmatmul.bf16.gmra.mxu0 %v2759
        %v3266 = vpop.f32.mrf.mxu0
        %v3267 = vadd.f32 %v3178, %v3266
        %v3268 = vpop.f32.mrf.mxu0
        %v3269 = vadd.f32 %v3180, %v3268
        %3270 = vmatmul.bf16.gmra.mxu0 %v2763
        %v3271 = vpop.f32.mrf.mxu0
        %v3272 = vadd.f32 %v3183, %v3271
        %v3273 = vpop.f32.mrf.mxu0
        %v3274 = vadd.f32 %v3185, %v3273
        %3275 = vmatmul.bf16.gmra.mxu0 %v2767
        %v3276 = vpop.f32.mrf.mxu0
        %v3277 = vadd.f32 %v3188, %v3276
        %v3278 = vpop.f32.mrf.mxu0
        %v3279 = vadd.f32 %v3190, %v3278
        %3280 = vmatmul.bf16.gmra.mxu0 %v2771
        %v3281 = vpop.f32.mrf.mxu0
        %v3282 = vadd.f32 %v3193, %v3281
        %v3283 = vpop.f32.mrf.mxu0
        %v3284 = vadd.f32 %v3195, %v3283
        %3285 = vmatmul.bf16.gmra.mxu0 %v2775
        %v3286 = vpop.f32.mrf.mxu0
        %v3287 = vadd.f32 %v3198, %v3286
        %v3288 = vpop.f32.mrf.mxu0
        %v3289 = vadd.f32 %v3200, %v3288
        %3290 = vmatmul.bf16.gmra.mxu0 %v2779
        %v3291 = vpop.f32.mrf.mxu0
        %v3292 = vadd.f32 %v3203, %v3291
        %v3293 = vpop.f32.mrf.mxu0
        %v3294 = vadd.f32 %v3205, %v3293
        %3295 = vmatmul.bf16.gmra.mxu0 %v2783
        %v3296 = vpop.f32.mrf.mxu0
        %v3297 = vadd.f32 %v3208, %v3296
        %v3298 = vpop.f32.mrf.mxu0
        %v3299 = vadd.f32 %v3210, %v3298
        %3300 = vmatmul.bf16.gmra.mxu0 %v2787
        %v3301 = vpop.f32.mrf.mxu0
        %v3302 = vadd.f32 %v3213, %v3301
        %v3303 = vpop.f32.mrf.mxu0
        %v3304 = vadd.f32 %v3215, %v3303
        %3305 = vmatmul.bf16.gmra.mxu0 %v2791
        %v3306 = vpop.f32.mrf.mxu0
        %v3307 = vadd.f32 %v3218, %v3306
        %v3308 = vpop.f32.mrf.mxu0
        %v3309 = vadd.f32 %v3220, %v3308
        %3310 = vmatmul.bf16.gmra.mxu0 %v2795
        %v3311 = vpop.f32.mrf.mxu0
        %v3312 = vadd.f32 %v3223, %v3311
        %v3313 = vpop.f32.mrf.mxu0
        %v3314 = vadd.f32 %v3225, %v3313
        %3315 = vmatmul.bf16.gmra.mxu0 %v2799
        %v3316 = vpop.f32.mrf.mxu0
        %v3317 = vadd.f32 %v3228, %v3316
        %v3318 = vpop.f32.mrf.mxu0
        %v3319 = vadd.f32 %v3230, %v3318
        %3320 = vmatmul.bf16.gmra.mxu0 %v2803
        %v3321 = vpop.f32.mrf.mxu0
        %v3322 = vadd.f32 %v3233, %v3321
        %v3323 = vpop.f32.mrf.mxu0
        %v3324 = vadd.f32 %v3235, %v3323
        %3325 = vmatmul.bf16.gmra.mxu0 %v2807
        %v3326 = vpop.f32.mrf.mxu0
        %v3327 = vadd.f32 %v3238, %v3326
        %v3328 = vpop.f32.mrf.mxu0
        %v3329 = vadd.f32 %v3240, %v3328
        %3330 = vmatmul.bf16.gmra.mxu0 %v2811
        %v3331 = vpop.f32.mrf.mxu0
        %v3332 = vadd.f32 %v3243, %v3331
        %v3333 = vpop.f32.mrf.mxu0
        %v3334 = vadd.f32 %v3245, %v3333
        %3335 = vdwg.mxu0
        %3336 = vmatpush.bf16.msra.mxu0 %v3036
        %3337 = vmatpush.bf16.msra.mxu0 %v3035
        %3338 = vmatpush.bf16.msra.mxu0 %v3034
        %3339 = vmatpush.bf16.msra.mxu0 %v3033
        %3340 = vmatpush.bf16.msra.mxu0 %v3032
        %3341 = vmatpush.bf16.msra.mxu0 %v3031
        %3342 = vmatpush.bf16.msra.mxu0 %v3030
        %3343 = vmatpush.bf16.msra.mxu0 %v3029
        %3344 = vmatmul.bf16.gmra.mxu0 %v2752
        %v3345 = vpop.f32.mrf.mxu0
        %v3346 = vadd.f32 %v3257, %v3345
        %v3347 = vpop.f32.mrf.mxu0
        %v3348 = vadd.f32 %v3259, %v3347
        %3349 = vmatmul.bf16.gmra.mxu0 %v2756
        %v3350 = vpop.f32.mrf.mxu0
        %v3351 = vadd.f32 %v3262, %v3350
        %v3352 = vpop.f32.mrf.mxu0
        %v3353 = vadd.f32 %v3264, %v3352
        %3354 = vmatmul.bf16.gmra.mxu0 %v2760
        %v3355 = vpop.f32.mrf.mxu0
        %v3356 = vadd.f32 %v3267, %v3355
        %v3357 = vpop.f32.mrf.mxu0
        %v3358 = vadd.f32 %v3269, %v3357
        %3359 = vmatmul.bf16.gmra.mxu0 %v2764
        %v3360 = vpop.f32.mrf.mxu0
        %v3361 = vadd.f32 %v3272, %v3360
        %v3362 = vpop.f32.mrf.mxu0
        %v3363 = vadd.f32 %v3274, %v3362
        %3364 = vmatmul.bf16.gmra.mxu0 %v2768
        %v3365 = vpop.f32.mrf.mxu0
        %v3366 = vadd.f32 %v3277, %v3365
        %v3367 = vpop.f32.mrf.mxu0
        %v3368 = vadd.f32 %v3279, %v3367
        %3369 = vmatmul.bf16.gmra.mxu0 %v2772
        %v3370 = vpop.f32.mrf.mxu0
        %v3371 = vadd.f32 %v3282, %v3370
        %v3372 = vpop.f32.mrf.mxu0
        %v3373 = vadd.f32 %v3284, %v3372
        %3374 = vmatmul.bf16.gmra.mxu0 %v2776
        %v3375 = vpop.f32.mrf.mxu0
        %v3376 = vadd.f32 %v3287, %v3375
        %v3377 = vpop.f32.mrf.mxu0
        %v3378 = vadd.f32 %v3289, %v3377
        %3379 = vmatmul.bf16.gmra.mxu0 %v2780
        %v3380 = vpop.f32.mrf.mxu0
        %v3381 = vadd.f32 %v3292, %v3380
        %v3382 = vpop.f32.mrf.mxu0
        %v3383 = vadd.f32 %v3294, %v3382
        %3384 = vmatmul.bf16.gmra.mxu0 %v2784
        %v3385 = vpop.f32.mrf.mxu0
        %v3386 = vadd.f32 %v3297, %v3385
        %v3387 = vpop.f32.mrf.mxu0
        %v3388 = vadd.f32 %v3299, %v3387
        %3389 = vmatmul.bf16.gmra.mxu0 %v2788
        %v3390 = vpop.f32.mrf.mxu0
        %v3391 = vadd.f32 %v3302, %v3390
        %v3392 = vpop.f32.mrf.mxu0
        %v3393 = vadd.f32 %v3304, %v3392
        %3394 = vmatmul.bf16.gmra.mxu0 %v2792
        %v3395 = vpop.f32.mrf.mxu0
        %v3396 = vadd.f32 %v3307, %v3395
        %v3397 = vpop.f32.mrf.mxu0
        %v3398 = vadd.f32 %v3309, %v3397
        %3399 = vmatmul.bf16.gmra.mxu0 %v2796
        %v3400 = vpop.f32.mrf.mxu0
        %v3401 = vadd.f32 %v3312, %v3400
        %v3402 = vpop.f32.mrf.mxu0
        %v3403 = vadd.f32 %v3314, %v3402
        %3404 = vmatmul.bf16.gmra.mxu0 %v2800
        %v3405 = vpop.f32.mrf.mxu0
        %v3406 = vadd.f32 %v3317, %v3405
        %v3407 = vpop.f32.mrf.mxu0
        %v3408 = vadd.f32 %v3319, %v3407
        %3409 = vmatmul.bf16.gmra.mxu0 %v2804
        %v3410 = vpop.f32.mrf.mxu0
        %v3411 = vadd.f32 %v3322, %v3410
        %v3412 = vpop.f32.mrf.mxu0
        %v3413 = vadd.f32 %v3324, %v3412
        %3414 = vmatmul.bf16.gmra.mxu0 %v2808
        %v3415 = vpop.f32.mrf.mxu0
        %v3416 = vadd.f32 %v3327, %v3415
        %v3417 = vpop.f32.mrf.mxu0
        %v3418 = vadd.f32 %v3329, %v3417
        %3419 = vmatmul.bf16.gmra.mxu0 %v2812
        %v3420 = vpop.f32.mrf.mxu0
        %v3421 = vadd.f32 %v3332, %v3420
        %v3422 = vpop.f32.mrf.mxu0
        %v3423 = vadd.f32 %v3334, %v3422
        %3424 = vdwg.mxu0
        %v3425 = vlaneseq
        %v3426 = vand.u32 %v3425, 127
        %vm3427 = vcmp.lt.s32.totalorder %v3426, 4
        %v3428 = vsel %vm3427, %v3346, -3.4028235e+38
        %v3429 = vsel %vm3427, %v3348, -3.4028235e+38
        %v3430 = vsel %vm3427, %v3351, -3.4028235e+38
        %v3431 = vsel %vm3427, %v3353, -3.4028235e+38
        %v3432 = vsel %vm3427, %v3356, -3.4028235e+38
        %v3433 = vsel %vm3427, %v3358, -3.4028235e+38
        %v3434 = vsel %vm3427, %v3361, -3.4028235e+38
        %v3435 = vsel %vm3427, %v3363, -3.4028235e+38
        %v3436 = vsel %vm3427, %v3366, -3.4028235e+38
        %v3437 = vsel %vm3427, %v3368, -3.4028235e+38
        %v3438 = vsel %vm3427, %v3371, -3.4028235e+38
        %v3439 = vsel %vm3427, %v3373, -3.4028235e+38
        %v3440 = vsel %vm3427, %v3376, -3.4028235e+38
        %v3441 = vsel %vm3427, %v3378, -3.4028235e+38
        %v3442 = vsel %vm3427, %v3381, -3.4028235e+38
        %v3443 = vsel %vm3427, %v3383, -3.4028235e+38
        %v3444 = vsel %vm3427, %v3386, -3.4028235e+38
        %v3445 = vsel %vm3427, %v3388, -3.4028235e+38
        %v3446 = vsel %vm3427, %v3391, -3.4028235e+38
        %v3447 = vsel %vm3427, %v3393, -3.4028235e+38
        %v3448 = vsel %vm3427, %v3396, -3.4028235e+38
        %v3449 = vsel %vm3427, %v3398, -3.4028235e+38
        %v3450 = vsel %vm3427, %v3401, -3.4028235e+38
        %v3451 = vsel %vm3427, %v3403, -3.4028235e+38
        %v3452 = vsel %vm3427, %v3406, -3.4028235e+38
        %v3453 = vsel %vm3427, %v3408, -3.4028235e+38
        %v3454 = vsel %vm3427, %v3411, -3.4028235e+38
        %v3455 = vsel %vm3427, %v3413, -3.4028235e+38
        %v3456 = vsel %vm3427, %v3416, -3.4028235e+38
        %v3457 = vsel %vm3427, %v3418, -3.4028235e+38
        %v3458 = vsel %vm3427, %v3421, -3.4028235e+38
        %v3459 = vsel %vm3427, %v3423, -3.4028235e+38
        %3460 = vmax.xlane.f32.xlu0 %v3428
        %v3461 = vpop.xlane.xlu0 %3460
        %3462 = vmax.xlane.f32.xlu0 %v3429
        %v3463 = vpop.xlane.xlu0 %3462
        %3464 = vmax.xlane.f32.xlu0 %v3430
        %v3465 = vpop.xlane.xlu0 %3464
        %3466 = vmax.xlane.f32.xlu0 %v3431
        %v3467 = vpop.xlane.xlu0 %3466
        %3468 = vmax.xlane.f32.xlu0 %v3432
        %v3469 = vpop.xlane.xlu0 %3468
        %3470 = vmax.xlane.f32.xlu0 %v3433
        %v3471 = vpop.xlane.xlu0 %3470
        %3472 = vmax.xlane.f32.xlu0 %v3434
        %v3473 = vpop.xlane.xlu0 %3472
        %3474 = vmax.xlane.f32.xlu0 %v3435
        %v3475 = vpop.xlane.xlu0 %3474
        %3476 = vmax.xlane.f32.xlu0 %v3436
        %v3477 = vpop.xlane.xlu0 %3476
        %3478 = vmax.xlane.f32.xlu0 %v3437
        %v3479 = vpop.xlane.xlu0 %3478
        %3480 = vmax.xlane.f32.xlu0 %v3438
        %v3481 = vpop.xlane.xlu0 %3480
        %3482 = vmax.xlane.f32.xlu0 %v3439
        %v3483 = vpop.xlane.xlu0 %3482
        %3484 = vmax.xlane.f32.xlu0 %v3440
        %v3485 = vpop.xlane.xlu0 %3484
        %3486 = vmax.xlane.f32.xlu0 %v3441
        %v3487 = vpop.xlane.xlu0 %3486
        %3488 = vmax.xlane.f32.xlu0 %v3442
        %v3489 = vpop.xlane.xlu0 %3488
        %3490 = vmax.xlane.f32.xlu0 %v3443
        %v3491 = vpop.xlane.xlu0 %3490
        %3492 = vmax.xlane.f32.xlu0 %v3444
        %v3493 = vpop.xlane.xlu0 %3492
        %3494 = vmax.xlane.f32.xlu0 %v3445
        %v3495 = vpop.xlane.xlu0 %3494
        %3496 = vmax.xlane.f32.xlu0 %v3446
        %v3497 = vpop.xlane.xlu0 %3496
        %3498 = vmax.xlane.f32.xlu0 %v3447
        %v3499 = vpop.xlane.xlu0 %3498
        %3500 = vmax.xlane.f32.xlu0 %v3448
        %v3501 = vpop.xlane.xlu0 %3500
        %3502 = vmax.xlane.f32.xlu0 %v3449
        %v3503 = vpop.xlane.xlu0 %3502
        %3504 = vmax.xlane.f32.xlu0 %v3450
        %v3505 = vpop.xlane.xlu0 %3504
        %3506 = vmax.xlane.f32.xlu0 %v3451
        %v3507 = vpop.xlane.xlu0 %3506
        %3508 = vmax.xlane.f32.xlu0 %v3452
        %v3509 = vpop.xlane.xlu0 %3508
        %3510 = vmax.xlane.f32.xlu0 %v3453
        %v3511 = vpop.xlane.xlu0 %3510
        %3512 = vmax.xlane.f32.xlu0 %v3454
        %v3513 = vpop.xlane.xlu0 %3512
        %3514 = vmax.xlane.f32.xlu0 %v3455
        %v3515 = vpop.xlane.xlu0 %3514
        %3516 = vmax.xlane.f32.xlu0 %v3456
        %v3517 = vpop.xlane.xlu0 %3516
        %3518 = vmax.xlane.f32.xlu0 %v3457
        %v3519 = vpop.xlane.xlu0 %3518
        %3520 = vmax.xlane.f32.xlu0 %v3458
        %v3521 = vpop.xlane.xlu0 %3520
        %3522 = vmax.xlane.f32.xlu0 %v3459
        %v3523 = vpop.xlane.xlu0 %3522
        %v3524 = vsub.f32 %v3428, %v3461
        %v3525 = vsub.f32 %v3429, %v3463
        %v3526 = vsub.f32 %v3430, %v3465
        %v3527 = vsub.f32 %v3431, %v3467
        %v3528 = vsub.f32 %v3432, %v3469
        %v3529 = vsub.f32 %v3433, %v3471
        %v3530 = vsub.f32 %v3434, %v3473
        %v3531 = vsub.f32 %v3435, %v3475
        %v3532 = vsub.f32 %v3436, %v3477
        %v3533 = vsub.f32 %v3437, %v3479
        %v3534 = vsub.f32 %v3438, %v3481
        %v3535 = vsub.f32 %v3439, %v3483
        %v3536 = vsub.f32 %v3440, %v3485
        %v3537 = vsub.f32 %v3441, %v3487
        %v3538 = vsub.f32 %v3442, %v3489
        %v3539 = vsub.f32 %v3443, %v3491
        %v3540 = vsub.f32 %v3444, %v3493
        %v3541 = vsub.f32 %v3445, %v3495
        %v3542 = vsub.f32 %v3446, %v3497
        %v3543 = vsub.f32 %v3447, %v3499
        %v3544 = vsub.f32 %v3448, %v3501
        %v3545 = vsub.f32 %v3449, %v3503
        %v3546 = vsub.f32 %v3450, %v3505
        %v3547 = vsub.f32 %v3451, %v3507
        %v3548 = vsub.f32 %v3452, %v3509
        %v3549 = vsub.f32 %v3453, %v3511
        %v3550 = vsub.f32 %v3454, %v3513
        %v3551 = vsub.f32 %v3455, %v3515
        %v3552 = vsub.f32 %v3456, %v3517
        %v3553 = vsub.f32 %v3457, %v3519
        %v3554 = vsub.f32 %v3458, %v3521
        %v3555 = vsub.f32 %v3459, %v3523
        %v3556 = vmul.f32 %v3524, 1.442695
        %v3557 = vpow.pop %v3556
        %v3558 = vmul.f32 %v3525, 1.442695
        %v3559 = vpow.pop %v3558
        %v3560 = vmul.f32 %v3526, 1.442695
        %v3561 = vpow.pop %v3560
        %v3562 = vmul.f32 %v3527, 1.442695
        %v3563 = vpow.pop %v3562
        %v3564 = vmul.f32 %v3528, 1.442695
        %v3565 = vpow.pop %v3564
        %v3566 = vmul.f32 %v3529, 1.442695
        %v3567 = vpow.pop %v3566
        %v3568 = vmul.f32 %v3530, 1.442695
        %v3569 = vpow.pop %v3568
        %v3570 = vmul.f32 %v3531, 1.442695
        %v3571 = vpow.pop %v3570
        %v3572 = vmul.f32 %v3532, 1.442695
        %v3573 = vpow.pop %v3572
        %v3574 = vmul.f32 %v3533, 1.442695
        %v3575 = vpow.pop %v3574
        %v3576 = vmul.f32 %v3534, 1.442695
        %v3577 = vpow.pop %v3576
        %v3578 = vmul.f32 %v3535, 1.442695
        %v3579 = vpow.pop %v3578
        %v3580 = vmul.f32 %v3536, 1.442695
        %v3581 = vpow.pop %v3580
        %v3582 = vmul.f32 %v3537, 1.442695
        %v3583 = vpow.pop %v3582
        %v3584 = vmul.f32 %v3538, 1.442695
        %v3585 = vpow.pop %v3584
        %v3586 = vmul.f32 %v3539, 1.442695
        %v3587 = vpow.pop %v3586
        %v3588 = vmul.f32 %v3540, 1.442695
        %v3589 = vpow.pop %v3588
        %v3590 = vmul.f32 %v3541, 1.442695
        %v3591 = vpow.pop %v3590
        %v3592 = vmul.f32 %v3542, 1.442695
        %v3593 = vpow.pop %v3592
        %v3594 = vmul.f32 %v3543, 1.442695
        %v3595 = vpow.pop %v3594
        %v3596 = vmul.f32 %v3544, 1.442695
        %v3597 = vpow.pop %v3596
        %v3598 = vmul.f32 %v3545, 1.442695
        %v3599 = vpow.pop %v3598
        %v3600 = vmul.f32 %v3546, 1.442695
        %v3601 = vpow.pop %v3600
        %v3602 = vmul.f32 %v3547, 1.442695
        %v3603 = vpow.pop %v3602
        %v3604 = vmul.f32 %v3548, 1.442695
        %v3605 = vpow.pop %v3604
        %v3606 = vmul.f32 %v3549, 1.442695
        %v3607 = vpow.pop %v3606
        %v3608 = vmul.f32 %v3550, 1.442695
        %v3609 = vpow.pop %v3608
        %v3610 = vmul.f32 %v3551, 1.442695
        %v3611 = vpow.pop %v3610
        %v3612 = vmul.f32 %v3552, 1.442695
        %v3613 = vpow.pop %v3612
        %v3614 = vmul.f32 %v3553, 1.442695
        %v3615 = vpow.pop %v3614
        %v3616 = vmul.f32 %v3554, 1.442695
        %v3617 = vpow.pop %v3616
        %v3618 = vmul.f32 %v3555, 1.442695
        %v3619 = vpow.pop %v3618
        %3620 = vadd.xlane.f32.xlu0 %v3557
        %v3621 = vpop.xlane.xlu0 %3620
        %3622 = vadd.xlane.f32.xlu0 %v3559
        %v3623 = vpop.xlane.xlu0 %3622
        %3624 = vadd.xlane.f32.xlu0 %v3561
        %v3625 = vpop.xlane.xlu0 %3624
        %3626 = vadd.xlane.f32.xlu0 %v3563
        %v3627 = vpop.xlane.xlu0 %3626
        %3628 = vadd.xlane.f32.xlu0 %v3565
        %v3629 = vpop.xlane.xlu0 %3628
        %3630 = vadd.xlane.f32.xlu0 %v3567
        %v3631 = vpop.xlane.xlu0 %3630
        %3632 = vadd.xlane.f32.xlu0 %v3569
        %v3633 = vpop.xlane.xlu0 %3632
        %3634 = vadd.xlane.f32.xlu0 %v3571
        %v3635 = vpop.xlane.xlu0 %3634
        %3636 = vadd.xlane.f32.xlu0 %v3573
        %v3637 = vpop.xlane.xlu0 %3636
        %3638 = vadd.xlane.f32.xlu0 %v3575
        %v3639 = vpop.xlane.xlu0 %3638
        %3640 = vadd.xlane.f32.xlu0 %v3577
        %v3641 = vpop.xlane.xlu0 %3640
        %3642 = vadd.xlane.f32.xlu0 %v3579
        %v3643 = vpop.xlane.xlu0 %3642
        %3644 = vadd.xlane.f32.xlu0 %v3581
        %v3645 = vpop.xlane.xlu0 %3644
        %3646 = vadd.xlane.f32.xlu0 %v3583
        %v3647 = vpop.xlane.xlu0 %3646
        %3648 = vadd.xlane.f32.xlu0 %v3585
        %v3649 = vpop.xlane.xlu0 %3648
        %3650 = vadd.xlane.f32.xlu0 %v3587
        %v3651 = vpop.xlane.xlu0 %3650
        %3652 = vadd.xlane.f32.xlu0 %v3589
        %v3653 = vpop.xlane.xlu0 %3652
        %3654 = vadd.xlane.f32.xlu0 %v3591
        %v3655 = vpop.xlane.xlu0 %3654
        %3656 = vadd.xlane.f32.xlu0 %v3593
        %v3657 = vpop.xlane.xlu0 %3656
        %3658 = vadd.xlane.f32.xlu0 %v3595
        %v3659 = vpop.xlane.xlu0 %3658
        %3660 = vadd.xlane.f32.xlu0 %v3597
        %v3661 = vpop.xlane.xlu0 %3660
        %3662 = vadd.xlane.f32.xlu0 %v3599
        %v3663 = vpop.xlane.xlu0 %3662
        %3664 = vadd.xlane.f32.xlu0 %v3601
        %v3665 = vpop.xlane.xlu0 %3664
        %3666 = vadd.xlane.f32.xlu0 %v3603
        %v3667 = vpop.xlane.xlu0 %3666
        %3668 = vadd.xlane.f32.xlu0 %v3605
        %v3669 = vpop.xlane.xlu0 %3668
        %3670 = vadd.xlane.f32.xlu0 %v3607
        %v3671 = vpop.xlane.xlu0 %3670
        %3672 = vadd.xlane.f32.xlu0 %v3609
        %v3673 = vpop.xlane.xlu0 %3672
        %3674 = vadd.xlane.f32.xlu0 %v3611
        %v3675 = vpop.xlane.xlu0 %3674
        %3676 = vadd.xlane.f32.xlu0 %v3613
        %v3677 = vpop.xlane.xlu0 %3676
        %3678 = vadd.xlane.f32.xlu0 %v3615
        %v3679 = vpop.xlane.xlu0 %3678
        %3680 = vadd.xlane.f32.xlu0 %v3617
        %v3681 = vpop.xlane.xlu0 %3680
        %3682 = vadd.xlane.f32.xlu0 %v3619
        %v3683 = vpop.xlane.xlu0 %3682
        %v3684 = vlog2.pop %v3621
        %v3685 = vmul.f32 %v3684, 0.6931472
        %v3686 = vlog2.pop %v3623
        %v3687 = vmul.f32 %v3686, 0.6931472
        %v3688 = vlog2.pop %v3625
        %v3689 = vmul.f32 %v3688, 0.6931472
        %v3690 = vlog2.pop %v3627
        %v3691 = vmul.f32 %v3690, 0.6931472
        %v3692 = vlog2.pop %v3629
        %v3693 = vmul.f32 %v3692, 0.6931472
        %v3694 = vlog2.pop %v3631
        %v3695 = vmul.f32 %v3694, 0.6931472
        %v3696 = vlog2.pop %v3633
        %v3697 = vmul.f32 %v3696, 0.6931472
        %v3698 = vlog2.pop %v3635
        %v3699 = vmul.f32 %v3698, 0.6931472
        %v3700 = vlog2.pop %v3637
        %v3701 = vmul.f32 %v3700, 0.6931472
        %v3702 = vlog2.pop %v3639
        %v3703 = vmul.f32 %v3702, 0.6931472
        %v3704 = vlog2.pop %v3641
        %v3705 = vmul.f32 %v3704, 0.6931472
        %v3706 = vlog2.pop %v3643
        %v3707 = vmul.f32 %v3706, 0.6931472
        %v3708 = vlog2.pop %v3645
        %v3709 = vmul.f32 %v3708, 0.6931472
        %v3710 = vlog2.pop %v3647
        %v3711 = vmul.f32 %v3710, 0.6931472
        %v3712 = vlog2.pop %v3649
        %v3713 = vmul.f32 %v3712, 0.6931472
        %v3714 = vlog2.pop %v3651
        %v3715 = vmul.f32 %v3714, 0.6931472
        %v3716 = vlog2.pop %v3653
        %v3717 = vmul.f32 %v3716, 0.6931472
        %v3718 = vlog2.pop %v3655
        %v3719 = vmul.f32 %v3718, 0.6931472
        %v3720 = vlog2.pop %v3657
        %v3721 = vmul.f32 %v3720, 0.6931472
        %v3722 = vlog2.pop %v3659
        %v3723 = vmul.f32 %v3722, 0.6931472
        %v3724 = vlog2.pop %v3661
        %v3725 = vmul.f32 %v3724, 0.6931472
        %v3726 = vlog2.pop %v3663
        %v3727 = vmul.f32 %v3726, 0.6931472
        %v3728 = vlog2.pop %v3665
        %v3729 = vmul.f32 %v3728, 0.6931472
        %v3730 = vlog2.pop %v3667
        %v3731 = vmul.f32 %v3730, 0.6931472
        %v3732 = vlog2.pop %v3669
        %v3733 = vmul.f32 %v3732, 0.6931472
        %v3734 = vlog2.pop %v3671
        %v3735 = vmul.f32 %v3734, 0.6931472
        %v3736 = vlog2.pop %v3673
        %v3737 = vmul.f32 %v3736, 0.6931472
        %v3738 = vlog2.pop %v3675
        %v3739 = vmul.f32 %v3738, 0.6931472
        %v3740 = vlog2.pop %v3677
        %v3741 = vmul.f32 %v3740, 0.6931472
        %v3742 = vlog2.pop %v3679
        %v3743 = vmul.f32 %v3742, 0.6931472
        %v3744 = vlog2.pop %v3681
        %v3745 = vmul.f32 %v3744, 0.6931472
        %v3746 = vlog2.pop %v3683
        %v3747 = vmul.f32 %v3746, 0.6931472
        %v3748 = vsub.f32 %v3524, %v3685
        %v3749 = vsub.f32 %v3525, %v3687
        %v3750 = vsub.f32 %v3526, %v3689
        %v3751 = vsub.f32 %v3527, %v3691
        %v3752 = vsub.f32 %v3528, %v3693
        %v3753 = vsub.f32 %v3529, %v3695
        %v3754 = vsub.f32 %v3530, %v3697
        %v3755 = vsub.f32 %v3531, %v3699
        %v3756 = vsub.f32 %v3532, %v3701
        %v3757 = vsub.f32 %v3533, %v3703
        %v3758 = vsub.f32 %v3534, %v3705
        %v3759 = vsub.f32 %v3535, %v3707
        %v3760 = vsub.f32 %v3536, %v3709
        %v3761 = vsub.f32 %v3537, %v3711
        %v3762 = vsub.f32 %v3538, %v3713
        %v3763 = vsub.f32 %v3539, %v3715
        %v3764 = vsub.f32 %v3540, %v3717
        %v3765 = vsub.f32 %v3541, %v3719
        %v3766 = vsub.f32 %v3542, %v3721
        %v3767 = vsub.f32 %v3543, %v3723
        %v3768 = vsub.f32 %v3544, %v3725
        %v3769 = vsub.f32 %v3545, %v3727
        %v3770 = vsub.f32 %v3546, %v3729
        %v3771 = vsub.f32 %v3547, %v3731
        %v3772 = vsub.f32 %v3548, %v3733
        %v3773 = vsub.f32 %v3549, %v3735
        %v3774 = vsub.f32 %v3550, %v3737
        %v3775 = vsub.f32 %v3551, %v3739
        %v3776 = vsub.f32 %v3552, %v3741
        %v3777 = vsub.f32 %v3553, %v3743
        %v3778 = vsub.f32 %v3554, %v3745
        %v3779 = vsub.f32 %v3555, %v3747
        %3780 = vst [vmem:[%s252] sm:$0xff] %v3748
        %3781 = vst [vmem:[%s252 + $0x8] sm:$0xff] %v3749
        %3782 = vst [vmem:[%s252 + $0x10] sm:$0xff] %v3750
        %3783 = vst [vmem:[%s252 + $0x18] sm:$0xff] %v3751
        %3784 = vst [vmem:[%s252 + $0x20] sm:$0xff] %v3752
        %3785 = vst [vmem:[%s252 + $0x28] sm:$0xff] %v3753
        %3786 = vst [vmem:[%s252 + $0x30] sm:$0xff] %v3754
        %3787 = vst [vmem:[%s252 + $0x38] sm:$0xff] %v3755
        %3788 = vst [vmem:[%s252 + $0x40] sm:$0xff] %v3756
        %3789 = vst [vmem:[%s252 + $0x48] sm:$0xff] %v3757
        %3790 = vst [vmem:[%s252 + $0x50] sm:$0xff] %v3758
        %3791 = vst [vmem:[%s252 + $0x58] sm:$0xff] %v3759
        %3792 = vst [vmem:[%s252 + $0x60] sm:$0xff] %v3760
        %3793 = vst [vmem:[%s252 + $0x68] sm:$0xff] %v3761
        %3794 = vst [vmem:[%s252 + $0x70] sm:$0xff] %v3762
        %3795 = vst [vmem:[%s252 + $0x78] sm:$0xff] %v3763
        %3796 = vst [vmem:[%s252 + $0x80] sm:$0xff] %v3764
        %3797 = vst [vmem:[%s252 + $0x88] sm:$0xff] %v3765
        %3798 = vst [vmem:[%s252 + $0x90] sm:$0xff] %v3766
        %3799 = vst [vmem:[%s252 + $0x98] sm:$0xff] %v3767
        %3800 = vst [vmem:[%s252 + $0xa0] sm:$0xff] %v3768
        %3801 = vst [vmem:[%s252 + $0xa8] sm:$0xff] %v3769
        %3802 = vst [vmem:[%s252 + $0xb0] sm:$0xff] %v3770
        %3803 = vst [vmem:[%s252 + $0xb8] sm:$0xff] %v3771
        %3804 = vst [vmem:[%s252 + $0xc0] sm:$0xff] %v3772
        %3805 = vst [vmem:[%s252 + $0xc8] sm:$0xff] %v3773
        %3806 = vst [vmem:[%s252 + $0xd0] sm:$0xff] %v3774
        %3807 = vst [vmem:[%s252 + $0xd8] sm:$0xff] %v3775
        %3808 = vst [vmem:[%s252 + $0xe0] sm:$0xff] %v3776
        %3809 = vst [vmem:[%s252 + $0xe8] sm:$0xff] %v3777
        %3810 = vst [vmem:[%s252 + $0xf0] sm:$0xff] %v3778
        %3811 = vst [vmem:[%s252 + $0xf8] sm:$0xff] %v3779
        %s3812 = sand.u32 %s134, 1
        %s3813 = scalar_lea.sflag [#allocation5], %s3812
        %s3814 = sand.u32 %s134, 1
        %s3815 = smul.addr %s3814, 256
        %s3816 = scalar_lea.vmem [#allocation9], %s3815
        // Predicated region
        $region57: #{tpu_custom_call.1} parent=39 // pred_check
          %p3817 = pneg %p144
        $region58: #{tpu_custom_call.1} parent=39 // pred_check_branch
          %3819 = sbr.rel (%p3817) target = $region60
        $region59: #{tpu_custom_call.1} parent=39 // pred_region
          %s3820 = smul.u32 32, %s21
          %3822 = vsyncadd %s3813, 0
          %s3823 = smul.addr %s3820, 8
          %s3824 = scalar_lea.hbm %s5, %s3823
          %s3825 = sshll.u32 %s3816, 4
          %s3826 = int_to_ptr.vmem [resolvable:$true] %s3825
          %s3827 = sshll.u32 %s3824, 4
          %s3828 = int_to_ptr.hbm [resolvable:$true] %s3827
          %3833 = dma.vmem_to_hbm [thread:$0]  %s3826, 4096, %s3828, %s3813, 128, 128, 8
        $region60: #{tpu_custom_call.1} parent=39 // pred_fallthru
          _
      $region40: #{tpu_custom_call.1} parent=5 // pred_fallthru
        _
      %p3834 = scmp.le.s32.totalorder 2, %s16
      // Predicated region
      $region61: #{tpu_custom_call.1} parent=5 // pred_check
        %p3835 = pneg %p3834
      $region62: #{tpu_custom_call.1} parent=5 // pred_check_branch
        %3837 = sbr.rel (%p3835) target = $region64
      $region63: #{tpu_custom_call.1} parent=5 // pred_region
        %s3838 = ssub.s32 %s16, 2
        // Predicated region
        $region65: #{tpu_custom_call.1} parent=63 // pred_check
          %p3839 = pneg %p150
        $region66: #{tpu_custom_call.1} parent=63 // pred_check_branch
          %3841 = sbr.rel (%p3839) target = $region68
        $region67: #{tpu_custom_call.1} parent=63 // pred_region
          %s3842 = sand.u32 %s135, 1
          %s3843 = scalar_lea.sflag [#allocation5], %s3842
          %s3844 = sand.u32 %s135, 1
          %s3845 = smul.addr %s3844, 256
          %s3846 = scalar_lea.vmem [#allocation9], %s3845
          %3848 = dma.done %s3843, 4096
        $region68: #{tpu_custom_call.1} parent=63 // pred_fallthru
          _
      $region64: #{tpu_custom_call.1} parent=5 // pred_fallthru
        _
    $region6: #{tpu_custom_call.1} parent=1 // loop_footer
      %s20 = sadd.s32 1, %s16
    $region7: #{tpu_custom_call.1} parent=1 // loop_footer_branch
      %15 = sbr.rel target = $region3
    $region8: #{tpu_custom_call.1} parent=1 // loop_exit
      _
    %3849 = vsyncpa [#allocation4], 1
    %s3850 = scalar_lea.sflag [#allocation4], 1
    %3851 = vsyncpa %s3850, 1
    %3852 = vsyncpa [#allocation7], 1
    %3853 = vsyncpa [#allocation5], 1
    %s3854 = scalar_lea.sflag [#allocation5], 1
    %3855 = vsyncpa %s3854, 1

</llo_original>
